<compile_context>
chip_gen: v7x
topology: tpu7x:2x2x1
jax: 0.10.0
libtpu: 0.0.40
codegen_flags: <defaults>
</compile_context>

<pallas_src>
import functools

import jax
import jax.numpy as jnp
from jax.experimental import pallas as pl
from jax.experimental.pallas import tpu as pltpu

LANE = 128


def _round_up(x, m):
    return ((x + m - 1) // m) * m


# ---------------------------------------------------------------------------
# Fused Conv2d(kernel=3, stride=2, pad=1) + ReLU
# ---------------------------------------------------------------------------
# Layout (all reshapes below are free / metadata-only):
#   x_pad : (N, H+4, W+2, Cp)  spatially padded, channels zero-padded to Cp
#   even  : x_pad[:, 0::2] -> (N, Ho+2, W+2, Cp) -> (N, (Ho+2)*Wh, 2*Cp)
#   odd   : x_pad[:, 1::2] -> same
# with Wh = W/2 + 1; the last reshape folds column pairs (2j, 2j+q) into the
# channel dim (folded channel d = q*Cp + c).  Output position (ho, wo) and
# kernel tap (kh, kw) then reads row (ho + kh//2)*Wh + (wo + kw//2) of the
# even (kh in {0,2}) / odd (kh=1) operand at folded-channel parity q = kw % 2,
# i.e. each of the 6 (kh, dj=kw//2) taps is a contiguous row range -> one MXU
# matmul per tap, accumulated in f32.  Column wo == Wo of the output is junk
# (wrap-around rows) and is dropped by the consumer.


def _conv3x3_s2_relu_kernel(ze_ref, zo_ref, w_ref, b_ref, o_ref, *,
                            wh, ho, chunk):
    """One batch element of Conv2d(3x3, s=2, p=1) + ReLU.

    ze_ref / zo_ref : (1, (ho+2)*wh, 2*Cp) bf16   even / odd padded rows
    w_ref           : (6, 2*Cp, Cout)      bf16   taps t = kh*2 + dj
    b_ref           : (1, Cout)            f32
    o_ref           : (1, ho*wh, Cout)     bf16   "wide" output
    """
    mw = ho * wh
    cout = o_ref.shape[2]

    # (row offset into ze/zo, parity) per tap, t = kh*2 + dj.
    taps = []
    for kh in range(3):
        i0, parity = kh // 2, kh % 2
        for dj in range(2):
            taps.append((i0 * wh + dj, parity))

    # Static chunking over output rows keeps the f32 accumulator and per-tap
    # A operand within the vreg budget; inputs/weights stay resident in VMEM.
    for m0 in range(0, mw, chunk):
        mlen = min(chunk, mw - m0)
        acc = jnp.zeros((mlen, cout), jnp.float32)
        for t, (row0, parity) in enumerate(taps):
            src = ze_ref if parity == 0 else zo_ref
            a = src[0, pl.ds(row0 + m0, mlen), :]               # (mlen, 2*Cp)
            acc = acc + jnp.dot(a, w_ref[t],
                                preferred_element_type=jnp.float32)
        y = jnp.maximum(acc + b_ref[...], 0.0)
        o_ref[0, pl.ds(m0, mlen), :] = y.astype(o_ref.dtype)


def conv3x3_s2_relu(x_nhwc, w_taps, b, *, chunk=256):
    """Fused Conv2d(k=3, s=2, p=1) + ReLU.

    x_nhwc : (N, H, W, C) bf16, H and W even.
    w_taps : (6, 2*Cp, Cout) bf16 packed taps (see _pack_conv_taps), Cp >= C.
    b      : (1, Cout) f32.
    Returns the "wide" activation (N, H/2, W/2 + 1, Cout) bf16; column W/2 is
    junk and must be dropped by the consumer.
    """
    n, h, w, c = x_nhwc.shape
    assert h % 2 == 0 and w % 2 == 0, (h, w)
    six, cin2, cout = w_taps.shape
    assert six == 6 and cout % LANE == 0, w_taps.shape
    cp = cin2 // 2
    assert c <= cp, (c, cp)
    assert b.shape == (1, cout), b.shape

    ho, wo = h // 2, w // 2
    wh, hh = wo + 1, ho + 2
    mw, rz = ho * wh, hh * wh

    # One pad copy (needed for any padded conv) + even/odd row split; the 9x
    # im2col patch tensor of the previous version is gone.
    xp = jnp.pad(x_nhwc, ((0, 0), (1, 3), (1, 1), (0, cp - c)))
    ze = xp[:, 0::2].reshape(n, rz, cin2)
    zo = xp[:, 1::2].reshape(n, rz, cin2)

    itemsize = 2  # bf16
    cost = pl.CostEstimate(
        flops=2 * n * mw * cin2 * cout * 6,
        transcendentals=0,
        bytes_accessed=(2 * n * rz * cin2 * itemsize            # ze + zo
                        + 6 * cin2 * cout * itemsize            # weights
                        + cout * 4                              # bias
                        + n * mw * cout * itemsize))            # output

    out = pl.pallas_call(
        functools.partial(_conv3x3_s2_relu_kernel, wh=wh, ho=ho, chunk=chunk),
        out_shape=jax.ShapeDtypeStruct((n, mw, cout), jnp.bfloat16),
        grid=(n,),
        in_specs=[
            pl.BlockSpec((1, rz, cin2), lambda i: (i, 0, 0)),
            pl.BlockSpec((1, rz, cin2), lambda i: (i, 0, 0)),
            pl.BlockSpec((6, cin2, cout), lambda i: (0, 0, 0)),
            pl.BlockSpec((1, cout), lambda i: (0, 0)),
        ],
        out_specs=pl.BlockSpec((1, mw, cout), lambda i: (i, 0, 0)),
        compiler_params=pltpu.CompilerParams(
            dimension_semantics=("parallel",)),
        cost_estimate=cost,
    )(ze, zo, w_taps, b)
    # TODO(synk): add a spatial (output-row block) grid axis for very large
    # images / batch=1 so both v7x TensorCores stay busy in that regime too.
    return out.reshape(n, ho, wh, cout)


# ---------------------------------------------------------------------------
# Fused Linear + ReLU, K-tiled with an f32 VMEM accumulator.
# ---------------------------------------------------------------------------
def _linear_relu_kernel(a_ref, w_ref, b_ref, o_ref, acc_ref):
    @pl.when(pl.program_id(0) == 0)
    def _init():
        acc_ref[...] = jnp.zeros_like(acc_ref)

    acc_ref[...] += jnp.dot(a_ref[...], w_ref[...],
                            preferred_element_type=jnp.float32)

    @pl.when(pl.program_id(0) == pl.num_programs(0) - 1)
    def _finalize():
        o_ref[...] = jnp.maximum(acc_ref[...] + b_ref[...],
                                 0.0).astype(o_ref.dtype)


def linear_relu(a, w, b, *, max_tk=2048):
    """relu(a @ w + b).

    a: (M, K) bf16, w: (K, Npad) bf16 with K % 128 == 0 and Npad % 128 == 0,
    b: (1, Npad) f32.  K is tiled on an "arbitrary" grid axis with an f32 VMEM
    accumulator, so the working set is a few MiB independent of image size
    (fits the default scoped VMEM on v5e / v6e / v7x).
    """
    m, k = a.shape
    k2, npad = w.shape
    assert k == k2 and k % LANE == 0 and npad % LANE == 0, (a.shape, w.shape)
    assert b.shape == (1, npad), b.shape

    # Largest K tile <= max_tk that is a multiple of 128 and divides K.
    tk = LANE
    for cand in range(min(k, max_tk), LANE - 1, -LANE):
        if k % cand == 0:
            tk = cand
            break
    grid_k = k // tk

    cost = pl.CostEstimate(
        flops=2 * m * k * npad,
        transcendentals=0,
        bytes_accessed=m * k * 2 + k * npad * 2 + npad * 4 + m * npad * 4)

    return pl.pallas_call(
        _linear_relu_kernel,
        out_shape=jax.ShapeDtypeStruct((m, npad), jnp.float32),
        grid=(grid_k,),
        in_specs=[
            pl.BlockSpec((m, tk), lambda kk: (0, kk)),
            pl.BlockSpec((tk, npad), lambda kk: (kk, 0)),
            pl.BlockSpec((1, npad), lambda kk: (0, 0)),
        ],
        out_specs=pl.BlockSpec((m, npad), lambda kk: (0, 0)),
        scratch_shapes=[pltpu.VMEM((m, npad), jnp.float32)],
        compiler_params=pltpu.CompilerParams(
            dimension_semantics=("arbitrary",)),
        cost_estimate=cost,
    )(a, w, b)


# ---------------------------------------------------------------------------
# Parameters: synthesized in the PyTorch module's native layouts, then
# transformed ONCE into the kernel layouts.
# ---------------------------------------------------------------------------
def init_cnn_encoder_params(key, input_channels=3, output_dim=256,
                            image_size=(64, 64)):
    """Deterministic synthetic parameters, PyTorch layouts (OIHW / (out, in))."""
    ks = jax.random.split(key, 8)
    scale = 0.05

    def nrm(k, shape):
        return (scale * jax.random.normal(k, shape)).astype(jnp.float32)

    h3, w3 = image_size[0] // 8, image_size[1] // 8
    flattened = 128 * h3 * w3
    return {
        "w1": nrm(ks[0], (32, input_channels, 3, 3)),
        "b1": nrm(ks[1], (32,)),
        "w2": nrm(ks[2], (64, 32, 3, 3)),
        "b2": nrm(ks[3], (64,)),
        "w3": nrm(ks[4], (128, 64, 3, 3)),
        "b3": nrm(ks[5], (128,)),
        "fc_w": nrm(ks[6], (output_dim, flattened)),   # torch Linear (out, in)
        "fc_b": nrm(ks[7], (output_dim,)),
    }


def _pack_conv_taps(w_oihw, bias, *, cin_pad, cout_pad=LANE):
    """OIHW conv weight -> (6, 2*cin_pad, cout_pad) bf16 tap matrices.

    Tap t = kh*2 + dj covers original kernel columns kw = 2*dj + q, q in
    {0, 1}; the (dj=1, q=1) block (kw=3) and padded in/out channels are zero.
    """
    cout, cin, kh_, kw_ = w_oihw.shape
    assert (kh_, kw_) == (3, 3) and cin <= cin_pad and cout <= cout_pad
    w = jnp.transpose(w_oihw, (2, 3, 1, 0))                      # (3, 3, ci, co)
    w = jnp.pad(w, ((0, 0), (0, 1),
                    (0, cin_pad - cin), (0, cout_pad - cout)))   # kw 3 -> 4
    w = w.reshape(3, 2, 2, cin_pad, cout_pad)                    # (kh, dj, q, ci, co)
    w = w.reshape(6, 2 * cin_pad, cout_pad).astype(jnp.bfloat16)
    b = jnp.pad(bias, (0, cout_pad - cout)).astype(jnp.float32)
    return w, b.reshape(1, cout_pad)


def _pack_fc_wide(fc_w, fc_b, *, c, h, w, out_pad):
    """torch Linear (out, c*h*w) -> (h*(w+1)*c, out_pad) bf16.

    Rows are ordered to match the flattened "wide" NHWC conv3 output
    (h, w+1, c); rows belonging to the junk column (w index == w) are zero, so
    no extra slice/copy of the conv3 output is needed before the FC.
    """
    out_dim, flat = fc_w.shape
    assert flat == c * h * w, (flat, c, h, w)
    wt = fc_w.reshape(out_dim, c, h, w)
    wt = jnp.transpose(wt, (2, 3, 1, 0))                         # (h, w, c, out)
    wt = jnp.pad(wt, ((0, 0), (0, 1), (0, 0), (0, out_pad - out_dim)))
    wt = wt.reshape(h * (w + 1) * c, out_pad).astype(jnp.bfloat16)
    b = jnp.pad(fc_b, (0, out_pad - out_dim)).astype(jnp.float32)
    return wt, b.reshape(1, out_pad)


def prepare_kernel_params(params, input_channels, output_dim, image_size):
    assert image_size[0] % 8 == 0 and image_size[1] % 8 == 0, image_size
    h3, w3 = image_size[0] // 8, image_size[1] // 8
    kp = {}
    kp["w1"], kp["b1"] = _pack_conv_taps(
        params["w1"], params["b1"], cin_pad=_round_up(input_channels, 8))
    kp["w2"], kp["b2"] = _pack_conv_taps(params["w2"], params["b2"], cin_pad=32)
    kp["w3"], kp["b3"] = _pack_conv_taps(params["w3"], params["b3"], cin_pad=64)
    kp["fc_w"], kp["fc_b"] = _pack_fc_wide(
        params["fc_w"], params["fc_b"], c=128, h=h3, w=w3,
        out_pad=_round_up(output_dim, LANE))
    return kp


# ---------------------------------------------------------------------------
# Forward pass (kernel path) and a pure-JAX reference for correctness.
# ---------------------------------------------------------------------------
@functools.partial(jax.jit, static_argnames=("output_dim",))
def cnn_encoder_forward(kparams, x_nchw, *, output_dim):
    """x: (N, C, H, W) f32 -> (N, output_dim) f32."""
    n, _, h, w = x_nchw.shape
    assert h % 8 == 0 and w % 8 == 0, (h, w)
    x = jnp.transpose(x_nchw, (0, 2, 3, 1)).astype(jnp.bfloat16)   # NHWC bf16

    y = conv3x3_s2_relu(x, kparams["w1"], kparams["b1"])
    # Drop the junk column and the zero-padded output channels (both fused
    # into the next layer's pad copy) so conv2/conv3 carry no zero K rows.
    y = conv3x3_s2_relu(y[:, :, :y.shape[2] - 1, :32],
                        kparams["w2"], kparams["b2"])
    y = conv3x3_s2_relu(y[:, :, :y.shape[2] - 1, :64],
                        kparams["w3"], kparams["b3"])

    # conv3's "wide" output is flattened as-is; the junk-column rows of the
    # packed FC weight are zero, so no extra HBM pass is needed here.
    flat = y.reshape(n, -1)
    out = linear_relu(flat, kparams["fc_w"], kparams["fc_b"])
    npad = kparams["fc_w"].shape[1]
    return out if npad == output_dim else out[:, :output_dim]


def cnn_encoder_reference(params, x_nchw):
    """Pure-JAX f32 reference matching the PyTorch module exactly."""
    x = x_nchw
    for wn, bn in (("w1", "b1"), ("w2", "b2"), ("w3", "b3")):
        x = jax.lax.conv_general_dilated(
            x, params[wn], window_strides=(2, 2), padding=((1, 1), (1, 1)),
            dimension_numbers=("NCHW", "OIHW", "NCHW"))
        x = jax.nn.relu(x + params[bn][None, :, None, None])
    x = x.reshape(x.shape[0], -1)                       # torch.flatten (c,h,w)
    return jax.nn.relu(x @ params["fc_w"].T + params["fc_b"])


if __name__ == "__main__":
    # Small shapes consistent with the module: batch=2, channels=3, 16x16
    # image, output_dim=32.  Spatial 16 -> 8 -> 4 -> 2, flattened = 128*2*2.
    key = jax.random.PRNGKey(0)
    k_params, k_x = jax.random.split(key)

    input_channels, output_dim, image_size = 3, 32, (16, 16)
    params = init_cnn_encoder_params(
        k_params, input_channels=input_channels, output_dim=output_dim,
        image_size=image_size)
    kparams = prepare_kernel_params(params, input_channels, output_dim,
                                    image_size)

    x = jax.random.normal(
        k_x, (2, input_channels, image_size[0], image_size[1]),
        dtype=jnp.float32)

    out = cnn_encoder_forward(kparams, x, output_dim=output_dim)
    out = jax.block_until_ready(out)
    assert out.shape == (2, output_dim), out.shape
    assert bool(jnp.all(out >= 0.0))                  # final ReLU

    ref = cnn_encoder_reference(params, x)
    err = float(jnp.max(jnp.abs(out - ref)))
    assert err < 2e-2, f"max |out - ref| = {err}"
    print("KERNEL_OK")
</pallas_src>

<mosaic_0001>
module attributes {stable_mosaic.version = 11 : i64} {
  func.func @_conv3x3_s2_relu_kernel(%arg0: i32, %arg1: memref<1x90x16xbf16, #tpu.memory_space<vmem>>, %arg2: memref<1x90x16xbf16, #tpu.memory_space<vmem>>, %arg3: memref<6x16x128xbf16, #tpu.memory_space<vmem>>, %arg4: memref<1x128xf32, #tpu.memory_space<vmem>>, %arg5: memref<1x72x128xbf16, #tpu.memory_space<vmem>>) attributes {dimension_semantics = [#tpu.dimension_semantics<parallel>], iteration_bounds = array<i64: 2>, scalar_prefetch = 0 : i64, scratch_operands = 0 : i64, tpu.core_type = #tpu.core_type<tc>, window_params = [{transform_indices = @transform_0, window_bounds = array<i64: 1, 90, 16>}, {transform_indices = @transform_1, window_bounds = array<i64: 1, 90, 16>}, {pipeline_mode = #tpu.pipeline_mode<synchronous>, transform_indices = @transform_2, window_bounds = array<i64: 6, 16, 128>}, {pipeline_mode = #tpu.pipeline_mode<synchronous>, transform_indices = @transform_3, window_bounds = array<i64: 1, 128>}, {transform_indices = @transform_4, window_bounds = array<i64: 1, 72, 128>}]} {
    %cst = arith.constant 0.000000e+00 : f32
    %0 = vector.broadcast %cst : f32 to vector<72x128xf32>
    %c0 = arith.constant 0 : index
    %c0_0 = arith.constant 0 : index
    %c0_1 = arith.constant 0 : index
    %1 = vector.load %arg1[%c0, %c0_0, %c0_1] : memref<1x90x16xbf16, #tpu.memory_space<vmem>>, vector<1x72x16xbf16>
    %2 = vector.shape_cast %1 : vector<1x72x16xbf16> to vector<72x16xbf16>
    %c0_2 = arith.constant 0 : index
    %c0_3 = arith.constant 0 : index
    %c0_4 = arith.constant 0 : index
    %3 = vector.load %arg3[%c0_2, %c0_3, %c0_4] : memref<6x16x128xbf16, #tpu.memory_space<vmem>>, vector<1x16x128xbf16>
    %4 = vector.shape_cast %3 : vector<1x16x128xbf16> to vector<16x128xbf16>
    %cst_5 = arith.constant dense<0.000000e+00> : vector<72x128xf32>
    %5 = tpu.matmul %2, %4, %cst_5 {dimension_numbers = #tpu.dot_dimension_numbers<[1], [0], [0], [1], [0, 0, 1, 1], [], []>} : vector<72x16xbf16>, vector<16x128xbf16>, vector<72x128xf32> -> vector<72x128xf32>
    %6 = arith.addf %0, %5 : vector<72x128xf32>
    %c0_6 = arith.constant 0 : index
    %c1 = arith.constant 1 : index
    %c0_7 = arith.constant 0 : index
    %7 = vector.load %arg1[%c0_6, %c1, %c0_7] : memref<1x90x16xbf16, #tpu.memory_space<vmem>>, vector<1x72x16xbf16>
    %8 = vector.shape_cast %7 : vector<1x72x16xbf16> to vector<72x16xbf16>
    %c1_8 = arith.constant 1 : index
    %c0_9 = arith.constant 0 : index
    %c0_10 = arith.constant 0 : index
    %9 = vector.load %arg3[%c1_8, %c0_9, %c0_10] : memref<6x16x128xbf16, #tpu.memory_space<vmem>>, vector<1x16x128xbf16>
    %10 = vector.shape_cast %9 : vector<1x16x128xbf16> to vector<16x128xbf16>
    %cst_11 = arith.constant dense<0.000000e+00> : vector<72x128xf32>
    %11 = tpu.matmul %8, %10, %cst_11 {dimension_numbers = #tpu.dot_dimension_numbers<[1], [0], [0], [1], [0, 0, 1, 1], [], []>} : vector<72x16xbf16>, vector<16x128xbf16>, vector<72x128xf32> -> vector<72x128xf32>
    %12 = arith.addf %6, %11 : vector<72x128xf32>
    %c0_12 = arith.constant 0 : index
    %c0_13 = arith.constant 0 : index
    %c0_14 = arith.constant 0 : index
    %13 = vector.load %arg2[%c0_12, %c0_13, %c0_14] : memref<1x90x16xbf16, #tpu.memory_space<vmem>>, vector<1x72x16xbf16>
    %14 = vector.shape_cast %13 : vector<1x72x16xbf16> to vector<72x16xbf16>
    %c2 = arith.constant 2 : index
    %c0_15 = arith.constant 0 : index
    %c0_16 = arith.constant 0 : index
    %15 = vector.load %arg3[%c2, %c0_15, %c0_16] : memref<6x16x128xbf16, #tpu.memory_space<vmem>>, vector<1x16x128xbf16>
    %16 = vector.shape_cast %15 : vector<1x16x128xbf16> to vector<16x128xbf16>
    %cst_17 = arith.constant dense<0.000000e+00> : vector<72x128xf32>
    %17 = tpu.matmul %14, %16, %cst_17 {dimension_numbers = #tpu.dot_dimension_numbers<[1], [0], [0], [1], [0, 0, 1, 1], [], []>} : vector<72x16xbf16>, vector<16x128xbf16>, vector<72x128xf32> -> vector<72x128xf32>
    %18 = arith.addf %12, %17 : vector<72x128xf32>
    %c0_18 = arith.constant 0 : index
    %c1_19 = arith.constant 1 : index
    %c0_20 = arith.constant 0 : index
    %19 = vector.load %arg2[%c0_18, %c1_19, %c0_20] : memref<1x90x16xbf16, #tpu.memory_space<vmem>>, vector<1x72x16xbf16>
    %20 = vector.shape_cast %19 : vector<1x72x16xbf16> to vector<72x16xbf16>
    %c3 = arith.constant 3 : index
    %c0_21 = arith.constant 0 : index
    %c0_22 = arith.constant 0 : index
    %21 = vector.load %arg3[%c3, %c0_21, %c0_22] : memref<6x16x128xbf16, #tpu.memory_space<vmem>>, vector<1x16x128xbf16>
    %22 = vector.shape_cast %21 : vector<1x16x128xbf16> to vector<16x128xbf16>
    %cst_23 = arith.constant dense<0.000000e+00> : vector<72x128xf32>
    %23 = tpu.matmul %20, %22, %cst_23 {dimension_numbers = #tpu.dot_dimension_numbers<[1], [0], [0], [1], [0, 0, 1, 1], [], []>} : vector<72x16xbf16>, vector<16x128xbf16>, vector<72x128xf32> -> vector<72x128xf32>
    %24 = arith.addf %18, %23 : vector<72x128xf32>
    %c0_24 = arith.constant 0 : index
    %c9 = arith.constant 9 : index
    %c0_25 = arith.constant 0 : index
    %25 = vector.load %arg1[%c0_24, %c9, %c0_25] : memref<1x90x16xbf16, #tpu.memory_space<vmem>>, vector<1x72x16xbf16>
    %26 = vector.shape_cast %25 : vector<1x72x16xbf16> to vector<72x16xbf16>
    %c4 = arith.constant 4 : index
    %c0_26 = arith.constant 0 : index
    %c0_27 = arith.constant 0 : index
    %27 = vector.load %arg3[%c4, %c0_26, %c0_27] : memref<6x16x128xbf16, #tpu.memory_space<vmem>>, vector<1x16x128xbf16>
    %28 = vector.shape_cast %27 : vector<1x16x128xbf16> to vector<16x128xbf16>
    %cst_28 = arith.constant dense<0.000000e+00> : vector<72x128xf32>
    %29 = tpu.matmul %26, %28, %cst_28 {dimension_numbers = #tpu.dot_dimension_numbers<[1], [0], [0], [1], [0, 0, 1, 1], [], []>} : vector<72x16xbf16>, vector<16x128xbf16>, vector<72x128xf32> -> vector<72x128xf32>
    %30 = arith.addf %24, %29 : vector<72x128xf32>
    %c0_29 = arith.constant 0 : index
    %c10 = arith.constant 10 : index
    %c0_30 = arith.constant 0 : index
    %31 = vector.load %arg1[%c0_29, %c10, %c0_30] : memref<1x90x16xbf16, #tpu.memory_space<vmem>>, vector<1x72x16xbf16>
    %32 = vector.shape_cast %31 : vector<1x72x16xbf16> to vector<72x16xbf16>
    %c5 = arith.constant 5 : index
    %c0_31 = arith.constant 0 : index
    %c0_32 = arith.constant 0 : index
    %33 = vector.load %arg3[%c5, %c0_31, %c0_32] : memref<6x16x128xbf16, #tpu.memory_space<vmem>>, vector<1x16x128xbf16>
    %34 = vector.shape_cast %33 : vector<1x16x128xbf16> to vector<16x128xbf16>
    %cst_33 = arith.constant dense<0.000000e+00> : vector<72x128xf32>
    %35 = tpu.matmul %32, %34, %cst_33 {dimension_numbers = #tpu.dot_dimension_numbers<[1], [0], [0], [1], [0, 0, 1, 1], [], []>} : vector<72x16xbf16>, vector<16x128xbf16>, vector<72x128xf32> -> vector<72x128xf32>
    %36 = arith.addf %30, %35 : vector<72x128xf32>
    %c0_34 = arith.constant 0 : index
    %c0_35 = arith.constant 0 : index
    %37 = vector.load %arg4[%c0_34, %c0_35] : memref<1x128xf32, #tpu.memory_space<vmem>>, vector<1x128xf32>
    %38 = vector.broadcast %37 : vector<1x128xf32> to vector<72x128xf32>
    %39 = arith.addf %36, %38 : vector<72x128xf32>
    %cst_36 = arith.constant 0.000000e+00 : f32
    %40 = vector.broadcast %cst_36 : f32 to vector<72x128xf32>
    %41 = arith.maximumf %39, %40 : vector<72x128xf32>
    %42 = arith.truncf %41 : vector<72x128xf32> to vector<72x128xbf16>
    %c0_37 = arith.constant 0 : index
    %c0_38 = arith.constant 0 : index
    %c0_39 = arith.constant 0 : index
    %43 = vector.load %arg5[%c0_37, %c0_38, %c0_39] : memref<1x72x128xbf16, #tpu.memory_space<vmem>>, vector<1x72x128xbf16>
    %44 = vector.shape_cast %43 : vector<1x72x128xbf16> to vector<72x128xbf16>
    %45 = vector.shape_cast %42 : vector<72x128xbf16> to vector<1x72x128xbf16>
    tpu.vector_store %arg5[%c0_37, %c0_38, %c0_39], %45 {strides = array<i32>} : memref<1x72x128xbf16, #tpu.memory_space<vmem>>, vector<1x72x128xbf16>,
    return
  }
  func.func @transform_0(%arg0: i32) -> (i32, i32, i32) {
    %c0_i32 = arith.constant 0 : i32
    %c0_i32_0 = arith.constant 0 : i32
    %c0_i32_1 = arith.constant 0 : i32
    return %arg0, %c0_i32, %c0_i32_0 : i32, i32, i32
  }
  func.func @transform_1(%arg0: i32) -> (i32, i32, i32) {
    %c0_i32 = arith.constant 0 : i32
    %c0_i32_0 = arith.constant 0 : i32
    %c0_i32_1 = arith.constant 0 : i32
    return %arg0, %c0_i32, %c0_i32_0 : i32, i32, i32
  }
  func.func @transform_2(%arg0: i32) -> (i32, i32, i32) {
    %c0_i32 = arith.constant 0 : i32
    %c0_i32_0 = arith.constant 0 : i32
    %c0_i32_1 = arith.constant 0 : i32
    %c0_i32_2 = arith.constant 0 : i32
    return %c0_i32, %c0_i32_0, %c0_i32_1 : i32, i32, i32
  }
  func.func @transform_3(%arg0: i32) -> (i32, i32) {
    %c0_i32 = arith.constant 0 : i32
    %c0_i32_0 = arith.constant 0 : i32
    %c0_i32_1 = arith.constant 0 : i32
    return %c0_i32, %c0_i32_0 : i32, i32
  }
  func.func @transform_4(%arg0: i32) -> (i32, i32, i32) {
    %c0_i32 = arith.constant 0 : i32
    %c0_i32_0 = arith.constant 0 : i32
    %c0_i32_1 = arith.constant 0 : i32
    return %arg0, %c0_i32, %c0_i32_0 : i32, i32, i32
  }
}

module attributes {stable_mosaic.version = 11 : i64} {
  func.func @_conv3x3_s2_relu_kernel(%arg0: i32, %arg1: memref<1x30x64xbf16, #tpu.memory_space<vmem>>, %arg2: memref<1x30x64xbf16, #tpu.memory_space<vmem>>, %arg3: memref<6x64x128xbf16, #tpu.memory_space<vmem>>, %arg4: memref<1x128xf32, #tpu.memory_space<vmem>>, %arg5: memref<1x20x128xbf16, #tpu.memory_space<vmem>>) attributes {dimension_semantics = [#tpu.dimension_semantics<parallel>], iteration_bounds = array<i64: 2>, scalar_prefetch = 0 : i64, scratch_operands = 0 : i64, tpu.core_type = #tpu.core_type<tc>, window_params = [{transform_indices = @transform_0, window_bounds = array<i64: 1, 30, 64>}, {transform_indices = @transform_1, window_bounds = array<i64: 1, 30, 64>}, {pipeline_mode = #tpu.pipeline_mode<synchronous>, transform_indices = @transform_2, window_bounds = array<i64: 6, 64, 128>}, {pipeline_mode = #tpu.pipeline_mode<synchronous>, transform_indices = @transform_3, window_bounds = array<i64: 1, 128>}, {transform_indices = @transform_4, window_bounds = array<i64: 1, 20, 128>}]} {
    %cst = arith.constant 0.000000e+00 : f32
    %0 = vector.broadcast %cst : f32 to vector<20x128xf32>
    %c0 = arith.constant 0 : index
    %c0_0 = arith.constant 0 : index
    %c0_1 = arith.constant 0 : index
    %1 = vector.load %arg1[%c0, %c0_0, %c0_1] : memref<1x30x64xbf16, #tpu.memory_space<vmem>>, vector<1x20x64xbf16>
    %2 = vector.shape_cast %1 : vector<1x20x64xbf16> to vector<20x64xbf16>
    %c0_2 = arith.constant 0 : index
    %c0_3 = arith.constant 0 : index
    %c0_4 = arith.constant 0 : index
    %3 = vector.load %arg3[%c0_2, %c0_3, %c0_4] : memref<6x64x128xbf16, #tpu.memory_space<vmem>>, vector<1x64x128xbf16>
    %4 = vector.shape_cast %3 : vector<1x64x128xbf16> to vector<64x128xbf16>
    %cst_5 = arith.constant dense<0.000000e+00> : vector<20x128xf32>
    %5 = tpu.matmul %2, %4, %cst_5 {dimension_numbers = #tpu.dot_dimension_numbers<[1], [0], [0], [1], [0, 0, 1, 1], [], []>} : vector<20x64xbf16>, vector<64x128xbf16>, vector<20x128xf32> -> vector<20x128xf32>
    %6 = arith.addf %0, %5 : vector<20x128xf32>
    %c0_6 = arith.constant 0 : index
    %c1 = arith.constant 1 : index
    %c0_7 = arith.constant 0 : index
    %7 = vector.load %arg1[%c0_6, %c1, %c0_7] : memref<1x30x64xbf16, #tpu.memory_space<vmem>>, vector<1x20x64xbf16>
    %8 = vector.shape_cast %7 : vector<1x20x64xbf16> to vector<20x64xbf16>
    %c1_8 = arith.constant 1 : index
    %c0_9 = arith.constant 0 : index
    %c0_10 = arith.constant 0 : index
    %9 = vector.load %arg3[%c1_8, %c0_9, %c0_10] : memref<6x64x128xbf16, #tpu.memory_space<vmem>>, vector<1x64x128xbf16>
    %10 = vector.shape_cast %9 : vector<1x64x128xbf16> to vector<64x128xbf16>
    %cst_11 = arith.constant dense<0.000000e+00> : vector<20x128xf32>
    %11 = tpu.matmul %8, %10, %cst_11 {dimension_numbers = #tpu.dot_dimension_numbers<[1], [0], [0], [1], [0, 0, 1, 1], [], []>} : vector<20x64xbf16>, vector<64x128xbf16>, vector<20x128xf32> -> vector<20x128xf32>
    %12 = arith.addf %6, %11 : vector<20x128xf32>
    %c0_12 = arith.constant 0 : index
    %c0_13 = arith.constant 0 : index
    %c0_14 = arith.constant 0 : index
    %13 = vector.load %arg2[%c0_12, %c0_13, %c0_14] : memref<1x30x64xbf16, #tpu.memory_space<vmem>>, vector<1x20x64xbf16>
    %14 = vector.shape_cast %13 : vector<1x20x64xbf16> to vector<20x64xbf16>
    %c2 = arith.constant 2 : index
    %c0_15 = arith.constant 0 : index
    %c0_16 = arith.constant 0 : index
    %15 = vector.load %arg3[%c2, %c0_15, %c0_16] : memref<6x64x128xbf16, #tpu.memory_space<vmem>>, vector<1x64x128xbf16>
    %16 = vector.shape_cast %15 : vector<1x64x128xbf16> to vector<64x128xbf16>
    %cst_17 = arith.constant dense<0.000000e+00> : vector<20x128xf32>
    %17 = tpu.matmul %14, %16, %cst_17 {dimension_numbers = #tpu.dot_dimension_numbers<[1], [0], [0], [1], [0, 0, 1, 1], [], []>} : vector<20x64xbf16>, vector<64x128xbf16>, vector<20x128xf32> -> vector<20x128xf32>
    %18 = arith.addf %12, %17 : vector<20x128xf32>
    %c0_18 = arith.constant 0 : index
    %c1_19 = arith.constant 1 : index
    %c0_20 = arith.constant 0 : index
    %19 = vector.load %arg2[%c0_18, %c1_19, %c0_20] : memref<1x30x64xbf16, #tpu.memory_space<vmem>>, vector<1x20x64xbf16>
    %20 = vector.shape_cast %19 : vector<1x20x64xbf16> to vector<20x64xbf16>
    %c3 = arith.constant 3 : index
    %c0_21 = arith.constant 0 : index
    %c0_22 = arith.constant 0 : index
    %21 = vector.load %arg3[%c3, %c0_21, %c0_22] : memref<6x64x128xbf16, #tpu.memory_space<vmem>>, vector<1x64x128xbf16>
    %22 = vector.shape_cast %21 : vector<1x64x128xbf16> to vector<64x128xbf16>
    %cst_23 = arith.constant dense<0.000000e+00> : vector<20x128xf32>
    %23 = tpu.matmul %20, %22, %cst_23 {dimension_numbers = #tpu.dot_dimension_numbers<[1], [0], [0], [1], [0, 0, 1, 1], [], []>} : vector<20x64xbf16>, vector<64x128xbf16>, vector<20x128xf32> -> vector<20x128xf32>
    %24 = arith.addf %18, %23 : vector<20x128xf32>
    %c0_24 = arith.constant 0 : index
    %c5 = arith.constant 5 : index
    %c0_25 = arith.constant 0 : index
    %25 = vector.load %arg1[%c0_24, %c5, %c0_25] : memref<1x30x64xbf16, #tpu.memory_space<vmem>>, vector<1x20x64xbf16>
    %26 = vector.shape_cast %25 : vector<1x20x64xbf16> to vector<20x64xbf16>
    %c4 = arith.constant 4 : index
    %c0_26 = arith.constant 0 : index
    %c0_27 = arith.constant 0 : index
    %27 = vector.load %arg3[%c4, %c0_26, %c0_27] : memref<6x64x128xbf16, #tpu.memory_space<vmem>>, vector<1x64x128xbf16>
    %28 = vector.shape_cast %27 : vector<1x64x128xbf16> to vector<64x128xbf16>
    %cst_28 = arith.constant dense<0.000000e+00> : vector<20x128xf32>
    %29 = tpu.matmul %26, %28, %cst_28 {dimension_numbers = #tpu.dot_dimension_numbers<[1], [0], [0], [1], [0, 0, 1, 1], [], []>} : vector<20x64xbf16>, vector<64x128xbf16>, vector<20x128xf32> -> vector<20x128xf32>
    %30 = arith.addf %24, %29 : vector<20x128xf32>
    %c0_29 = arith.constant 0 : index
    %c6 = arith.constant 6 : index
    %c0_30 = arith.constant 0 : index
    %31 = vector.load %arg1[%c0_29, %c6, %c0_30] : memref<1x30x64xbf16, #tpu.memory_space<vmem>>, vector<1x20x64xbf16>
    %32 = vector.shape_cast %31 : vector<1x20x64xbf16> to vector<20x64xbf16>
    %c5_31 = arith.constant 5 : index
    %c0_32 = arith.constant 0 : index
    %c0_33 = arith.constant 0 : index
    %33 = vector.load %arg3[%c5_31, %c0_32, %c0_33] : memref<6x64x128xbf16, #tpu.memory_space<vmem>>, vector<1x64x128xbf16>
    %34 = vector.shape_cast %33 : vector<1x64x128xbf16> to vector<64x128xbf16>
    %cst_34 = arith.constant dense<0.000000e+00> : vector<20x128xf32>
    %35 = tpu.matmul %32, %34, %cst_34 {dimension_numbers = #tpu.dot_dimension_numbers<[1], [0], [0], [1], [0, 0, 1, 1], [], []>} : vector<20x64xbf16>, vector<64x128xbf16>, vector<20x128xf32> -> vector<20x128xf32>
    %36 = arith.addf %30, %35 : vector<20x128xf32>
    %c0_35 = arith.constant 0 : index
    %c0_36 = arith.constant 0 : index
    %37 = vector.load %arg4[%c0_35, %c0_36] : memref<1x128xf32, #tpu.memory_space<vmem>>, vector<1x128xf32>
    %38 = vector.broadcast %37 : vector<1x128xf32> to vector<20x128xf32>
    %39 = arith.addf %36, %38 : vector<20x128xf32>
    %cst_37 = arith.constant 0.000000e+00 : f32
    %40 = vector.broadcast %cst_37 : f32 to vector<20x128xf32>
    %41 = arith.maximumf %39, %40 : vector<20x128xf32>
    %42 = arith.truncf %41 : vector<20x128xf32> to vector<20x128xbf16>
    %c0_38 = arith.constant 0 : index
    %c0_39 = arith.constant 0 : index
    %c0_40 = arith.constant 0 : index
    %43 = vector.load %arg5[%c0_38, %c0_39, %c0_40] : memref<1x20x128xbf16, #tpu.memory_space<vmem>>, vector<1x20x128xbf16>
    %44 = vector.shape_cast %43 : vector<1x20x128xbf16> to vector<20x128xbf16>
    %45 = vector.shape_cast %42 : vector<20x128xbf16> to vector<1x20x128xbf16>
    tpu.vector_store %arg5[%c0_38, %c0_39, %c0_40], %45 {strides = array<i32>} : memref<1x20x128xbf16, #tpu.memory_space<vmem>>, vector<1x20x128xbf16>,
    return
  }
  func.func @transform_0(%arg0: i32) -> (i32, i32, i32) {
    %c0_i32 = arith.constant 0 : i32
    %c0_i32_0 = arith.constant 0 : i32
    %c0_i32_1 = arith.constant 0 : i32
    return %arg0, %c0_i32, %c0_i32_0 : i32, i32, i32
  }
  func.func @transform_1(%arg0: i32) -> (i32, i32, i32) {
    %c0_i32 = arith.constant 0 : i32
    %c0_i32_0 = arith.constant 0 : i32
    %c0_i32_1 = arith.constant 0 : i32
    return %arg0, %c0_i32, %c0_i32_0 : i32, i32, i32
  }
  func.func @transform_2(%arg0: i32) -> (i32, i32, i32) {
    %c0_i32 = arith.constant 0 : i32
    %c0_i32_0 = arith.constant 0 : i32
    %c0_i32_1 = arith.constant 0 : i32
    %c0_i32_2 = arith.constant 0 : i32
    return %c0_i32, %c0_i32_0, %c0_i32_1 : i32, i32, i32
  }
  func.func @transform_3(%arg0: i32) -> (i32, i32) {
    %c0_i32 = arith.constant 0 : i32
    %c0_i32_0 = arith.constant 0 : i32
    %c0_i32_1 = arith.constant 0 : i32
    return %c0_i32, %c0_i32_0 : i32, i32
  }
  func.func @transform_4(%arg0: i32) -> (i32, i32, i32) {
    %c0_i32 = arith.constant 0 : i32
    %c0_i32_0 = arith.constant 0 : i32
    %c0_i32_1 = arith.constant 0 : i32
    return %arg0, %c0_i32, %c0_i32_0 : i32, i32, i32
  }
}

module attributes {stable_mosaic.version = 11 : i64} {
  func.func @_conv3x3_s2_relu_kernel(%arg0: i32, %arg1: memref<1x12x128xbf16, #tpu.memory_space<vmem>>, %arg2: memref<1x12x128xbf16, #tpu.memory_space<vmem>>, %arg3: memref<6x128x128xbf16, #tpu.memory_space<vmem>>, %arg4: memref<1x128xf32, #tpu.memory_space<vmem>>, %arg5: memref<1x6x128xbf16, #tpu.memory_space<vmem>>) attributes {dimension_semantics = [#tpu.dimension_semantics<parallel>], iteration_bounds = array<i64: 2>, scalar_prefetch = 0 : i64, scratch_operands = 0 : i64, tpu.core_type = #tpu.core_type<tc>, window_params = [{transform_indices = @transform_0, window_bounds = array<i64: 1, 12, 128>}, {transform_indices = @transform_1, window_bounds = array<i64: 1, 12, 128>}, {pipeline_mode = #tpu.pipeline_mode<synchronous>, transform_indices = @transform_2, window_bounds = array<i64: 6, 128, 128>}, {pipeline_mode = #tpu.pipeline_mode<synchronous>, transform_indices = @transform_3, window_bounds = array<i64: 1, 128>}, {transform_indices = @transform_4, window_bounds = array<i64: 1, 6, 128>}]} {
    %cst = arith.constant 0.000000e+00 : f32
    %0 = vector.broadcast %cst : f32 to vector<6x128xf32>
    %c0 = arith.constant 0 : index
    %c0_0 = arith.constant 0 : index
    %c0_1 = arith.constant 0 : index
    %1 = vector.load %arg1[%c0, %c0_0, %c0_1] : memref<1x12x128xbf16, #tpu.memory_space<vmem>>, vector<1x6x128xbf16>
    %2 = vector.shape_cast %1 : vector<1x6x128xbf16> to vector<6x128xbf16>
    %c0_2 = arith.constant 0 : index
    %c0_3 = arith.constant 0 : index
    %c0_4 = arith.constant 0 : index
    %3 = vector.load %arg3[%c0_2, %c0_3, %c0_4] : memref<6x128x128xbf16, #tpu.memory_space<vmem>>, vector<1x128x128xbf16>
    %4 = vector.shape_cast %3 : vector<1x128x128xbf16> to vector<128x128xbf16>
    %cst_5 = arith.constant dense<0.000000e+00> : vector<6x128xf32>
    %5 = tpu.matmul %2, %4, %cst_5 {dimension_numbers = #tpu.dot_dimension_numbers<[1], [0], [0], [1], [0, 0, 1, 1], [], []>} : vector<6x128xbf16>, vector<128x128xbf16>, vector<6x128xf32> -> vector<6x128xf32>
    %6 = arith.addf %0, %5 : vector<6x128xf32>
    %c0_6 = arith.constant 0 : index
    %c1 = arith.constant 1 : index
    %c0_7 = arith.constant 0 : index
    %7 = vector.load %arg1[%c0_6, %c1, %c0_7] : memref<1x12x128xbf16, #tpu.memory_space<vmem>>, vector<1x6x128xbf16>
    %8 = vector.shape_cast %7 : vector<1x6x128xbf16> to vector<6x128xbf16>
    %c1_8 = arith.constant 1 : index
    %c0_9 = arith.constant 0 : index
    %c0_10 = arith.constant 0 : index
    %9 = vector.load %arg3[%c1_8, %c0_9, %c0_10] : memref<6x128x128xbf16, #tpu.memory_space<vmem>>, vector<1x128x128xbf16>
    %10 = vector.shape_cast %9 : vector<1x128x128xbf16> to vector<128x128xbf16>
    %cst_11 = arith.constant dense<0.000000e+00> : vector<6x128xf32>
    %11 = tpu.matmul %8, %10, %cst_11 {dimension_numbers = #tpu.dot_dimension_numbers<[1], [0], [0], [1], [0, 0, 1, 1], [], []>} : vector<6x128xbf16>, vector<128x128xbf16>, vector<6x128xf32> -> vector<6x128xf32>
    %12 = arith.addf %6, %11 : vector<6x128xf32>
    %c0_12 = arith.constant 0 : index
    %c0_13 = arith.constant 0 : index
    %c0_14 = arith.constant 0 : index
    %13 = vector.load %arg2[%c0_12, %c0_13, %c0_14] : memref<1x12x128xbf16, #tpu.memory_space<vmem>>, vector<1x6x128xbf16>
    %14 = vector.shape_cast %13 : vector<1x6x128xbf16> to vector<6x128xbf16>
    %c2 = arith.constant 2 : index
    %c0_15 = arith.constant 0 : index
    %c0_16 = arith.constant 0 : index
    %15 = vector.load %arg3[%c2, %c0_15, %c0_16] : memref<6x128x128xbf16, #tpu.memory_space<vmem>>, vector<1x128x128xbf16>
    %16 = vector.shape_cast %15 : vector<1x128x128xbf16> to vector<128x128xbf16>
    %cst_17 = arith.constant dense<0.000000e+00> : vector<6x128xf32>
    %17 = tpu.matmul %14, %16, %cst_17 {dimension_numbers = #tpu.dot_dimension_numbers<[1], [0], [0], [1], [0, 0, 1, 1], [], []>} : vector<6x128xbf16>, vector<128x128xbf16>, vector<6x128xf32> -> vector<6x128xf32>
    %18 = arith.addf %12, %17 : vector<6x128xf32>
    %c0_18 = arith.constant 0 : index
    %c1_19 = arith.constant 1 : index
    %c0_20 = arith.constant 0 : index
    %19 = vector.load %arg2[%c0_18, %c1_19, %c0_20] : memref<1x12x128xbf16, #tpu.memory_space<vmem>>, vector<1x6x128xbf16>
    %20 = vector.shape_cast %19 : vector<1x6x128xbf16> to vector<6x128xbf16>
    %c3 = arith.constant 3 : index
    %c0_21 = arith.constant 0 : index
    %c0_22 = arith.constant 0 : index
    %21 = vector.load %arg3[%c3, %c0_21, %c0_22] : memref<6x128x128xbf16, #tpu.memory_space<vmem>>, vector<1x128x128xbf16>
    %22 = vector.shape_cast %21 : vector<1x128x128xbf16> to vector<128x128xbf16>
    %cst_23 = arith.constant dense<0.000000e+00> : vector<6x128xf32>
    %23 = tpu.matmul %20, %22, %cst_23 {dimension_numbers = #tpu.dot_dimension_numbers<[1], [0], [0], [1], [0, 0, 1, 1], [], []>} : vector<6x128xbf16>, vector<128x128xbf16>, vector<6x128xf32> -> vector<6x128xf32>
    %24 = arith.addf %18, %23 : vector<6x128xf32>
    %c0_24 = arith.constant 0 : index
    %c3_25 = arith.constant 3 : index
    %c0_26 = arith.constant 0 : index
    %25 = vector.load %arg1[%c0_24, %c3_25, %c0_26] : memref<1x12x128xbf16, #tpu.memory_space<vmem>>, vector<1x6x128xbf16>
    %26 = vector.shape_cast %25 : vector<1x6x128xbf16> to vector<6x128xbf16>
    %c4 = arith.constant 4 : index
    %c0_27 = arith.constant 0 : index
    %c0_28 = arith.constant 0 : index
    %27 = vector.load %arg3[%c4, %c0_27, %c0_28] : memref<6x128x128xbf16, #tpu.memory_space<vmem>>, vector<1x128x128xbf16>
    %28 = vector.shape_cast %27 : vector<1x128x128xbf16> to vector<128x128xbf16>
    %cst_29 = arith.constant dense<0.000000e+00> : vector<6x128xf32>
    %29 = tpu.matmul %26, %28, %cst_29 {dimension_numbers = #tpu.dot_dimension_numbers<[1], [0], [0], [1], [0, 0, 1, 1], [], []>} : vector<6x128xbf16>, vector<128x128xbf16>, vector<6x128xf32> -> vector<6x128xf32>
    %30 = arith.addf %24, %29 : vector<6x128xf32>
    %c0_30 = arith.constant 0 : index
    %c4_31 = arith.constant 4 : index
    %c0_32 = arith.constant 0 : index
    %31 = vector.load %arg1[%c0_30, %c4_31, %c0_32] : memref<1x12x128xbf16, #tpu.memory_space<vmem>>, vector<1x6x128xbf16>
    %32 = vector.shape_cast %31 : vector<1x6x128xbf16> to vector<6x128xbf16>
    %c5 = arith.constant 5 : index
    %c0_33 = arith.constant 0 : index
    %c0_34 = arith.constant 0 : index
    %33 = vector.load %arg3[%c5, %c0_33, %c0_34] : memref<6x128x128xbf16, #tpu.memory_space<vmem>>, vector<1x128x128xbf16>
    %34 = vector.shape_cast %33 : vector<1x128x128xbf16> to vector<128x128xbf16>
    %cst_35 = arith.constant dense<0.000000e+00> : vector<6x128xf32>
    %35 = tpu.matmul %32, %34, %cst_35 {dimension_numbers = #tpu.dot_dimension_numbers<[1], [0], [0], [1], [0, 0, 1, 1], [], []>} : vector<6x128xbf16>, vector<128x128xbf16>, vector<6x128xf32> -> vector<6x128xf32>
    %36 = arith.addf %30, %35 : vector<6x128xf32>
    %c0_36 = arith.constant 0 : index
    %c0_37 = arith.constant 0 : index
    %37 = vector.load %arg4[%c0_36, %c0_37] : memref<1x128xf32, #tpu.memory_space<vmem>>, vector<1x128xf32>
    %38 = vector.broadcast %37 : vector<1x128xf32> to vector<6x128xf32>
    %39 = arith.addf %36, %38 : vector<6x128xf32>
    %cst_38 = arith.constant 0.000000e+00 : f32
    %40 = vector.broadcast %cst_38 : f32 to vector<6x128xf32>
    %41 = arith.maximumf %39, %40 : vector<6x128xf32>
    %42 = arith.truncf %41 : vector<6x128xf32> to vector<6x128xbf16>
    %c0_39 = arith.constant 0 : index
    %c0_40 = arith.constant 0 : index
    %c0_41 = arith.constant 0 : index
    %43 = vector.load %arg5[%c0_39, %c0_40, %c0_41] : memref<1x6x128xbf16, #tpu.memory_space<vmem>>, vector<1x6x128xbf16>
    %44 = vector.shape_cast %43 : vector<1x6x128xbf16> to vector<6x128xbf16>
    %45 = vector.shape_cast %42 : vector<6x128xbf16> to vector<1x6x128xbf16>
    tpu.vector_store %arg5[%c0_39, %c0_40, %c0_41], %45 {strides = array<i32>} : memref<1x6x128xbf16, #tpu.memory_space<vmem>>, vector<1x6x128xbf16>,
    return
  }
  func.func @transform_0(%arg0: i32) -> (i32, i32, i32) {
    %c0_i32 = arith.constant 0 : i32
    %c0_i32_0 = arith.constant 0 : i32
    %c0_i32_1 = arith.constant 0 : i32
    return %arg0, %c0_i32, %c0_i32_0 : i32, i32, i32
  }
  func.func @transform_1(%arg0: i32) -> (i32, i32, i32) {
    %c0_i32 = arith.constant 0 : i32
    %c0_i32_0 = arith.constant 0 : i32
    %c0_i32_1 = arith.constant 0 : i32
    return %arg0, %c0_i32, %c0_i32_0 : i32, i32, i32
  }
  func.func @transform_2(%arg0: i32) -> (i32, i32, i32) {
    %c0_i32 = arith.constant 0 : i32
    %c0_i32_0 = arith.constant 0 : i32
    %c0_i32_1 = arith.constant 0 : i32
    %c0_i32_2 = arith.constant 0 : i32
    return %c0_i32, %c0_i32_0, %c0_i32_1 : i32, i32, i32
  }
  func.func @transform_3(%arg0: i32) -> (i32, i32) {
    %c0_i32 = arith.constant 0 : i32
    %c0_i32_0 = arith.constant 0 : i32
    %c0_i32_1 = arith.constant 0 : i32
    return %c0_i32, %c0_i32_0 : i32, i32
  }
  func.func @transform_4(%arg0: i32) -> (i32, i32, i32) {
    %c0_i32 = arith.constant 0 : i32
    %c0_i32_0 = arith.constant 0 : i32
    %c0_i32_1 = arith.constant 0 : i32
    return %arg0, %c0_i32, %c0_i32_0 : i32, i32, i32
  }
}

module attributes {stable_mosaic.version = 11 : i64} {
  func.func @_linear_relu_kernel(%arg0: i32, %arg1: memref<2x768xbf16, #tpu.memory_space<vmem>>, %arg2: memref<768x128xbf16, #tpu.memory_space<vmem>>, %arg3: memref<1x128xf32, #tpu.memory_space<vmem>>, %arg4: memref<2x128xf32, #tpu.memory_space<vmem>>, %arg5: memref<2x128xf32, #tpu.memory_space<vmem>>) attributes {dimension_semantics = [#tpu.dimension_semantics<arbitrary>], iteration_bounds = array<i64: 1>, scalar_prefetch = 0 : i64, scratch_operands = 1 : i64, tpu.core_type = #tpu.core_type<tc>, window_params = [{transform_indices = @transform_0, window_bounds = array<i64: 2, 768>}, {transform_indices = @transform_1, window_bounds = array<i64: 768, 128>}, {pipeline_mode = #tpu.pipeline_mode<synchronous>, transform_indices = @transform_2, window_bounds = array<i64: 1, 128>}, {pipeline_mode = #tpu.pipeline_mode<synchronous>, transform_indices = @transform_3, window_bounds = array<i64: 2, 128>}]} {
    %c0_i32 = arith.constant 0 : i32
    %0 = arith.cmpi eq, %arg0, %c0_i32 : i32
    %1 = arith.extui %0 : i1 to i32
    %c0_i32_0 = arith.constant 0 : i32
    %2 = arith.cmpi ne, %1, %c0_i32_0 : i32
    scf.if %2 {
      %cst_10 = arith.constant 0.000000e+00 : f32
      %12 = vector.broadcast %cst_10 : f32 to vector<2x128xf32>
      %c0_11 = arith.constant 0 : index
      %c0_12 = arith.constant 0 : index
      %13 = vector.load %arg5[%c0_11, %c0_12] : memref<2x128xf32, #tpu.memory_space<vmem>>, vector<2x128xf32>
      tpu.vector_store %arg5[%c0_11, %c0_12], %12 {strides = array<i32>} : memref<2x128xf32, #tpu.memory_space<vmem>>, vector<2x128xf32>,
    } else {
    }
    %c0 = arith.constant 0 : index
    %c0_1 = arith.constant 0 : index
    %3 = vector.load %arg5[%c0, %c0_1] : memref<2x128xf32, #tpu.memory_space<vmem>>, vector<2x128xf32>
    %c0_2 = arith.constant 0 : index
    %c0_3 = arith.constant 0 : index
    %4 = vector.load %arg1[%c0_2, %c0_3] : memref<2x768xbf16, #tpu.memory_space<vmem>>, vector<2x768xbf16>
    %c0_4 = arith.constant 0 : index
    %c0_5 = arith.constant 0 : index
    %5 = vector.load %arg2[%c0_4, %c0_5] : memref<768x128xbf16, #tpu.memory_space<vmem>>, vector<768x128xbf16>
    %cst = arith.constant dense<0.000000e+00> : vector<2x128xf32>
    %6 = tpu.matmul %4, %5, %cst {dimension_numbers = #tpu.dot_dimension_numbers<[1], [0], [0], [1], [0, 0, 1, 1], [], []>} : vector<2x768xbf16>, vector<768x128xbf16>, vector<2x128xf32> -> vector<2x128xf32>
    %7 = arith.addf %3, %6 : vector<2x128xf32>
    %c0_6 = arith.constant 0 : index
    %c0_7 = arith.constant 0 : index
    %8 = vector.load %arg5[%c0_6, %c0_7] : memref<2x128xf32, #tpu.memory_space<vmem>>, vector<2x128xf32>
    tpu.vector_store %arg5[%c0_6, %c0_7], %7 {strides = array<i32>} : memref<2x128xf32, #tpu.memory_space<vmem>>, vector<2x128xf32>,
    %c0_i32_8 = arith.constant 0 : i32
    %9 = arith.cmpi eq, %arg0, %c0_i32_8 : i32
    %10 = arith.extui %9 : i1 to i32
    %c0_i32_9 = arith.constant 0 : i32
    %11 = arith.cmpi ne, %10, %c0_i32_9 : i32
    scf.if %11 {
      %c0_10 = arith.constant 0 : index
      %c0_11 = arith.constant 0 : index
      %12 = vector.load %arg5[%c0_10, %c0_11] : memref<2x128xf32, #tpu.memory_space<vmem>>, vector<2x128xf32>
      %c0_12 = arith.constant 0 : index
      %c0_13 = arith.constant 0 : index
      %13 = vector.load %arg3[%c0_12, %c0_13] : memref<1x128xf32, #tpu.memory_space<vmem>>, vector<1x128xf32>
      %14 = vector.broadcast %13 : vector<1x128xf32> to vector<2x128xf32>
      %15 = arith.addf %12, %14 : vector<2x128xf32>
      %cst_14 = arith.constant 0.000000e+00 : f32
      %16 = vector.broadcast %cst_14 : f32 to vector<2x128xf32>
      %17 = arith.maximumf %15, %16 : vector<2x128xf32>
      %c0_15 = arith.constant 0 : index
      %c0_16 = arith.constant 0 : index
      %18 = vector.load %arg4[%c0_15, %c0_16] : memref<2x128xf32, #tpu.memory_space<vmem>>, vector<2x128xf32>
      tpu.vector_store %arg4[%c0_15, %c0_16], %17 {strides = array<i32>} : memref<2x128xf32, #tpu.memory_space<vmem>>, vector<2x128xf32>,
    } else {
    }
    return
  }
  func.func @transform_0(%arg0: i32) -> (i32, i32) {
    %c0_i32 = arith.constant 0 : i32
    %c0_i32_0 = arith.constant 0 : i32
    return %c0_i32, %arg0 : i32, i32
  }
  func.func @transform_1(%arg0: i32) -> (i32, i32) {
    %c0_i32 = arith.constant 0 : i32
    %c0_i32_0 = arith.constant 0 : i32
    return %arg0, %c0_i32 : i32, i32
  }
  func.func @transform_2(%arg0: i32) -> (i32, i32) {
    %c0_i32 = arith.constant 0 : i32
    %c0_i32_0 = arith.constant 0 : i32
    %c0_i32_1 = arith.constant 0 : i32
    return %c0_i32, %c0_i32_0 : i32, i32
  }
  func.func @transform_3(%arg0: i32) -> (i32, i32) {
    %c0_i32 = arith.constant 0 : i32
    %c0_i32_0 = arith.constant 0 : i32
    %c0_i32_1 = arith.constant 0 : i32
    return %c0_i32, %c0_i32_0 : i32, i32
  }
}

</mosaic_0001>

<llo_original>
// kernel: cnn_encoder_forward.4
$region0: #{cnn_encoder_forward.4}
  #allocation0 [shape = 'u32[]', space=smem, size = 0x4, offset = 0x4, fixed_abs, tag = 'smem constant byte address 0x4 - core index']
  #allocation1 [shape = 'u32[144,128]{1,0:T(1,128)}', space=vmem, size = 0x12000, scoped, tag = 'internal scratch']
  %s0 = inlined_call_operand.vmem [shape: bf16[2,90,16], index: 0, kind: input, shape index: {}]
  %s1 = inlined_call_operand.vmem [shape: bf16[2,90,16], index: 1, kind: input, shape index: {}]
  %s2 = inlined_call_operand.vmem [shape: bf16[6,16,128], index: 2, kind: input, shape index: {}]
  %s3 = inlined_call_operand.vmem [shape: f32[1,128], index: 3, kind: input, shape index: {}]
  %s4 = inlined_call_operand.vmem [shape: bf16[2,72,128], index: 4, kind: output, shape index: {}]
  %s5 = sld [smem:[#allocation0]]
  $region49: #{cnn_encoder_forward.4} parent=0
    _
  %s7 = ssub.s32 1, %s5
  %s8 = scalar_select 0, %s7, %s5
  loop: start=0, step=1, limit=4
  $region2: #{cnn_encoder_forward.4} parent=0 // loop_pre_header
    _
  $region3: #{cnn_encoder_forward.4} parent=0 // loop_header
    %s10 = sphi 0, %s14
    %p11 = scmp.ge.s32.totalorder %s10, 4
    %s20 = sphi 0, %s22
    %s23 = sphi 0, %s20
    %s24 = sphi 0, %s23
    %s40 = sphi 0, %s24
    %s46 = sphi 0, %s48
    %s49 = sphi 0, %s46
    %s50 = sphi 0, %s49
    %s66 = sphi 0, %s50
    %s70 = sphi 0, %s70
    %s72 = sphi 0, %s70
    %s73 = sphi 0, %s72
    %s87 = sphi 0, %s73
    %s91 = sphi 0, %s91
    %s93 = sphi 0, %s91
    %s94 = sphi 0, %s93
    %s108 = sphi 0, %s94
    %s114 = sphi 0, %s116
    %s117 = sphi 0, %s114
    %s118 = sphi 0, %s117
    %s134 = sphi 0, %s118
  $region4: #{cnn_encoder_forward.4} parent=0 // loop_header_branch
    %13 = sbr.rel (%p11) target = $region8
  $region5: #{cnn_encoder_forward.4} parent=0 // loop_body
    %s15 = ssub.s32 %s10, 1
    %s16 = ssub.s32 %s10, 2
    %s17 = sadd.s32 %s10, 1
    %s18 = ssub.s32 %s10, %s17
    %p19 = scmp.eq.s32.totalorder %s18, 0
    %s21 = sadd.s32 %s20, 1
    %s22 = scalar_select %p19, %s20, %s21
    %p25 = pneg %p19
    %p26 = scmp.eq.s32.totalorder %s10, 1
    %p27 = por %p25, %p26
    %p28 = scmp.ne.s32.totalorder %s20, %s23
    %p29 = scmp.eq.s32.totalorder %s10, 0
    %p30 = por %p28, %p29
    %p31 = scmp.ne.s32.totalorder %s20, %s23
    %p32 = scmp.eq.s32.totalorder %s15, 1
    %p33 = por %p31, %p32
    %p34 = scmp.ne.s32.totalorder %s23, %s24
    %p35 = scmp.eq.s32.totalorder %s15, 0
    %p36 = por %p34, %p35
    %p37 = scmp.ne.s32.totalorder %s23, %s24
    %p38 = scmp.eq.s32.totalorder %s16, 1
    %p39 = por %p37, %p38
    %p41 = scmp.ne.s32.totalorder %s24, %s40
    %p42 = scmp.eq.s32.totalorder %s16, 0
    %p43 = por %p41, %p42
    %s44 = ssub.s32 %s10, %s17
    %p45 = scmp.eq.s32.totalorder %s44, 0
    %s47 = sadd.s32 %s46, 1
    %s48 = scalar_select %p45, %s46, %s47
    %p51 = pneg %p45
    %p52 = scmp.eq.s32.totalorder %s10, 1
    %p53 = por %p51, %p52
    %p54 = scmp.ne.s32.totalorder %s46, %s49
    %p55 = scmp.eq.s32.totalorder %s10, 0
    %p56 = por %p54, %p55
    %p57 = scmp.ne.s32.totalorder %s46, %s49
    %p58 = scmp.eq.s32.totalorder %s15, 1
    %p59 = por %p57, %p58
    %p60 = scmp.ne.s32.totalorder %s49, %s50
    %p61 = scmp.eq.s32.totalorder %s15, 0
    %p62 = por %p60, %p61
    %p63 = scmp.ne.s32.totalorder %s49, %s50
    %p64 = scmp.eq.s32.totalorder %s16, 1
    %p65 = por %p63, %p64
    %p67 = scmp.ne.s32.totalorder %s50, %s66
    %p68 = scmp.eq.s32.totalorder %s16, 0
    %p69 = por %p67, %p68
    %s71 = sadd.s32 %s70, 1
    %p74 = scmp.eq.s32.totalorder %s10, 1
    %p75 = scmp.ne.s32.totalorder %s70, %s72
    %p76 = scmp.eq.s32.totalorder %s10, 0
    %p77 = por %p75, %p76
    %p78 = scmp.ne.s32.totalorder %s70, %s72
    %p79 = scmp.eq.s32.totalorder %s15, 1
    %p80 = por %p78, %p79
    %p81 = scmp.ne.s32.totalorder %s72, %s73
    %p82 = scmp.eq.s32.totalorder %s15, 0
    %p83 = por %p81, %p82
    %p84 = scmp.ne.s32.totalorder %s72, %s73
    %p85 = scmp.eq.s32.totalorder %s16, 1
    %p86 = por %p84, %p85
    %p88 = scmp.ne.s32.totalorder %s73, %s87
    %p89 = scmp.eq.s32.totalorder %s16, 0
    %p90 = por %p88, %p89
    %s92 = sadd.s32 %s91, 1
    %p95 = scmp.eq.s32.totalorder %s10, 1
    %p96 = scmp.ne.s32.totalorder %s91, %s93
    %p97 = scmp.eq.s32.totalorder %s10, 0
    %p98 = por %p96, %p97
    %p99 = scmp.ne.s32.totalorder %s91, %s93
    %p100 = scmp.eq.s32.totalorder %s15, 1
    %p101 = por %p99, %p100
    %p102 = scmp.ne.s32.totalorder %s93, %s94
    %p103 = scmp.eq.s32.totalorder %s15, 0
    %p104 = por %p102, %p103
    %p105 = scmp.ne.s32.totalorder %s93, %s94
    %p106 = scmp.eq.s32.totalorder %s16, 1
    %p107 = por %p105, %p106
    %p109 = scmp.ne.s32.totalorder %s94, %s108
    %p110 = scmp.eq.s32.totalorder %s16, 0
    %p111 = por %p109, %p110
    %s112 = ssub.s32 %s10, %s17
    %p113 = scmp.eq.s32.totalorder %s112, 0
    %s115 = sadd.s32 %s114, 1
    %s116 = scalar_select %p113, %s114, %s115
    %p119 = pneg %p113
    %p120 = scmp.eq.s32.totalorder %s10, 1
    %p121 = por %p119, %p120
    %p122 = scmp.ne.s32.totalorder %s114, %s117
    %p123 = scmp.eq.s32.totalorder %s10, 0
    %p124 = por %p122, %p123
    %p125 = scmp.ne.s32.totalorder %s114, %s117
    %p126 = scmp.eq.s32.totalorder %s15, 1
    %p127 = por %p125, %p126
    %p128 = scmp.ne.s32.totalorder %s117, %s118
    %p129 = scmp.eq.s32.totalorder %s15, 0
    %p130 = por %p128, %p129
    %p131 = scmp.ne.s32.totalorder %s117, %s118
    %p132 = scmp.eq.s32.totalorder %s16, 1
    %p133 = por %p131, %p132
    %p135 = scmp.ne.s32.totalorder %s118, %s134
    %p136 = scmp.eq.s32.totalorder %s16, 0
    %p137 = por %p135, %p136
    %p138 = scmp.le.s32.totalorder 1, %s10
    %p139 = scmp.lt.s32.totalorder %s10, 3
    %p140 = pnand %p138, %p139
    %p141 = pneg %p140
    // Predicated region
    $region9: #{cnn_encoder_forward.4} parent=5 // pred_check
      _
    $region10: #{cnn_encoder_forward.4} parent=5 // pred_check_branch
      %143 = sbr.rel (%p140) target = $region12
    $region11: #{cnn_encoder_forward.4} parent=5 // pred_region
      %s144 = ssub.s32 %s10, 1
      // Predicated region
      $region13: #{cnn_encoder_forward.4} parent=11 // pred_check
        %p145 = pneg %p83
      $region14: #{cnn_encoder_forward.4} parent=11 // pred_check_branch
        %147 = sbr.rel (%p145) target = $region16
      $region15: #{cnn_encoder_forward.4} parent=11 // pred_region
        _
      $region16: #{cnn_encoder_forward.4} parent=11 // pred_fallthru
        _
      // Predicated region
      $region17: #{cnn_encoder_forward.4} parent=11 // pred_check
        %p148 = pneg %p104
      $region18: #{cnn_encoder_forward.4} parent=11 // pred_check_branch
        %150 = sbr.rel (%p148) target = $region20
      $region19: #{cnn_encoder_forward.4} parent=11 // pred_region
        _
      $region20: #{cnn_encoder_forward.4} parent=11 // pred_fallthru
        _
    $region12: #{cnn_encoder_forward.4} parent=5 // pred_fallthru
      _
    %p151 = scmp.lt.s32.totalorder %s10, 2
    // Predicated region
    $region21: #{cnn_encoder_forward.4} parent=5 // pred_check
      %p152 = pneg %p151
    $region22: #{cnn_encoder_forward.4} parent=5 // pred_check_branch
      %154 = sbr.rel (%p152) target = $region24
    $region23: #{cnn_encoder_forward.4} parent=5 // pred_region
      // Predicated region
      $region25: #{cnn_encoder_forward.4} parent=23 // pred_check
        %p155 = pneg %p30
      $region26: #{cnn_encoder_forward.4} parent=23 // pred_check_branch
        %157 = sbr.rel (%p155) target = $region28
      $region27: #{cnn_encoder_forward.4} parent=23 // pred_region
        %p158 = scmp.lt.s32.totalorder %s10, 1
        %s159 = scalar_select %p158, %s10, 1
        %s160 = smul.addr %s159, 12
        %s161 = smul.addr %s160, 4
        %s162 = scalar_lea.vmem %s0, %s161
      $region28: #{cnn_encoder_forward.4} parent=23 // pred_fallthru
        _
      // Predicated region
      $region29: #{cnn_encoder_forward.4} parent=23 // pred_check
        %p163 = pneg %p56
      $region30: #{cnn_encoder_forward.4} parent=23 // pred_check_branch
        %165 = sbr.rel (%p163) target = $region32
      $region31: #{cnn_encoder_forward.4} parent=23 // pred_region
        %p166 = scmp.lt.s32.totalorder %s10, 1
        %s167 = scalar_select %p166, %s10, 1
        %s168 = smul.addr %s167, 12
        %s169 = smul.addr %s168, 4
        %s170 = scalar_lea.vmem %s1, %s169
      $region32: #{cnn_encoder_forward.4} parent=23 // pred_fallthru
        _
    $region24: #{cnn_encoder_forward.4} parent=5 // pred_fallthru
      _
    %p171 = scmp.le.s32.totalorder 1, %s10
    %p172 = scmp.lt.s32.totalorder %s10, 3
    %p173 = pnand %p171, %p172
    %p174 = pneg %p173
    // Predicated region
    $region33: #{cnn_encoder_forward.4} parent=5 // pred_check
      _
    $region34: #{cnn_encoder_forward.4} parent=5 // pred_check_branch
      %176 = sbr.rel (%p173) target = $region36
    $region35: #{cnn_encoder_forward.4} parent=5 // pred_region
      %s177 = ssub.s32 %s10, 1
      %p178 = scmp.lt.s32.totalorder %s15, 1
      %s179 = scalar_select %p178, %s15, 1
      %s180 = smul.addr %s179, 12
      %s181 = smul.addr %s180, 4
      %s182 = scalar_lea.vmem %s0, %s181
      %p183 = pneg %p36
      %p184 = pneg %p33
      %p185 = scmp.lt.s32.totalorder %s15, 1
      %s186 = scalar_select %p185, %s15, 1
      %s187 = smul.addr %s186, 12
      %s188 = smul.addr %s187, 4
      %s189 = scalar_lea.vmem %s1, %s188
      %p190 = pneg %p62
      %p191 = pneg %p59
      %p192 = pneg %p83
      %p193 = pneg %p80
      %p194 = pneg %p104
      %p195 = pneg %p101
      %p196 = pneg %p130
      %p197 = pneg %p127
      %p198 = scmp.lt.s32.totalorder %s15, 1
      %s199 = scalar_select %p198, %s15, 1
      %s200 = smul.addr %s199, 9
      %s201 = smul.addr %s200, 4
      %s202 = scalar_lea.vmem %s4, %s201
      %p203 = scmp.lt.s32.totalorder %s15, 1
      %s204 = scalar_select %p203, %s15, 1
      %s205 = smul.addr %s204, 12
      %s206 = smul.addr %s205, 4
      %s207 = scalar_lea.vmem %s0, %s206
      %p208 = scmp.lt.s32.totalorder %s15, 1
      %s209 = scalar_select %p208, %s15, 1
      %s210 = smul.addr %s209, 12
      %s211 = smul.addr %s210, 4
      %s212 = scalar_lea.vmem %s1, %s211
      %p213 = scmp.lt.s32.totalorder %s15, 1
      %s214 = scalar_select %p213, %s15, 1
      %s215 = smul.addr %s214, 9
      %s216 = smul.addr %s215, 4
      %s217 = scalar_lea.vmem %s4, %s216
      %v219 = vld [vmem:[%s207] sm:$0xf]
      %v220 = vld [vmem:[%s207 + $0x4] sm:$0xf]
      %v221 = vld [vmem:[%s207 + $0x8] sm:$0xf]
      %v222 = vld [vmem:[%s207 + $0xc] sm:$0xf]
      %v223 = vld [vmem:[%s207 + $0x10] sm:$0xf]
      %v224 = vld [vmem:[%s207 + $0x14] sm:$0xf]
      %v225 = vld [vmem:[%s207 + $0x18] sm:$0xf]
      %v226 = vld [vmem:[%s207 + $0x1c] sm:$0xf]
      %v227 = vld [vmem:[%s207 + $0x20] sm:$0xf]
      %v228 = vld [vmem:[%s2] sm:$0xf]
      %v229 = vld [vmem:[%s2 + $0x4] sm:$0xf]
      %v230 = vld [vmem:[%s207 + $0x24] sm:$0x1]
      %s231 = scalar_lea.vmem %s2, 8
      %v232 = vld [vmem:[%s231] sm:$0xf]
      %v233 = vld [vmem:[%s231 + $0x4] sm:$0xf]
      %v244 = vunpack.c.l.b16 %v219
      %v245 = vunpack.c.l.b16 %v220
      %v246 = vunpack.c.l.b16 %v221
      %v247 = vunpack.c.l.b16 %v222
      %v248 = vunpack.c.l.b16 %v223
      %v249 = vunpack.c.l.b16 %v224
      %v250 = vunpack.c.l.b16 %v225
      %v251 = vunpack.c.l.b16 %v226
      %v252 = vunpack.c.l.b16 %v227
      %v253 = vunpack.c.l.b16 %v230
      %v254 = vpack.c.b16 %v245, %v244
      %v255 = vpack.c.b16 %v247, %v246
      %v256 = vpack.c.b16 %v249, %v248
      %v257 = vpack.c.b16 %v251, %v250
      %v258 = vpack.c.b16 %v253, %v252
      %vm259 = vsmask.f32 7424
      %v261 = vshrl.u32 %v254, 16
      %v263 = vshll.u32 %v254, 16
      %v265 = vrot.slane %v263, 1
      %v266 = vor.u32 %v261, %v265
      %v268 = vshll.u32 %v255, 16
      %v270 = vrot.slane %v268, 1
      %v271 = vsel %vm259, %v266, %v270
      %v272 = vshrl.u32 %v255, 16
      %v274 = vor.u32 %v272, %v270
      %v276 = vshll.u32 %v256, 16
      %v278 = vrot.slane %v276, 1
      %v279 = vsel %vm259, %v274, %v278
      %v280 = vshrl.u32 %v256, 16
      %v282 = vor.u32 %v280, %v278
      %v284 = vshll.u32 %v257, 16
      %v286 = vrot.slane %v284, 1
      %v287 = vsel %vm259, %v282, %v286
      %v288 = vshrl.u32 %v257, 16
      %v290 = vor.u32 %v288, %v286
      %v292 = vshll.u32 %v258, 16
      %v294 = vrot.slane %v292, 1
      %v295 = vsel %vm259, %v290, %v294
      %v296 = vshrl.u32 %v258, 16
      %v298 = vor.u32 %v296, %v294
      %v301 = vunpack.c.l.b16 %v232
      %v302 = vunpack.c.l.b16 %v233
      %v303 = vpack.c.b16 %v302, %v301
      %vm305 = vcmask 130048
      %v307 = vsel %vm305, %v271, 0
      %v310 = vsel %vm305, %v279, 0
      %v313 = vsel %vm305, %v287, 0
      %v316 = vsel %vm305, %v295, 0
      %v319 = vsel %vm305, %v298, 0
      %321 = vmatprep.subr.bf16.mxu0 0
      %322 = vmatpush1.bf16.msra.mxu0 %v303
      %323 = vmatprep.subr.bf16.mxu0 0
      %324 = vmatpush1.bf16.msra.mxu0 0
      %325 = vmatprep.subr.bf16.mxu0 0
      %326 = vmatpush1.bf16.msra.mxu0 0
      %327 = vmatprep.subr.bf16.mxu0 0
      %328 = vmatpush1.bf16.msra.mxu0 0
      %329 = vmatprep.subr.bf16.mxu0 0
      %330 = vmatpush1.bf16.msra.mxu0 0
      %331 = vmatprep.subr.bf16.mxu0 0
      %332 = vmatpush1.bf16.msra.mxu0 0
      %333 = vmatprep.subr.bf16.mxu0 0
      %334 = vmatpush1.bf16.msra.mxu0 0
      %335 = vmatprep.subr.bf16.mxu0 0
      %336 = vmatpush1.bf16.msra.mxu0 0
      %337 = vmatprep.subr.bf16.mxu0 0
      %338 = vmatpush1.bf16.msra.mxu0 0
      %339 = vmatprep.subr.bf16.mxu0 0
      %340 = vmatpush1.bf16.msra.mxu0 0
      %341 = vmatprep.subr.bf16.mxu0 0
      %342 = vmatpush1.bf16.msra.mxu0 0
      %343 = vmatprep.subr.bf16.mxu0 0
      %344 = vmatpush1.bf16.msra.mxu0 0
      %345 = vmatprep.subr.bf16.mxu0 0
      %346 = vmatpush1.bf16.msra.mxu0 0
      %347 = vmatprep.subr.bf16.mxu0 0
      %348 = vmatpush1.bf16.msra.mxu0 0
      %349 = vmatprep.subr.bf16.mxu0 0
      %350 = vmatpush1.bf16.msra.mxu0 0
      %351 = vmatprep.subr.bf16.mxu0 0
      %352 = vmatpush1.bf16.msra.mxu0 0
      %353 = vmatprep.mubr.bf16.mxu0 0
      %354 = vmatmul.mubr.bf16.gmra.mrb[0].mxu0 %v307
      %v355 = vpop.f32.mrb[0].mxu0
      %v356 = vadd.f32 0.0, %v355
      %v357 = vpop.f32.mrb[0].mxu0
      %v358 = vpop.f32.mrb[0].mxu0
      %v359 = vadd.f32 0.0, %v358
      %v360 = vpop.f32.mrb[0].mxu0
      %361 = vmatprep.mubr.bf16.mxu0 0
      %362 = vmatmul.mubr.bf16.gmra.mrb[0].mxu0 %v310
      %v363 = vpop.f32.mrb[0].mxu0
      %v364 = vadd.f32 0.0, %v363
      %v365 = vpop.f32.mrb[0].mxu0
      %v366 = vpop.f32.mrb[0].mxu0
      %v367 = vadd.f32 0.0, %v366
      %v368 = vpop.f32.mrb[0].mxu0
      %369 = vmatprep.mubr.bf16.mxu0 0
      %370 = vmatmul.mubr.bf16.gmra.mrb[0].mxu0 %v313
      %v371 = vpop.f32.mrb[0].mxu0
      %v372 = vadd.f32 0.0, %v371
      %v373 = vpop.f32.mrb[0].mxu0
      %v374 = vpop.f32.mrb[0].mxu0
      %v375 = vadd.f32 0.0, %v374
      %v376 = vpop.f32.mrb[0].mxu0
      %377 = vmatprep.mubr.bf16.mxu0 0
      %378 = vmatmul.mubr.bf16.gmra.mrb[0].mxu0 %v316
      %v379 = vpop.f32.mrb[0].mxu0
      %v380 = vadd.f32 0.0, %v379
      %v381 = vpop.f32.mrb[0].mxu0
      %v382 = vpop.f32.mrb[0].mxu0
      %v383 = vadd.f32 0.0, %v382
      %v384 = vpop.f32.mrb[0].mxu0
      %385 = vmatprep.mubr.bf16.mxu0 0
      %386 = vmatmul.mubr.bf16.gmra.mrb[0].mxu0 %v319
      %v387 = vpop.f32.mrb[0].mxu0
      %v388 = vadd.f32 0.0, %v387
      %v389 = vpop.f32.mrb[0].mxu0
      %v390 = vpop.f32.mrb[0].mxu0
      %v391 = vpop.f32.mrb[0].mxu0
      %392 = vdwg.mxu0
      %v393 = vpack.c.b16 %v252, %v252
      %v396 = vunpack.c.l.b16 %v228
      %v397 = vunpack.c.l.b16 %v229
      %v398 = vpack.c.b16 %v397, %v396
      %v400 = vsel %vm305, %v254, 0
      %v402 = vsel %vm305, %v255, 0
      %v404 = vsel %vm305, %v256, 0
      %v406 = vsel %vm305, %v257, 0
      %v409 = vsel %vm305, %v393, 0
      %411 = vmatprep.subr.bf16.mxu0 0
      %412 = vmatpush1.bf16.msra.mxu0 %v398
      %413 = vmatprep.subr.bf16.mxu0 0
      %414 = vmatpush1.bf16.msra.mxu0 0
      %415 = vmatprep.subr.bf16.mxu0 0
      %416 = vmatpush1.bf16.msra.mxu0 0
      %417 = vmatprep.subr.bf16.mxu0 0
      %418 = vmatpush1.bf16.msra.mxu0 0
      %419 = vmatprep.subr.bf16.mxu0 0
      %420 = vmatpush1.bf16.msra.mxu0 0
      %421 = vmatprep.subr.bf16.mxu0 0
      %422 = vmatpush1.bf16.msra.mxu0 0
      %423 = vmatprep.subr.bf16.mxu0 0
      %424 = vmatpush1.bf16.msra.mxu0 0
      %425 = vmatprep.subr.bf16.mxu0 0
      %426 = vmatpush1.bf16.msra.mxu0 0
      %427 = vmatprep.subr.bf16.mxu0 0
      %428 = vmatpush1.bf16.msra.mxu0 0
      %429 = vmatprep.subr.bf16.mxu0 0
      %430 = vmatpush1.bf16.msra.mxu0 0
      %431 = vmatprep.subr.bf16.mxu0 0
      %432 = vmatpush1.bf16.msra.mxu0 0
      %433 = vmatprep.subr.bf16.mxu0 0
      %434 = vmatpush1.bf16.msra.mxu0 0
      %435 = vmatprep.subr.bf16.mxu0 0
      %436 = vmatpush1.bf16.msra.mxu0 0
      %437 = vmatprep.subr.bf16.mxu0 0
      %438 = vmatpush1.bf16.msra.mxu0 0
      %439 = vmatprep.subr.bf16.mxu0 0
      %440 = vmatpush1.bf16.msra.mxu0 0
      %441 = vmatprep.subr.bf16.mxu0 0
      %442 = vmatpush1.bf16.msra.mxu0 0
      %443 = vmatprep.mubr.bf16.mxu0 0
      %444 = vmatmul.mubr.bf16.gmra.mrb[0].mxu0 %v400
      %v445 = vpop.f32.mrb[0].mxu0
      %v446 = vadd.f32 %v356, %v445
      %v447 = vpop.f32.mrb[0].mxu0
      %v448 = vpop.f32.mrb[0].mxu0
      %v449 = vadd.f32 %v359, %v448
      %v450 = vpop.f32.mrb[0].mxu0
      %451 = vmatprep.mubr.bf16.mxu0 0
      %452 = vmatmul.mubr.bf16.gmra.mrb[0].mxu0 %v402
      %v453 = vpop.f32.mrb[0].mxu0
      %v454 = vadd.f32 %v364, %v453
      %v455 = vpop.f32.mrb[0].mxu0
      %v456 = vpop.f32.mrb[0].mxu0
      %v457 = vadd.f32 %v367, %v456
      %v458 = vpop.f32.mrb[0].mxu0
      %459 = vmatprep.mubr.bf16.mxu0 0
      %460 = vmatmul.mubr.bf16.gmra.mrb[0].mxu0 %v404
      %v461 = vpop.f32.mrb[0].mxu0
      %v462 = vadd.f32 %v372, %v461
      %v463 = vpop.f32.mrb[0].mxu0
      %v464 = vpop.f32.mrb[0].mxu0
      %v465 = vadd.f32 %v375, %v464
      %v466 = vpop.f32.mrb[0].mxu0
      %467 = vmatprep.mubr.bf16.mxu0 0
      %468 = vmatmul.mubr.bf16.gmra.mrb[0].mxu0 %v406
      %v469 = vpop.f32.mrb[0].mxu0
      %v470 = vadd.f32 %v380, %v469
      %v471 = vpop.f32.mrb[0].mxu0
      %v472 = vpop.f32.mrb[0].mxu0
      %v473 = vadd.f32 %v383, %v472
      %v474 = vpop.f32.mrb[0].mxu0
      %475 = vmatprep.mubr.bf16.mxu0 0
      %476 = vmatmul.mubr.bf16.gmra.mrb[0].mxu0 %v409
      %v477 = vpop.f32.mrb[0].mxu0
      %v478 = vadd.f32 %v388, %v477
      %v479 = vpop.f32.mrb[0].mxu0
      %v480 = vpop.f32.mrb[0].mxu0
      %v481 = vpop.f32.mrb[0].mxu0
      %482 = vdwg.mxu0
      %v483 = vld [vmem:[%s212] sm:$0xf]
      %v484 = vld [vmem:[%s212 + $0x4] sm:$0xf]
      %v485 = vld [vmem:[%s212 + $0x8] sm:$0xf]
      %v486 = vld [vmem:[%s212 + $0xc] sm:$0xf]
      %v487 = vld [vmem:[%s212 + $0x10] sm:$0xf]
      %v488 = vld [vmem:[%s212 + $0x14] sm:$0xf]
      %v489 = vld [vmem:[%s212 + $0x18] sm:$0xf]
      %v490 = vld [vmem:[%s212 + $0x1c] sm:$0xf]
      %v491 = vld [vmem:[%s212 + $0x20] sm:$0xf]
      %s492 = scalar_lea.vmem %s2, 16
      %v493 = vld [vmem:[%s492] sm:$0xf]
      %v494 = vld [vmem:[%s492 + $0x4] sm:$0xf]
      %v504 = vunpack.c.l.b16 %v483
      %v505 = vunpack.c.l.b16 %v484
      %v506 = vunpack.c.l.b16 %v485
      %v507 = vunpack.c.l.b16 %v486
      %v508 = vunpack.c.l.b16 %v487
      %v509 = vunpack.c.l.b16 %v488
      %v510 = vunpack.c.l.b16 %v489
      %v511 = vunpack.c.l.b16 %v490
      %v512 = vunpack.c.l.b16 %v491
      %v513 = vpack.c.b16 %v505, %v504
      %v514 = vpack.c.b16 %v507, %v506
      %v515 = vpack.c.b16 %v509, %v508
      %v516 = vpack.c.b16 %v511, %v510
      %v517 = vpack.c.b16 %v512, %v512
      %v520 = vunpack.c.l.b16 %v493
      %v521 = vunpack.c.l.b16 %v494
      %v522 = vpack.c.b16 %v521, %v520
      %v525 = vsel %vm305, %v513, 0
      %v528 = vsel %vm305, %v514, 0
      %v531 = vsel %vm305, %v515, 0
      %v534 = vsel %vm305, %v516, 0
      %v537 = vsel %vm305, %v517, 0
      %539 = vmatprep.subr.bf16.mxu0 0
      %540 = vmatpush1.bf16.msra.mxu0 %v522
      %541 = vmatprep.subr.bf16.mxu0 0
      %542 = vmatpush1.bf16.msra.mxu0 0
      %543 = vmatprep.subr.bf16.mxu0 0
      %544 = vmatpush1.bf16.msra.mxu0 0
      %545 = vmatprep.subr.bf16.mxu0 0
      %546 = vmatpush1.bf16.msra.mxu0 0
      %547 = vmatprep.subr.bf16.mxu0 0
      %548 = vmatpush1.bf16.msra.mxu0 0
      %549 = vmatprep.subr.bf16.mxu0 0
      %550 = vmatpush1.bf16.msra.mxu0 0
      %551 = vmatprep.subr.bf16.mxu0 0
      %552 = vmatpush1.bf16.msra.mxu0 0
      %553 = vmatprep.subr.bf16.mxu0 0
      %554 = vmatpush1.bf16.msra.mxu0 0
      %555 = vmatprep.subr.bf16.mxu0 0
      %556 = vmatpush1.bf16.msra.mxu0 0
      %557 = vmatprep.subr.bf16.mxu0 0
      %558 = vmatpush1.bf16.msra.mxu0 0
      %559 = vmatprep.subr.bf16.mxu0 0
      %560 = vmatpush1.bf16.msra.mxu0 0
      %561 = vmatprep.subr.bf16.mxu0 0
      %562 = vmatpush1.bf16.msra.mxu0 0
      %563 = vmatprep.subr.bf16.mxu0 0
      %564 = vmatpush1.bf16.msra.mxu0 0
      %565 = vmatprep.subr.bf16.mxu0 0
      %566 = vmatpush1.bf16.msra.mxu0 0
      %567 = vmatprep.subr.bf16.mxu0 0
      %568 = vmatpush1.bf16.msra.mxu0 0
      %569 = vmatprep.subr.bf16.mxu0 0
      %570 = vmatpush1.bf16.msra.mxu0 0
      %571 = vmatprep.mubr.bf16.mxu0 0
      %572 = vmatmul.mubr.bf16.gmra.mrb[0].mxu0 %v525
      %v573 = vpop.f32.mrb[0].mxu0
      %v574 = vadd.f32 0.0, %v573
      %v575 = vpop.f32.mrb[0].mxu0
      %v576 = vpop.f32.mrb[0].mxu0
      %v577 = vadd.f32 0.0, %v576
      %v578 = vpop.f32.mrb[0].mxu0
      %579 = vmatprep.mubr.bf16.mxu0 0
      %580 = vmatmul.mubr.bf16.gmra.mrb[0].mxu0 %v528
      %v581 = vpop.f32.mrb[0].mxu0
      %v582 = vadd.f32 0.0, %v581
      %v583 = vpop.f32.mrb[0].mxu0
      %v584 = vpop.f32.mrb[0].mxu0
      %v585 = vadd.f32 0.0, %v584
      %v586 = vpop.f32.mrb[0].mxu0
      %587 = vmatprep.mubr.bf16.mxu0 0
      %588 = vmatmul.mubr.bf16.gmra.mrb[0].mxu0 %v531
      %v589 = vpop.f32.mrb[0].mxu0
      %v590 = vadd.f32 0.0, %v589
      %v591 = vpop.f32.mrb[0].mxu0
      %v592 = vpop.f32.mrb[0].mxu0
      %v593 = vadd.f32 0.0, %v592
      %v594 = vpop.f32.mrb[0].mxu0
      %595 = vmatprep.mubr.bf16.mxu0 0
      %596 = vmatmul.mubr.bf16.gmra.mrb[0].mxu0 %v534
      %v597 = vpop.f32.mrb[0].mxu0
      %v598 = vadd.f32 0.0, %v597
      %v599 = vpop.f32.mrb[0].mxu0
      %v600 = vpop.f32.mrb[0].mxu0
      %v601 = vadd.f32 0.0, %v600
      %v602 = vpop.f32.mrb[0].mxu0
      %603 = vmatprep.mubr.bf16.mxu0 0
      %604 = vmatmul.mubr.bf16.gmra.mrb[0].mxu0 %v537
      %v605 = vpop.f32.mrb[0].mxu0
      %v606 = vadd.f32 0.0, %v605
      %v607 = vpop.f32.mrb[0].mxu0
      %v608 = vpop.f32.mrb[0].mxu0
      %v609 = vpop.f32.mrb[0].mxu0
      %610 = vdwg.mxu0
      %v611 = vadd.f32 %v446, %v574
      %v612 = vadd.f32 %v449, %v577
      %v613 = vadd.f32 %v454, %v582
      %v614 = vadd.f32 %v457, %v585
      %v615 = vadd.f32 %v462, %v590
      %v616 = vadd.f32 %v465, %v593
      %v617 = vadd.f32 %v470, %v598
      %v618 = vadd.f32 %v473, %v601
      %v619 = vadd.f32 %v478, %v606
      %v620 = vld [vmem:[%s212] sm:$0xf]
      %v621 = vld [vmem:[%s212 + $0x4] sm:$0xf]
      %v622 = vld [vmem:[%s212 + $0x8] sm:$0xf]
      %v623 = vld [vmem:[%s212 + $0xc] sm:$0xf]
      %v624 = vld [vmem:[%s212 + $0x10] sm:$0xf]
      %v625 = vld [vmem:[%s212 + $0x14] sm:$0xf]
      %v626 = vld [vmem:[%s212 + $0x18] sm:$0xf]
      %v627 = vld [vmem:[%s212 + $0x1c] sm:$0xf]
      %v628 = vld [vmem:[%s212 + $0x20] sm:$0xf]
      %v629 = vld [vmem:[%s212 + $0x24] sm:$0x1]
      %s630 = scalar_lea.vmem %s2, 24
      %v631 = vld [vmem:[%s630] sm:$0xf]
      %v632 = vld [vmem:[%s630 + $0x4] sm:$0xf]
      %v643 = vunpack.c.l.b16 %v620
      %v644 = vunpack.c.l.b16 %v621
      %v645 = vunpack.c.l.b16 %v622
      %v646 = vunpack.c.l.b16 %v623
      %v647 = vunpack.c.l.b16 %v624
      %v648 = vunpack.c.l.b16 %v625
      %v649 = vunpack.c.l.b16 %v626
      %v650 = vunpack.c.l.b16 %v627
      %v651 = vunpack.c.l.b16 %v628
      %v652 = vunpack.c.l.b16 %v629
      %v653 = vpack.c.b16 %v644, %v643
      %v654 = vpack.c.b16 %v646, %v645
      %v655 = vpack.c.b16 %v648, %v647
      %v656 = vpack.c.b16 %v650, %v649
      %v657 = vpack.c.b16 %v652, %v651
      %v659 = vshrl.u32 %v653, 16
      %v661 = vshll.u32 %v653, 16
      %v663 = vrot.slane %v661, 1
      %v664 = vor.u32 %v659, %v663
      %v666 = vshll.u32 %v654, 16
      %v668 = vrot.slane %v666, 1
      %v669 = vsel %vm259, %v664, %v668
      %v670 = vshrl.u32 %v654, 16
      %v672 = vor.u32 %v670, %v668
      %v674 = vshll.u32 %v655, 16
      %v676 = vrot.slane %v674, 1
      %v677 = vsel %vm259, %v672, %v676
      %v678 = vshrl.u32 %v655, 16
      %v680 = vor.u32 %v678, %v676
      %v682 = vshll.u32 %v656, 16
      %v684 = vrot.slane %v682, 1
      %v685 = vsel %vm259, %v680, %v684
      %v686 = vshrl.u32 %v656, 16
      %v688 = vor.u32 %v686, %v684
      %v690 = vshll.u32 %v657, 16
      %v692 = vrot.slane %v690, 1
      %v693 = vsel %vm259, %v688, %v692
      %v694 = vshrl.u32 %v657, 16
      %v696 = vor.u32 %v694, %v692
      %v699 = vunpack.c.l.b16 %v631
      %v700 = vunpack.c.l.b16 %v632
      %v701 = vpack.c.b16 %v700, %v699
      %v704 = vsel %vm305, %v669, 0
      %v707 = vsel %vm305, %v677, 0
      %v710 = vsel %vm305, %v685, 0
      %v713 = vsel %vm305, %v693, 0
      %v716 = vsel %vm305, %v696, 0
      %718 = vmatprep.subr.bf16.mxu0 0
      %719 = vmatpush1.bf16.msra.mxu0 %v701
      %720 = vmatprep.subr.bf16.mxu0 0
      %721 = vmatpush1.bf16.msra.mxu0 0
      %722 = vmatprep.subr.bf16.mxu0 0
      %723 = vmatpush1.bf16.msra.mxu0 0
      %724 = vmatprep.subr.bf16.mxu0 0
      %725 = vmatpush1.bf16.msra.mxu0 0
      %726 = vmatprep.subr.bf16.mxu0 0
      %727 = vmatpush1.bf16.msra.mxu0 0
      %728 = vmatprep.subr.bf16.mxu0 0
      %729 = vmatpush1.bf16.msra.mxu0 0
      %730 = vmatprep.subr.bf16.mxu0 0
      %731 = vmatpush1.bf16.msra.mxu0 0
      %732 = vmatprep.subr.bf16.mxu0 0
      %733 = vmatpush1.bf16.msra.mxu0 0
      %734 = vmatprep.subr.bf16.mxu0 0
      %735 = vmatpush1.bf16.msra.mxu0 0
      %736 = vmatprep.subr.bf16.mxu0 0
      %737 = vmatpush1.bf16.msra.mxu0 0
      %738 = vmatprep.subr.bf16.mxu0 0
      %739 = vmatpush1.bf16.msra.mxu0 0
      %740 = vmatprep.subr.bf16.mxu0 0
      %741 = vmatpush1.bf16.msra.mxu0 0
      %742 = vmatprep.subr.bf16.mxu0 0
      %743 = vmatpush1.bf16.msra.mxu0 0
      %744 = vmatprep.subr.bf16.mxu0 0
      %745 = vmatpush1.bf16.msra.mxu0 0
      %746 = vmatprep.subr.bf16.mxu0 0
      %747 = vmatpush1.bf16.msra.mxu0 0
      %748 = vmatprep.subr.bf16.mxu0 0
      %749 = vmatpush1.bf16.msra.mxu0 0
      %750 = vmatprep.mubr.bf16.mxu0 0
      %751 = vmatmul.mubr.bf16.gmra.mrb[0].mxu0 %v704
      %v752 = vpop.f32.mrb[0].mxu0
      %v753 = vadd.f32 0.0, %v752
      %v754 = vpop.f32.mrb[0].mxu0
      %v755 = vpop.f32.mrb[0].mxu0
      %v756 = vadd.f32 0.0, %v755
      %v757 = vpop.f32.mrb[0].mxu0
      %758 = vmatprep.mubr.bf16.mxu0 0
      %759 = vmatmul.mubr.bf16.gmra.mrb[0].mxu0 %v707
      %v760 = vpop.f32.mrb[0].mxu0
      %v761 = vadd.f32 0.0, %v760
      %v762 = vpop.f32.mrb[0].mxu0
      %v763 = vpop.f32.mrb[0].mxu0
      %v764 = vadd.f32 0.0, %v763
      %v765 = vpop.f32.mrb[0].mxu0
      %766 = vmatprep.mubr.bf16.mxu0 0
      %767 = vmatmul.mubr.bf16.gmra.mrb[0].mxu0 %v710
      %v768 = vpop.f32.mrb[0].mxu0
      %v769 = vadd.f32 0.0, %v768
      %v770 = vpop.f32.mrb[0].mxu0
      %v771 = vpop.f32.mrb[0].mxu0
      %v772 = vadd.f32 0.0, %v771
      %v773 = vpop.f32.mrb[0].mxu0
      %774 = vmatprep.mubr.bf16.mxu0 0
      %775 = vmatmul.mubr.bf16.gmra.mrb[0].mxu0 %v713
      %v776 = vpop.f32.mrb[0].mxu0
      %v777 = vadd.f32 0.0, %v776
      %v778 = vpop.f32.mrb[0].mxu0
      %v779 = vpop.f32.mrb[0].mxu0
      %v780 = vadd.f32 0.0, %v779
      %v781 = vpop.f32.mrb[0].mxu0
      %782 = vmatprep.mubr.bf16.mxu0 0
      %783 = vmatmul.mubr.bf16.gmra.mrb[0].mxu0 %v716
      %v784 = vpop.f32.mrb[0].mxu0
      %v785 = vadd.f32 0.0, %v784
      %v786 = vpop.f32.mrb[0].mxu0
      %v787 = vpop.f32.mrb[0].mxu0
      %v788 = vpop.f32.mrb[0].mxu0
      %789 = vdwg.mxu0
      %v790 = vadd.f32 %v611, %v753
      %v791 = vadd.f32 %v612, %v756
      %v792 = vadd.f32 %v613, %v761
      %v793 = vadd.f32 %v614, %v764
      %v794 = vadd.f32 %v615, %v769
      %v795 = vadd.f32 %v616, %v772
      %v796 = vadd.f32 %v617, %v777
      %v797 = vadd.f32 %v618, %v780
      %v798 = vadd.f32 %v619, %v785
      %v799 = vld [vmem:[%s207 + $0x4] sm:$0xf]
      %v800 = vld [vmem:[%s207 + $0x8] sm:$0xf]
      %v801 = vld [vmem:[%s207 + $0xc] sm:$0xf]
      %v802 = vld [vmem:[%s207 + $0x10] sm:$0xf]
      %v803 = vld [vmem:[%s207 + $0x14] sm:$0xf]
      %v804 = vld [vmem:[%s207 + $0x18] sm:$0xf]
      %v805 = vld [vmem:[%s207 + $0x1c] sm:$0xf]
      %v806 = vld [vmem:[%s207 + $0x20] sm:$0xf]
      %v807 = vld [vmem:[%s207 + $0x24] sm:$0xf]
      %v808 = vld [vmem:[%s207 + $0x28] sm:$0x1]
      %s809 = scalar_lea.vmem %s2, 32
      %v810 = vld [vmem:[%s809] sm:$0xf]
      %v811 = vld [vmem:[%s809 + $0x4] sm:$0xf]
      %v822 = vunpack.c.l.b16 %v799
      %v823 = vunpack.c.l.b16 %v800
      %v824 = vunpack.c.l.b16 %v801
      %v825 = vunpack.c.l.b16 %v802
      %v826 = vunpack.c.l.b16 %v803
      %v827 = vunpack.c.l.b16 %v804
      %v828 = vunpack.c.l.b16 %v805
      %v829 = vunpack.c.l.b16 %v806
      %v830 = vunpack.c.l.b16 %v807
      %v831 = vunpack.c.l.b16 %v808
      %v832 = vpack.c.b16 %v823, %v822
      %v833 = vpack.c.b16 %v825, %v824
      %v834 = vpack.c.b16 %v827, %v826
      %v835 = vpack.c.b16 %v829, %v828
      %v836 = vpack.c.b16 %v831, %v830
      %v838 = vshrl.u32 %v832, 16
      %v840 = vshll.u32 %v832, 16
      %v842 = vrot.slane %v840, 1
      %v843 = vor.u32 %v838, %v842
      %v845 = vshll.u32 %v833, 16
      %v847 = vrot.slane %v845, 1
      %v848 = vsel %vm259, %v843, %v847
      %v849 = vshrl.u32 %v833, 16
      %v851 = vor.u32 %v849, %v847
      %v853 = vshll.u32 %v834, 16
      %v855 = vrot.slane %v853, 1
      %v856 = vsel %vm259, %v851, %v855
      %v857 = vshrl.u32 %v834, 16
      %v859 = vor.u32 %v857, %v855
      %v861 = vshll.u32 %v835, 16
      %v863 = vrot.slane %v861, 1
      %v864 = vsel %vm259, %v859, %v863
      %v865 = vshrl.u32 %v835, 16
      %v867 = vor.u32 %v865, %v863
      %v869 = vshll.u32 %v836, 16
      %v871 = vrot.slane %v869, 1
      %v872 = vsel %vm259, %v867, %v871
      %v873 = vshrl.u32 %v836, 16
      %v875 = vor.u32 %v873, %v871
      %v878 = vunpack.c.l.b16 %v810
      %v879 = vunpack.c.l.b16 %v811
      %v880 = vpack.c.b16 %v879, %v878
      %v883 = vsel %vm305, %v848, 0
      %v886 = vsel %vm305, %v856, 0
      %v889 = vsel %vm305, %v864, 0
      %v892 = vsel %vm305, %v872, 0
      %v895 = vsel %vm305, %v875, 0
      %897 = vmatprep.subr.bf16.mxu0 0
      %898 = vmatpush1.bf16.msra.mxu0 %v880
      %899 = vmatprep.subr.bf16.mxu0 0
      %900 = vmatpush1.bf16.msra.mxu0 0
      %901 = vmatprep.subr.bf16.mxu0 0
      %902 = vmatpush1.bf16.msra.mxu0 0
      %903 = vmatprep.subr.bf16.mxu0 0
      %904 = vmatpush1.bf16.msra.mxu0 0
      %905 = vmatprep.subr.bf16.mxu0 0
      %906 = vmatpush1.bf16.msra.mxu0 0
      %907 = vmatprep.subr.bf16.mxu0 0
      %908 = vmatpush1.bf16.msra.mxu0 0
      %909 = vmatprep.subr.bf16.mxu0 0
      %910 = vmatpush1.bf16.msra.mxu0 0
      %911 = vmatprep.subr.bf16.mxu0 0
      %912 = vmatpush1.bf16.msra.mxu0 0
      %913 = vmatprep.subr.bf16.mxu0 0
      %914 = vmatpush1.bf16.msra.mxu0 0
      %915 = vmatprep.subr.bf16.mxu0 0
      %916 = vmatpush1.bf16.msra.mxu0 0
      %917 = vmatprep.subr.bf16.mxu0 0
      %918 = vmatpush1.bf16.msra.mxu0 0
      %919 = vmatprep.subr.bf16.mxu0 0
      %920 = vmatpush1.bf16.msra.mxu0 0
      %921 = vmatprep.subr.bf16.mxu0 0
      %922 = vmatpush1.bf16.msra.mxu0 0
      %923 = vmatprep.subr.bf16.mxu0 0
      %924 = vmatpush1.bf16.msra.mxu0 0
      %925 = vmatprep.subr.bf16.mxu0 0
      %926 = vmatpush1.bf16.msra.mxu0 0
      %927 = vmatprep.subr.bf16.mxu0 0
      %928 = vmatpush1.bf16.msra.mxu0 0
      %929 = vmatprep.mubr.bf16.mxu0 0
      %930 = vmatmul.mubr.bf16.gmra.mrb[0].mxu0 %v883
      %v931 = vpop.f32.mrb[0].mxu0
      %v932 = vadd.f32 0.0, %v931
      %v933 = vpop.f32.mrb[0].mxu0
      %v934 = vpop.f32.mrb[0].mxu0
      %v935 = vadd.f32 0.0, %v934
      %v936 = vpop.f32.mrb[0].mxu0
      %937 = vmatprep.mubr.bf16.mxu0 0
      %938 = vmatmul.mubr.bf16.gmra.mrb[0].mxu0 %v886
      %v939 = vpop.f32.mrb[0].mxu0
      %v940 = vadd.f32 0.0, %v939
      %v941 = vpop.f32.mrb[0].mxu0
      %v942 = vpop.f32.mrb[0].mxu0
      %v943 = vadd.f32 0.0, %v942
      %v944 = vpop.f32.mrb[0].mxu0
      %945 = vmatprep.mubr.bf16.mxu0 0
      %946 = vmatmul.mubr.bf16.gmra.mrb[0].mxu0 %v889
      %v947 = vpop.f32.mrb[0].mxu0
      %v948 = vadd.f32 0.0, %v947
      %v949 = vpop.f32.mrb[0].mxu0
      %v950 = vpop.f32.mrb[0].mxu0
      %v951 = vadd.f32 0.0, %v950
      %v952 = vpop.f32.mrb[0].mxu0
      %953 = vmatprep.mubr.bf16.mxu0 0
      %954 = vmatmul.mubr.bf16.gmra.mrb[0].mxu0 %v892
      %v955 = vpop.f32.mrb[0].mxu0
      %v956 = vadd.f32 0.0, %v955
      %v957 = vpop.f32.mrb[0].mxu0
      %v958 = vpop.f32.mrb[0].mxu0
      %v959 = vadd.f32 0.0, %v958
      %v960 = vpop.f32.mrb[0].mxu0
      %961 = vmatprep.mubr.bf16.mxu0 0
      %962 = vmatmul.mubr.bf16.gmra.mrb[0].mxu0 %v895
      %v963 = vpop.f32.mrb[0].mxu0
      %v964 = vadd.f32 0.0, %v963
      %v965 = vpop.f32.mrb[0].mxu0
      %v966 = vpop.f32.mrb[0].mxu0
      %v967 = vpop.f32.mrb[0].mxu0
      %968 = vdwg.mxu0
      %v969 = vadd.f32 %v790, %v932
      %v970 = vadd.f32 %v791, %v935
      %v971 = vadd.f32 %v792, %v940
      %v972 = vadd.f32 %v793, %v943
      %v973 = vadd.f32 %v794, %v948
      %v974 = vadd.f32 %v795, %v951
      %v975 = vadd.f32 %v796, %v956
      %v976 = vadd.f32 %v797, %v959
      %v977 = vadd.f32 %v798, %v964
      %v978 = vld [vmem:[%s207 + $0x4] sm:$0xe]
      %s979 = scalar_lea.vmem %s2, 40
      %v980 = vld [vmem:[%s979] sm:$0xf]
      %v981 = vld [vmem:[%s979 + $0x4] sm:$0xf]
      %v983 = vunpack.c.l.b16 %v978
      %v984 = vpack.c.b16 %v823, %v983
      %vm985 = vcmask 1046528
      %v986 = vrot.slane %v984, 1
      %v987 = vrot.slane %v833, 1
      %v988 = vsel %vm985, %v986, %v987
      %v989 = vrot.slane %v834, 1
      %v990 = vsel %vm985, %v987, %v989
      %v991 = vrot.slane %v835, 1
      %v992 = vsel %vm985, %v989, %v991
      %v993 = vrot.slane %v836, 1
      %v994 = vsel %vm985, %v991, %v993
      %v997 = vunpack.c.l.b16 %v980
      %v998 = vunpack.c.l.b16 %v981
      %v999 = vpack.c.b16 %v998, %v997
      %v1002 = vsel %vm305, %v988, 0
      %v1005 = vsel %vm305, %v990, 0
      %v1008 = vsel %vm305, %v992, 0
      %v1011 = vsel %vm305, %v994, 0
      %v1014 = vsel %vm305, %v993, 0
      %1016 = vmatprep.subr.bf16.mxu0 0
      %1017 = vmatpush1.bf16.msra.mxu0 %v999
      %1018 = vmatprep.subr.bf16.mxu0 0
      %1019 = vmatpush1.bf16.msra.mxu0 0
      %1020 = vmatprep.subr.bf16.mxu0 0
      %1021 = vmatpush1.bf16.msra.mxu0 0
      %1022 = vmatprep.subr.bf16.mxu0 0
      %1023 = vmatpush1.bf16.msra.mxu0 0
      %1024 = vmatprep.subr.bf16.mxu0 0
      %1025 = vmatpush1.bf16.msra.mxu0 0
      %1026 = vmatprep.subr.bf16.mxu0 0
      %1027 = vmatpush1.bf16.msra.mxu0 0
      %1028 = vmatprep.subr.bf16.mxu0 0
      %1029 = vmatpush1.bf16.msra.mxu0 0
      %1030 = vmatprep.subr.bf16.mxu0 0
      %1031 = vmatpush1.bf16.msra.mxu0 0
      %1032 = vmatprep.subr.bf16.mxu0 0
      %1033 = vmatpush1.bf16.msra.mxu0 0
      %1034 = vmatprep.subr.bf16.mxu0 0
      %1035 = vmatpush1.bf16.msra.mxu0 0
      %1036 = vmatprep.subr.bf16.mxu0 0
      %1037 = vmatpush1.bf16.msra.mxu0 0
      %1038 = vmatprep.subr.bf16.mxu0 0
      %1039 = vmatpush1.bf16.msra.mxu0 0
      %1040 = vmatprep.subr.bf16.mxu0 0
      %1041 = vmatpush1.bf16.msra.mxu0 0
      %1042 = vmatprep.subr.bf16.mxu0 0
      %1043 = vmatpush1.bf16.msra.mxu0 0
      %1044 = vmatprep.subr.bf16.mxu0 0
      %1045 = vmatpush1.bf16.msra.mxu0 0
      %1046 = vmatprep.subr.bf16.mxu0 0
      %1047 = vmatpush1.bf16.msra.mxu0 0
      %1048 = vmatprep.mubr.bf16.mxu0 0
      %1049 = vmatmul.mubr.bf16.gmra.mrb[0].mxu0 %v1002
      %v1050 = vpop.f32.mrb[0].mxu0
      %v1051 = vadd.f32 0.0, %v1050
      %v1052 = vpop.f32.mrb[0].mxu0
      %v1053 = vpop.f32.mrb[0].mxu0
      %v1054 = vadd.f32 0.0, %v1053
      %v1055 = vpop.f32.mrb[0].mxu0
      %1056 = vmatprep.mubr.bf16.mxu0 0
      %1057 = vmatmul.mubr.bf16.gmra.mrb[0].mxu0 %v1005
      %v1058 = vpop.f32.mrb[0].mxu0
      %v1059 = vadd.f32 0.0, %v1058
      %v1060 = vpop.f32.mrb[0].mxu0
      %v1061 = vpop.f32.mrb[0].mxu0
      %v1062 = vadd.f32 0.0, %v1061
      %v1063 = vpop.f32.mrb[0].mxu0
      %1064 = vmatprep.mubr.bf16.mxu0 0
      %1065 = vmatmul.mubr.bf16.gmra.mrb[0].mxu0 %v1008
      %v1066 = vpop.f32.mrb[0].mxu0
      %v1067 = vadd.f32 0.0, %v1066
      %v1068 = vpop.f32.mrb[0].mxu0
      %v1069 = vpop.f32.mrb[0].mxu0
      %v1070 = vadd.f32 0.0, %v1069
      %v1071 = vpop.f32.mrb[0].mxu0
      %1072 = vmatprep.mubr.bf16.mxu0 0
      %1073 = vmatmul.mubr.bf16.gmra.mrb[0].mxu0 %v1011
      %v1074 = vpop.f32.mrb[0].mxu0
      %v1075 = vadd.f32 0.0, %v1074
      %v1076 = vpop.f32.mrb[0].mxu0
      %v1077 = vpop.f32.mrb[0].mxu0
      %v1078 = vadd.f32 0.0, %v1077
      %v1079 = vpop.f32.mrb[0].mxu0
      %1080 = vmatprep.mubr.bf16.mxu0 0
      %1081 = vmatmul.mubr.bf16.gmra.mrb[0].mxu0 %v1014
      %v1082 = vpop.f32.mrb[0].mxu0
      %v1083 = vadd.f32 0.0, %v1082
      %v1084 = vpop.f32.mrb[0].mxu0
      %v1085 = vpop.f32.mrb[0].mxu0
      %v1086 = vpop.f32.mrb[0].mxu0
      %1087 = vdwg.mxu0
      %v1088 = vadd.f32 %v969, %v1051
      %v1089 = vadd.f32 %v970, %v1054
      %v1090 = vadd.f32 %v971, %v1059
      %v1091 = vadd.f32 %v972, %v1062
      %v1092 = vadd.f32 %v973, %v1067
      %v1093 = vadd.f32 %v974, %v1070
      %v1094 = vadd.f32 %v975, %v1075
      %v1095 = vadd.f32 %v976, %v1078
      %v1096 = vadd.f32 %v977, %v1083
      %v1097 = vld [vmem:[%s3] sm:$0x1]
      %v1099 = vlaneseq
      %v1100 = vshrl.u32 %v1099, 7
      %v1101 = vsub.s32 0, %v1100
      %v1102 = vrot.slane %v1097, %v1101
      %v1104 = vadd.f32 %v1088, %v1102
      %v1105 = vadd.f32 %v1089, %v1102
      %v1106 = vadd.f32 %v1090, %v1102
      %v1107 = vadd.f32 %v1091, %v1102
      %v1108 = vadd.f32 %v1092, %v1102
      %v1109 = vadd.f32 %v1093, %v1102
      %v1110 = vadd.f32 %v1094, %v1102
      %v1111 = vadd.f32 %v1095, %v1102
      %v1112 = vadd.f32 %v1096, %v1102
      %v1113 = vmax.f32 %v1104, 0.0
      %v1114 = vmax.f32 %v1105, 0.0
      %v1115 = vmax.f32 %v1106, 0.0
      %v1116 = vmax.f32 %v1107, 0.0
      %v1117 = vmax.f32 %v1108, 0.0
      %v1118 = vmax.f32 %v1109, 0.0
      %v1119 = vmax.f32 %v1110, 0.0
      %v1120 = vmax.f32 %v1111, 0.0
      %v1121 = vmax.f32 %v1112, 0.0
      %v1122 = vpack.c.bf16 %v1114, %v1113
      %v1123 = vpack.c.bf16 %v1116, %v1115
      %v1124 = vpack.c.bf16 %v1118, %v1117
      %v1125 = vpack.c.bf16 %v1120, %v1119
      %v1126 = vpack.c.bf16 %v1121, %v1121
      %v1132 = vunpack.c.l.b16 %v1122
      %v1133 = vunpack.c.h.b16 %v1122
      %v1134 = vunpack.c.l.b16 %v1123
      %v1135 = vunpack.c.h.b16 %v1123
      %v1136 = vunpack.c.l.b16 %v1124
      %v1137 = vunpack.c.h.b16 %v1124
      %v1138 = vunpack.c.l.b16 %v1125
      %v1139 = vunpack.c.h.b16 %v1125
      %v1140 = vunpack.c.l.b16 %v1126
      %v1141 = vpack.c.b16 %v1132, %v1132
      %v1142 = vpack.c.b16 %v1133, %v1133
      %v1143 = vpack.c.b16 %v1134, %v1134
      %v1144 = vpack.c.b16 %v1135, %v1135
      %v1145 = vpack.c.b16 %v1136, %v1136
      %v1146 = vpack.c.b16 %v1137, %v1137
      %v1147 = vpack.c.b16 %v1138, %v1138
      %v1148 = vpack.c.b16 %v1139, %v1139
      %v1149 = vpack.c.b16 %v1140, %v1140
      %1159 = vst [vmem:[%s217] sm:$0xf] %v1141
      %1160 = vst [vmem:[%s217 + $0x4] sm:$0xf] %v1142
      %1161 = vst [vmem:[%s217 + $0x8] sm:$0xf] %v1143
      %1162 = vst [vmem:[%s217 + $0xc] sm:$0xf] %v1144
      %1163 = vst [vmem:[%s217 + $0x10] sm:$0xf] %v1145
      %1164 = vst [vmem:[%s217 + $0x14] sm:$0xf] %v1146
      %1165 = vst [vmem:[%s217 + $0x18] sm:$0xf] %v1147
      %1166 = vst [vmem:[%s217 + $0x1c] sm:$0xf] %v1148
      %1167 = vst [vmem:[%s217 + $0x20] sm:$0xf] %v1149
      %p1168 = scmp.lt.s32.totalorder %s15, 1
      %s1169 = scalar_select %p1168, %s15, 1
      %s1170 = smul.addr %s1169, 9
      %s1171 = smul.addr %s1170, 4
      %s1172 = scalar_lea.vmem %s4, %s1171
      // Predicated region
      $region37: #{cnn_encoder_forward.4} parent=35 // pred_check
        %p1173 = pneg %p127
      $region38: #{cnn_encoder_forward.4} parent=35 // pred_check_branch
        %1175 = sbr.rel (%p1173) target = $region40
      $region39: #{cnn_encoder_forward.4} parent=35 // pred_region
        _
      $region40: #{cnn_encoder_forward.4} parent=35 // pred_fallthru
        _
    $region36: #{cnn_encoder_forward.4} parent=5 // pred_fallthru
      _
    %p1176 = scmp.le.s32.totalorder 2, %s10
    // Predicated region
    $region41: #{cnn_encoder_forward.4} parent=5 // pred_check
      %p1177 = pneg %p1176
    $region42: #{cnn_encoder_forward.4} parent=5 // pred_check_branch
      %1179 = sbr.rel (%p1177) target = $region44
    $region43: #{cnn_encoder_forward.4} parent=5 // pred_region
      %s1180 = ssub.s32 %s10, 2
      // Predicated region
      $region45: #{cnn_encoder_forward.4} parent=43 // pred_check
        %p1181 = pneg %p133
      $region46: #{cnn_encoder_forward.4} parent=43 // pred_check_branch
        %1183 = sbr.rel (%p1181) target = $region48
      $region47: #{cnn_encoder_forward.4} parent=43 // pred_region
        %p1184 = scmp.lt.s32.totalorder %s16, 1
        %s1185 = scalar_select %p1184, %s16, 1
        %s1186 = smul.addr %s1185, 9
        %s1187 = smul.addr %s1186, 4
        %s1188 = scalar_lea.vmem %s4, %s1187
      $region48: #{cnn_encoder_forward.4} parent=43 // pred_fallthru
        _
    $region44: #{cnn_encoder_forward.4} parent=5 // pred_fallthru
      _
  $region6: #{cnn_encoder_forward.4} parent=0 // loop_footer
    %s14 = sadd.s32 1, %s10
  $region7: #{cnn_encoder_forward.4} parent=0 // loop_footer_branch
    %9 = sbr.rel target = $region3
  $region8: #{cnn_encoder_forward.4} parent=0 // loop_exit
    _

// kernel: cnn_encoder_forward.5
$region0: #{cnn_encoder_forward.5}
  #allocation0 [shape = 'u32[]', space=smem, size = 0x4, offset = 0x4, fixed_abs, tag = 'smem constant byte address 0x4 - core index']
  #allocation1 [shape = 'u32[144,128]{1,0:T(1,128)}', space=vmem, size = 0x12000, scoped, tag = 'internal scratch']
  %s0 = inlined_call_operand.vmem [shape: bf16[2,30,64], index: 0, kind: input, shape index: {}]
  %s1 = inlined_call_operand.vmem [shape: bf16[2,30,64], index: 1, kind: input, shape index: {}]
  %s2 = inlined_call_operand.vmem [shape: bf16[6,64,128], index: 2, kind: input, shape index: {}]
  %s3 = inlined_call_operand.vmem [shape: f32[1,128], index: 3, kind: input, shape index: {}]
  %s4 = inlined_call_operand.vmem [shape: bf16[2,20,128], index: 4, kind: output, shape index: {}]
  %s5 = sld [smem:[#allocation0]]
  $region49: #{cnn_encoder_forward.5} parent=0
    _
  %s7 = ssub.s32 1, %s5
  %s8 = scalar_select 0, %s7, %s5
  loop: start=0, step=1, limit=4
  $region2: #{cnn_encoder_forward.5} parent=0 // loop_pre_header
    _
  $region3: #{cnn_encoder_forward.5} parent=0 // loop_header
    %s10 = sphi 0, %s14
    %p11 = scmp.ge.s32.totalorder %s10, 4
    %s20 = sphi 0, %s22
    %s23 = sphi 0, %s20
    %s24 = sphi 0, %s23
    %s40 = sphi 0, %s24
    %s46 = sphi 0, %s48
    %s49 = sphi 0, %s46
    %s50 = sphi 0, %s49
    %s66 = sphi 0, %s50
    %s70 = sphi 0, %s70
    %s72 = sphi 0, %s70
    %s73 = sphi 0, %s72
    %s87 = sphi 0, %s73
    %s91 = sphi 0, %s91
    %s93 = sphi 0, %s91
    %s94 = sphi 0, %s93
    %s108 = sphi 0, %s94
    %s114 = sphi 0, %s116
    %s117 = sphi 0, %s114
    %s118 = sphi 0, %s117
    %s134 = sphi 0, %s118
  $region4: #{cnn_encoder_forward.5} parent=0 // loop_header_branch
    %13 = sbr.rel (%p11) target = $region8
  $region5: #{cnn_encoder_forward.5} parent=0 // loop_body
    %s15 = ssub.s32 %s10, 1
    %s16 = ssub.s32 %s10, 2
    %s17 = sadd.s32 %s10, 1
    %s18 = ssub.s32 %s10, %s17
    %p19 = scmp.eq.s32.totalorder %s18, 0
    %s21 = sadd.s32 %s20, 1
    %s22 = scalar_select %p19, %s20, %s21
    %p25 = pneg %p19
    %p26 = scmp.eq.s32.totalorder %s10, 1
    %p27 = por %p25, %p26
    %p28 = scmp.ne.s32.totalorder %s20, %s23
    %p29 = scmp.eq.s32.totalorder %s10, 0
    %p30 = por %p28, %p29
    %p31 = scmp.ne.s32.totalorder %s20, %s23
    %p32 = scmp.eq.s32.totalorder %s15, 1
    %p33 = por %p31, %p32
    %p34 = scmp.ne.s32.totalorder %s23, %s24
    %p35 = scmp.eq.s32.totalorder %s15, 0
    %p36 = por %p34, %p35
    %p37 = scmp.ne.s32.totalorder %s23, %s24
    %p38 = scmp.eq.s32.totalorder %s16, 1
    %p39 = por %p37, %p38
    %p41 = scmp.ne.s32.totalorder %s24, %s40
    %p42 = scmp.eq.s32.totalorder %s16, 0
    %p43 = por %p41, %p42
    %s44 = ssub.s32 %s10, %s17
    %p45 = scmp.eq.s32.totalorder %s44, 0
    %s47 = sadd.s32 %s46, 1
    %s48 = scalar_select %p45, %s46, %s47
    %p51 = pneg %p45
    %p52 = scmp.eq.s32.totalorder %s10, 1
    %p53 = por %p51, %p52
    %p54 = scmp.ne.s32.totalorder %s46, %s49
    %p55 = scmp.eq.s32.totalorder %s10, 0
    %p56 = por %p54, %p55
    %p57 = scmp.ne.s32.totalorder %s46, %s49
    %p58 = scmp.eq.s32.totalorder %s15, 1
    %p59 = por %p57, %p58
    %p60 = scmp.ne.s32.totalorder %s49, %s50
    %p61 = scmp.eq.s32.totalorder %s15, 0
    %p62 = por %p60, %p61
    %p63 = scmp.ne.s32.totalorder %s49, %s50
    %p64 = scmp.eq.s32.totalorder %s16, 1
    %p65 = por %p63, %p64
    %p67 = scmp.ne.s32.totalorder %s50, %s66
    %p68 = scmp.eq.s32.totalorder %s16, 0
    %p69 = por %p67, %p68
    %s71 = sadd.s32 %s70, 1
    %p74 = scmp.eq.s32.totalorder %s10, 1
    %p75 = scmp.ne.s32.totalorder %s70, %s72
    %p76 = scmp.eq.s32.totalorder %s10, 0
    %p77 = por %p75, %p76
    %p78 = scmp.ne.s32.totalorder %s70, %s72
    %p79 = scmp.eq.s32.totalorder %s15, 1
    %p80 = por %p78, %p79
    %p81 = scmp.ne.s32.totalorder %s72, %s73
    %p82 = scmp.eq.s32.totalorder %s15, 0
    %p83 = por %p81, %p82
    %p84 = scmp.ne.s32.totalorder %s72, %s73
    %p85 = scmp.eq.s32.totalorder %s16, 1
    %p86 = por %p84, %p85
    %p88 = scmp.ne.s32.totalorder %s73, %s87
    %p89 = scmp.eq.s32.totalorder %s16, 0
    %p90 = por %p88, %p89
    %s92 = sadd.s32 %s91, 1
    %p95 = scmp.eq.s32.totalorder %s10, 1
    %p96 = scmp.ne.s32.totalorder %s91, %s93
    %p97 = scmp.eq.s32.totalorder %s10, 0
    %p98 = por %p96, %p97
    %p99 = scmp.ne.s32.totalorder %s91, %s93
    %p100 = scmp.eq.s32.totalorder %s15, 1
    %p101 = por %p99, %p100
    %p102 = scmp.ne.s32.totalorder %s93, %s94
    %p103 = scmp.eq.s32.totalorder %s15, 0
    %p104 = por %p102, %p103
    %p105 = scmp.ne.s32.totalorder %s93, %s94
    %p106 = scmp.eq.s32.totalorder %s16, 1
    %p107 = por %p105, %p106
    %p109 = scmp.ne.s32.totalorder %s94, %s108
    %p110 = scmp.eq.s32.totalorder %s16, 0
    %p111 = por %p109, %p110
    %s112 = ssub.s32 %s10, %s17
    %p113 = scmp.eq.s32.totalorder %s112, 0
    %s115 = sadd.s32 %s114, 1
    %s116 = scalar_select %p113, %s114, %s115
    %p119 = pneg %p113
    %p120 = scmp.eq.s32.totalorder %s10, 1
    %p121 = por %p119, %p120
    %p122 = scmp.ne.s32.totalorder %s114, %s117
    %p123 = scmp.eq.s32.totalorder %s10, 0
    %p124 = por %p122, %p123
    %p125 = scmp.ne.s32.totalorder %s114, %s117
    %p126 = scmp.eq.s32.totalorder %s15, 1
    %p127 = por %p125, %p126
    %p128 = scmp.ne.s32.totalorder %s117, %s118
    %p129 = scmp.eq.s32.totalorder %s15, 0
    %p130 = por %p128, %p129
    %p131 = scmp.ne.s32.totalorder %s117, %s118
    %p132 = scmp.eq.s32.totalorder %s16, 1
    %p133 = por %p131, %p132
    %p135 = scmp.ne.s32.totalorder %s118, %s134
    %p136 = scmp.eq.s32.totalorder %s16, 0
    %p137 = por %p135, %p136
    %p138 = scmp.le.s32.totalorder 1, %s10
    %p139 = scmp.lt.s32.totalorder %s10, 3
    %p140 = pnand %p138, %p139
    %p141 = pneg %p140
    // Predicated region
    $region9: #{cnn_encoder_forward.5} parent=5 // pred_check
      _
    $region10: #{cnn_encoder_forward.5} parent=5 // pred_check_branch
      %143 = sbr.rel (%p140) target = $region12
    $region11: #{cnn_encoder_forward.5} parent=5 // pred_region
      %s144 = ssub.s32 %s10, 1
      // Predicated region
      $region13: #{cnn_encoder_forward.5} parent=11 // pred_check
        %p145 = pneg %p83
      $region14: #{cnn_encoder_forward.5} parent=11 // pred_check_branch
        %147 = sbr.rel (%p145) target = $region16
      $region15: #{cnn_encoder_forward.5} parent=11 // pred_region
        _
      $region16: #{cnn_encoder_forward.5} parent=11 // pred_fallthru
        _
      // Predicated region
      $region17: #{cnn_encoder_forward.5} parent=11 // pred_check
        %p148 = pneg %p104
      $region18: #{cnn_encoder_forward.5} parent=11 // pred_check_branch
        %150 = sbr.rel (%p148) target = $region20
      $region19: #{cnn_encoder_forward.5} parent=11 // pred_region
        _
      $region20: #{cnn_encoder_forward.5} parent=11 // pred_fallthru
        _
    $region12: #{cnn_encoder_forward.5} parent=5 // pred_fallthru
      _
    %p151 = scmp.lt.s32.totalorder %s10, 2
    // Predicated region
    $region21: #{cnn_encoder_forward.5} parent=5 // pred_check
      %p152 = pneg %p151
    $region22: #{cnn_encoder_forward.5} parent=5 // pred_check_branch
      %154 = sbr.rel (%p152) target = $region24
    $region23: #{cnn_encoder_forward.5} parent=5 // pred_region
      // Predicated region
      $region25: #{cnn_encoder_forward.5} parent=23 // pred_check
        %p155 = pneg %p30
      $region26: #{cnn_encoder_forward.5} parent=23 // pred_check_branch
        %157 = sbr.rel (%p155) target = $region28
      $region27: #{cnn_encoder_forward.5} parent=23 // pred_region
        %p158 = scmp.lt.s32.totalorder %s10, 1
        %s159 = scalar_select %p158, %s10, 1
        %s160 = smul.addr %s159, 4
        %s161 = smul.addr %s160, 4
        %s162 = scalar_lea.vmem %s0, %s161
      $region28: #{cnn_encoder_forward.5} parent=23 // pred_fallthru
        _
      // Predicated region
      $region29: #{cnn_encoder_forward.5} parent=23 // pred_check
        %p163 = pneg %p56
      $region30: #{cnn_encoder_forward.5} parent=23 // pred_check_branch
        %165 = sbr.rel (%p163) target = $region32
      $region31: #{cnn_encoder_forward.5} parent=23 // pred_region
        %p166 = scmp.lt.s32.totalorder %s10, 1
        %s167 = scalar_select %p166, %s10, 1
        %s168 = smul.addr %s167, 4
        %s169 = smul.addr %s168, 4
        %s170 = scalar_lea.vmem %s1, %s169
      $region32: #{cnn_encoder_forward.5} parent=23 // pred_fallthru
        _
    $region24: #{cnn_encoder_forward.5} parent=5 // pred_fallthru
      _
    %p171 = scmp.le.s32.totalorder 1, %s10
    %p172 = scmp.lt.s32.totalorder %s10, 3
    %p173 = pnand %p171, %p172
    %p174 = pneg %p173
    // Predicated region
    $region33: #{cnn_encoder_forward.5} parent=5 // pred_check
      _
    $region34: #{cnn_encoder_forward.5} parent=5 // pred_check_branch
      %176 = sbr.rel (%p173) target = $region36
    $region35: #{cnn_encoder_forward.5} parent=5 // pred_region
      %s177 = ssub.s32 %s10, 1
      %p178 = scmp.lt.s32.totalorder %s15, 1
      %s179 = scalar_select %p178, %s15, 1
      %s180 = smul.addr %s179, 4
      %s181 = smul.addr %s180, 4
      %s182 = scalar_lea.vmem %s0, %s181
      %p183 = pneg %p36
      %p184 = pneg %p33
      %p185 = scmp.lt.s32.totalorder %s15, 1
      %s186 = scalar_select %p185, %s15, 1
      %s187 = smul.addr %s186, 4
      %s188 = smul.addr %s187, 4
      %s189 = scalar_lea.vmem %s1, %s188
      %p190 = pneg %p62
      %p191 = pneg %p59
      %p192 = pneg %p83
      %p193 = pneg %p80
      %p194 = pneg %p104
      %p195 = pneg %p101
      %p196 = pneg %p130
      %p197 = pneg %p127
      %p198 = scmp.lt.s32.totalorder %s15, 1
      %s199 = scalar_select %p198, %s15, 1
      %s200 = smul.addr %s199, 3
      %s201 = smul.addr %s200, 4
      %s202 = scalar_lea.vmem %s4, %s201
      %p203 = scmp.lt.s32.totalorder %s15, 1
      %s204 = scalar_select %p203, %s15, 1
      %s205 = smul.addr %s204, 4
      %s206 = smul.addr %s205, 4
      %s207 = scalar_lea.vmem %s0, %s206
      %p208 = scmp.lt.s32.totalorder %s15, 1
      %s209 = scalar_select %p208, %s15, 1
      %s210 = smul.addr %s209, 4
      %s211 = smul.addr %s210, 4
      %s212 = scalar_lea.vmem %s1, %s211
      %p213 = scmp.lt.s32.totalorder %s15, 1
      %s214 = scalar_select %p213, %s15, 1
      %s215 = smul.addr %s214, 3
      %s216 = smul.addr %s215, 4
      %s217 = scalar_lea.vmem %s4, %s216
      %v219 = vld [vmem:[%s207] sm:$0xf]
      %v220 = vld [vmem:[%s207 + $0x4] sm:$0xf]
      %v221 = vld [vmem:[%s207 + $0x8] sm:$0x3]
      %v222 = vld [vmem:[%s2] sm:$0xf]
      %v223 = vld [vmem:[%s2 + $0x4] sm:$0xf]
      %v224 = vld [vmem:[%s2 + $0x8] sm:$0xf]
      %v225 = vld [vmem:[%s2 + $0xc] sm:$0xf]
      %v226 = vld [vmem:[%s2 + $0x10] sm:$0xf]
      %v227 = vld [vmem:[%s2 + $0x14] sm:$0xf]
      %v228 = vld [vmem:[%s2 + $0x18] sm:$0xf]
      %v229 = vld [vmem:[%s2 + $0x1c] sm:$0xf]
      %v230 = vld [vmem:[%s207 + $0x8] sm:$0x7]
      %s231 = scalar_lea.vmem %s2, 32
      %v232 = vld [vmem:[%s231] sm:$0xf]
      %v233 = vld [vmem:[%s231 + $0x4] sm:$0xf]
      %v234 = vld [vmem:[%s231 + $0x8] sm:$0xf]
      %v235 = vld [vmem:[%s231 + $0xc] sm:$0xf]
      %v236 = vld [vmem:[%s231 + $0x10] sm:$0xf]
      %v237 = vld [vmem:[%s231 + $0x14] sm:$0xf]
      %v238 = vld [vmem:[%s231 + $0x18] sm:$0xf]
      %v239 = vld [vmem:[%s231 + $0x1c] sm:$0xf]
      %v243 = vunpack.c.l.b16 %v219
      %v244 = vunpack.c.l.b16 %v220
      %v245 = vunpack.c.l.b16 %v230
      %v246 = vpack.c.b16 %v244, %v243
      %v247 = vpack.c.b16 %v245, %v245
      %vm248 = vsmask.f32 7424
      %v250 = vshrl.u32 %v246, 16
      %v252 = vshll.u32 %v246, 16
      %v254 = vrot.slane %v252, 1
      %v255 = vor.u32 %v250, %v254
      %v257 = vshll.u32 %v247, 16
      %v259 = vrot.slane %v257, 1
      %v260 = vsel %vm248, %v255, %v259
      %v261 = vshrl.u32 %v247, 16
      %v263 = vor.u32 %v261, %v259
      %v272 = vunpack.c.l.b16 %v232
      %v273 = vunpack.c.l.b16 %v233
      %v274 = vunpack.c.l.b16 %v234
      %v275 = vunpack.c.l.b16 %v235
      %v276 = vunpack.c.l.b16 %v236
      %v277 = vunpack.c.l.b16 %v237
      %v278 = vunpack.c.l.b16 %v238
      %v279 = vunpack.c.l.b16 %v239
      %v280 = vpack.c.b16 %v273, %v272
      %v281 = vpack.c.b16 %v275, %v274
      %v282 = vpack.c.b16 %v277, %v276
      %v283 = vpack.c.b16 %v279, %v278
      %vm288 = vcmask 523264
      %v290 = vsel %vm288, %v260, 0
      %v293 = vsel %vm288, %v263, 0
      %295 = vmatprep.subr.bf16.mxu0 0
      %296 = vmatpush1.bf16.msra.mxu0 %v280
      %297 = vmatprep.subr.bf16.mxu0 0
      %298 = vmatpush1.bf16.msra.mxu0 %v281
      %299 = vmatprep.subr.bf16.mxu0 0
      %300 = vmatpush1.bf16.msra.mxu0 %v282
      %301 = vmatprep.subr.bf16.mxu0 0
      %302 = vmatpush1.bf16.msra.mxu0 %v283
      %303 = vmatprep.subr.bf16.mxu0 0
      %304 = vmatpush1.bf16.msra.mxu0 0
      %305 = vmatprep.subr.bf16.mxu0 0
      %306 = vmatpush1.bf16.msra.mxu0 0
      %307 = vmatprep.subr.bf16.mxu0 0
      %308 = vmatpush1.bf16.msra.mxu0 0
      %309 = vmatprep.subr.bf16.mxu0 0
      %310 = vmatpush1.bf16.msra.mxu0 0
      %311 = vmatprep.subr.bf16.mxu0 0
      %312 = vmatpush1.bf16.msra.mxu0 0
      %313 = vmatprep.subr.bf16.mxu0 0
      %314 = vmatpush1.bf16.msra.mxu0 0
      %315 = vmatprep.subr.bf16.mxu0 0
      %316 = vmatpush1.bf16.msra.mxu0 0
      %317 = vmatprep.subr.bf16.mxu0 0
      %318 = vmatpush1.bf16.msra.mxu0 0
      %319 = vmatprep.subr.bf16.mxu0 0
      %320 = vmatpush1.bf16.msra.mxu0 0
      %321 = vmatprep.subr.bf16.mxu0 0
      %322 = vmatpush1.bf16.msra.mxu0 0
      %323 = vmatprep.subr.bf16.mxu0 0
      %324 = vmatpush1.bf16.msra.mxu0 0
      %325 = vmatprep.subr.bf16.mxu0 0
      %326 = vmatpush1.bf16.msra.mxu0 0
      %327 = vmatprep.mubr.bf16.mxu0 0
      %328 = vmatmul.mubr.bf16.gmra.mrb[0].mxu0 %v290
      %v329 = vpop.f32.mrb[0].mxu0
      %v330 = vadd.f32 0.0, %v329
      %v331 = vpop.f32.mrb[0].mxu0
      %v332 = vpop.f32.mrb[0].mxu0
      %v333 = vadd.f32 0.0, %v332
      %v334 = vpop.f32.mrb[0].mxu0
      %335 = vmatprep.mubr.bf16.mxu0 0
      %336 = vmatmul.mubr.bf16.gmra.mrb[0].mxu0 %v293
      %v337 = vpop.f32.mrb[0].mxu0
      %v338 = vadd.f32 0.0, %v337
      %v339 = vpop.f32.mrb[0].mxu0
      %v340 = vpop.f32.mrb[0].mxu0
      %v341 = vpop.f32.mrb[0].mxu0
      %342 = vdwg.mxu0
      %v344 = vunpack.c.l.b16 %v221
      %v345 = vpack.c.b16 %v344, %v344
      %v354 = vunpack.c.l.b16 %v222
      %v355 = vunpack.c.l.b16 %v223
      %v356 = vunpack.c.l.b16 %v224
      %v357 = vunpack.c.l.b16 %v225
      %v358 = vunpack.c.l.b16 %v226
      %v359 = vunpack.c.l.b16 %v227
      %v360 = vunpack.c.l.b16 %v228
      %v361 = vunpack.c.l.b16 %v229
      %v362 = vpack.c.b16 %v355, %v354
      %v363 = vpack.c.b16 %v357, %v356
      %v364 = vpack.c.b16 %v359, %v358
      %v365 = vpack.c.b16 %v361, %v360
      %v370 = vsel %vm288, %v246, 0
      %v373 = vsel %vm288, %v345, 0
      %375 = vmatprep.subr.bf16.mxu0 0
      %376 = vmatpush1.bf16.msra.mxu0 %v362
      %377 = vmatprep.subr.bf16.mxu0 0
      %378 = vmatpush1.bf16.msra.mxu0 %v363
      %379 = vmatprep.subr.bf16.mxu0 0
      %380 = vmatpush1.bf16.msra.mxu0 %v364
      %381 = vmatprep.subr.bf16.mxu0 0
      %382 = vmatpush1.bf16.msra.mxu0 %v365
      %383 = vmatprep.subr.bf16.mxu0 0
      %384 = vmatpush1.bf16.msra.mxu0 0
      %385 = vmatprep.subr.bf16.mxu0 0
      %386 = vmatpush1.bf16.msra.mxu0 0
      %387 = vmatprep.subr.bf16.mxu0 0
      %388 = vmatpush1.bf16.msra.mxu0 0
      %389 = vmatprep.subr.bf16.mxu0 0
      %390 = vmatpush1.bf16.msra.mxu0 0
      %391 = vmatprep.subr.bf16.mxu0 0
      %392 = vmatpush1.bf16.msra.mxu0 0
      %393 = vmatprep.subr.bf16.mxu0 0
      %394 = vmatpush1.bf16.msra.mxu0 0
      %395 = vmatprep.subr.bf16.mxu0 0
      %396 = vmatpush1.bf16.msra.mxu0 0
      %397 = vmatprep.subr.bf16.mxu0 0
      %398 = vmatpush1.bf16.msra.mxu0 0
      %399 = vmatprep.subr.bf16.mxu0 0
      %400 = vmatpush1.bf16.msra.mxu0 0
      %401 = vmatprep.subr.bf16.mxu0 0
      %402 = vmatpush1.bf16.msra.mxu0 0
      %403 = vmatprep.subr.bf16.mxu0 0
      %404 = vmatpush1.bf16.msra.mxu0 0
      %405 = vmatprep.subr.bf16.mxu0 0
      %406 = vmatpush1.bf16.msra.mxu0 0
      %407 = vmatprep.mubr.bf16.mxu0 0
      %408 = vmatmul.mubr.bf16.gmra.mrb[0].mxu0 %v370
      %v409 = vpop.f32.mrb[0].mxu0
      %v410 = vadd.f32 %v330, %v409
      %v411 = vpop.f32.mrb[0].mxu0
      %v412 = vpop.f32.mrb[0].mxu0
      %v413 = vadd.f32 %v333, %v412
      %v414 = vpop.f32.mrb[0].mxu0
      %415 = vmatprep.mubr.bf16.mxu0 0
      %416 = vmatmul.mubr.bf16.gmra.mrb[0].mxu0 %v373
      %v417 = vpop.f32.mrb[0].mxu0
      %v418 = vadd.f32 %v338, %v417
      %v419 = vpop.f32.mrb[0].mxu0
      %v420 = vpop.f32.mrb[0].mxu0
      %v421 = vpop.f32.mrb[0].mxu0
      %422 = vdwg.mxu0
      %v423 = vld [vmem:[%s212] sm:$0xf]
      %v424 = vld [vmem:[%s212 + $0x4] sm:$0xf]
      %v425 = vld [vmem:[%s212 + $0x8] sm:$0x3]
      %s426 = scalar_lea.vmem %s2, 64
      %v427 = vld [vmem:[%s426] sm:$0xf]
      %v428 = vld [vmem:[%s426 + $0x4] sm:$0xf]
      %v429 = vld [vmem:[%s426 + $0x8] sm:$0xf]
      %v430 = vld [vmem:[%s426 + $0xc] sm:$0xf]
      %v431 = vld [vmem:[%s426 + $0x10] sm:$0xf]
      %v432 = vld [vmem:[%s426 + $0x14] sm:$0xf]
      %v433 = vld [vmem:[%s426 + $0x18] sm:$0xf]
      %v434 = vld [vmem:[%s426 + $0x1c] sm:$0xf]
      %v438 = vunpack.c.l.b16 %v423
      %v439 = vunpack.c.l.b16 %v424
      %v440 = vunpack.c.l.b16 %v425
      %v441 = vpack.c.b16 %v439, %v438
      %v442 = vpack.c.b16 %v440, %v440
      %v451 = vunpack.c.l.b16 %v427
      %v452 = vunpack.c.l.b16 %v428
      %v453 = vunpack.c.l.b16 %v429
      %v454 = vunpack.c.l.b16 %v430
      %v455 = vunpack.c.l.b16 %v431
      %v456 = vunpack.c.l.b16 %v432
      %v457 = vunpack.c.l.b16 %v433
      %v458 = vunpack.c.l.b16 %v434
      %v459 = vpack.c.b16 %v452, %v451
      %v460 = vpack.c.b16 %v454, %v453
      %v461 = vpack.c.b16 %v456, %v455
      %v462 = vpack.c.b16 %v458, %v457
      %v468 = vsel %vm288, %v441, 0
      %v471 = vsel %vm288, %v442, 0
      %473 = vmatprep.subr.bf16.mxu0 0
      %474 = vmatpush1.bf16.msra.mxu0 %v459
      %475 = vmatprep.subr.bf16.mxu0 0
      %476 = vmatpush1.bf16.msra.mxu0 %v460
      %477 = vmatprep.subr.bf16.mxu0 0
      %478 = vmatpush1.bf16.msra.mxu0 %v461
      %479 = vmatprep.subr.bf16.mxu0 0
      %480 = vmatpush1.bf16.msra.mxu0 %v462
      %481 = vmatprep.subr.bf16.mxu0 0
      %482 = vmatpush1.bf16.msra.mxu0 0
      %483 = vmatprep.subr.bf16.mxu0 0
      %484 = vmatpush1.bf16.msra.mxu0 0
      %485 = vmatprep.subr.bf16.mxu0 0
      %486 = vmatpush1.bf16.msra.mxu0 0
      %487 = vmatprep.subr.bf16.mxu0 0
      %488 = vmatpush1.bf16.msra.mxu0 0
      %489 = vmatprep.subr.bf16.mxu0 0
      %490 = vmatpush1.bf16.msra.mxu0 0
      %491 = vmatprep.subr.bf16.mxu0 0
      %492 = vmatpush1.bf16.msra.mxu0 0
      %493 = vmatprep.subr.bf16.mxu0 0
      %494 = vmatpush1.bf16.msra.mxu0 0
      %495 = vmatprep.subr.bf16.mxu0 0
      %496 = vmatpush1.bf16.msra.mxu0 0
      %497 = vmatprep.subr.bf16.mxu0 0
      %498 = vmatpush1.bf16.msra.mxu0 0
      %499 = vmatprep.subr.bf16.mxu0 0
      %500 = vmatpush1.bf16.msra.mxu0 0
      %501 = vmatprep.subr.bf16.mxu0 0
      %502 = vmatpush1.bf16.msra.mxu0 0
      %503 = vmatprep.subr.bf16.mxu0 0
      %504 = vmatpush1.bf16.msra.mxu0 0
      %505 = vmatprep.mubr.bf16.mxu0 0
      %506 = vmatmul.mubr.bf16.gmra.mrb[0].mxu0 %v468
      %v507 = vpop.f32.mrb[0].mxu0
      %v508 = vadd.f32 0.0, %v507
      %v509 = vpop.f32.mrb[0].mxu0
      %v510 = vpop.f32.mrb[0].mxu0
      %v511 = vadd.f32 0.0, %v510
      %v512 = vpop.f32.mrb[0].mxu0
      %513 = vmatprep.mubr.bf16.mxu0 0
      %514 = vmatmul.mubr.bf16.gmra.mrb[0].mxu0 %v471
      %v515 = vpop.f32.mrb[0].mxu0
      %v516 = vadd.f32 0.0, %v515
      %v517 = vpop.f32.mrb[0].mxu0
      %v518 = vpop.f32.mrb[0].mxu0
      %v519 = vpop.f32.mrb[0].mxu0
      %520 = vdwg.mxu0
      %v521 = vadd.f32 %v410, %v508
      %v522 = vadd.f32 %v413, %v511
      %v523 = vadd.f32 %v418, %v516
      %v524 = vld [vmem:[%s212 + $0x8] sm:$0x7]
      %s525 = scalar_lea.vmem %s2, 96
      %v526 = vld [vmem:[%s525] sm:$0xf]
      %v527 = vld [vmem:[%s525 + $0x4] sm:$0xf]
      %v528 = vld [vmem:[%s525 + $0x8] sm:$0xf]
      %v529 = vld [vmem:[%s525 + $0xc] sm:$0xf]
      %v530 = vld [vmem:[%s525 + $0x10] sm:$0xf]
      %v531 = vld [vmem:[%s525 + $0x14] sm:$0xf]
      %v532 = vld [vmem:[%s525 + $0x18] sm:$0xf]
      %v533 = vld [vmem:[%s525 + $0x1c] sm:$0xf]
      %v535 = vunpack.c.l.b16 %v524
      %v536 = vpack.c.b16 %v535, %v535
      %v537 = vshrl.u32 %v441, 16
      %v539 = vshll.u32 %v441, 16
      %v541 = vrot.slane %v539, 1
      %v542 = vor.u32 %v537, %v541
      %v544 = vshll.u32 %v536, 16
      %v546 = vrot.slane %v544, 1
      %v547 = vsel %vm248, %v542, %v546
      %v548 = vshrl.u32 %v536, 16
      %v550 = vor.u32 %v548, %v546
      %v559 = vunpack.c.l.b16 %v526
      %v560 = vunpack.c.l.b16 %v527
      %v561 = vunpack.c.l.b16 %v528
      %v562 = vunpack.c.l.b16 %v529
      %v563 = vunpack.c.l.b16 %v530
      %v564 = vunpack.c.l.b16 %v531
      %v565 = vunpack.c.l.b16 %v532
      %v566 = vunpack.c.l.b16 %v533
      %v567 = vpack.c.b16 %v560, %v559
      %v568 = vpack.c.b16 %v562, %v561
      %v569 = vpack.c.b16 %v564, %v563
      %v570 = vpack.c.b16 %v566, %v565
      %v576 = vsel %vm288, %v547, 0
      %v579 = vsel %vm288, %v550, 0
      %581 = vmatprep.subr.bf16.mxu0 0
      %582 = vmatpush1.bf16.msra.mxu0 %v567
      %583 = vmatprep.subr.bf16.mxu0 0
      %584 = vmatpush1.bf16.msra.mxu0 %v568
      %585 = vmatprep.subr.bf16.mxu0 0
      %586 = vmatpush1.bf16.msra.mxu0 %v569
      %587 = vmatprep.subr.bf16.mxu0 0
      %588 = vmatpush1.bf16.msra.mxu0 %v570
      %589 = vmatprep.subr.bf16.mxu0 0
      %590 = vmatpush1.bf16.msra.mxu0 0
      %591 = vmatprep.subr.bf16.mxu0 0
      %592 = vmatpush1.bf16.msra.mxu0 0
      %593 = vmatprep.subr.bf16.mxu0 0
      %594 = vmatpush1.bf16.msra.mxu0 0
      %595 = vmatprep.subr.bf16.mxu0 0
      %596 = vmatpush1.bf16.msra.mxu0 0
      %597 = vmatprep.subr.bf16.mxu0 0
      %598 = vmatpush1.bf16.msra.mxu0 0
      %599 = vmatprep.subr.bf16.mxu0 0
      %600 = vmatpush1.bf16.msra.mxu0 0
      %601 = vmatprep.subr.bf16.mxu0 0
      %602 = vmatpush1.bf16.msra.mxu0 0
      %603 = vmatprep.subr.bf16.mxu0 0
      %604 = vmatpush1.bf16.msra.mxu0 0
      %605 = vmatprep.subr.bf16.mxu0 0
      %606 = vmatpush1.bf16.msra.mxu0 0
      %607 = vmatprep.subr.bf16.mxu0 0
      %608 = vmatpush1.bf16.msra.mxu0 0
      %609 = vmatprep.subr.bf16.mxu0 0
      %610 = vmatpush1.bf16.msra.mxu0 0
      %611 = vmatprep.subr.bf16.mxu0 0
      %612 = vmatpush1.bf16.msra.mxu0 0
      %613 = vmatprep.mubr.bf16.mxu0 0
      %614 = vmatmul.mubr.bf16.gmra.mrb[0].mxu0 %v576
      %v615 = vpop.f32.mrb[0].mxu0
      %v616 = vadd.f32 0.0, %v615
      %v617 = vpop.f32.mrb[0].mxu0
      %v618 = vpop.f32.mrb[0].mxu0
      %v619 = vadd.f32 0.0, %v618
      %v620 = vpop.f32.mrb[0].mxu0
      %621 = vmatprep.mubr.bf16.mxu0 0
      %622 = vmatmul.mubr.bf16.gmra.mrb[0].mxu0 %v579
      %v623 = vpop.f32.mrb[0].mxu0
      %v624 = vadd.f32 0.0, %v623
      %v625 = vpop.f32.mrb[0].mxu0
      %v626 = vpop.f32.mrb[0].mxu0
      %v627 = vpop.f32.mrb[0].mxu0
      %628 = vdwg.mxu0
      %v629 = vadd.f32 %v521, %v616
      %v630 = vadd.f32 %v522, %v619
      %v631 = vadd.f32 %v523, %v624
      %v632 = vld [vmem:[%s207] sm:$0xc]
      %v633 = vld [vmem:[%s207 + $0x4] sm:$0xf]
      %v634 = vld [vmem:[%s207 + $0x8] sm:$0xf]
      %v635 = vld [vmem:[%s207 + $0xc] sm:$0x1]
      %s636 = scalar_lea.vmem %s2, 128
      %v637 = vld [vmem:[%s636] sm:$0xf]
      %v638 = vld [vmem:[%s636 + $0x4] sm:$0xf]
      %v639 = vld [vmem:[%s636 + $0x8] sm:$0xf]
      %v640 = vld [vmem:[%s636 + $0xc] sm:$0xf]
      %v641 = vld [vmem:[%s636 + $0x10] sm:$0xf]
      %v642 = vld [vmem:[%s636 + $0x14] sm:$0xf]
      %v643 = vld [vmem:[%s636 + $0x18] sm:$0xf]
      %v644 = vld [vmem:[%s636 + $0x1c] sm:$0xf]
      %v649 = vunpack.c.l.b16 %v632
      %v650 = vunpack.c.l.b16 %v633
      %v651 = vunpack.c.l.b16 %v634
      %v652 = vunpack.c.l.b16 %v635
      %v653 = vpack.c.b16 %v650, %v649
      %v654 = vpack.c.b16 %v652, %v651
      %vm655 = vsmask.f32 5376
      %v657 = vshrl.u32 %v653, 16
      %v659 = vrot.slane %v657, 2
      %v660 = vshll.u32 %v653, 16
      %v662 = vrot.slane %v660, 3
      %v663 = vor.u32 %v659, %v662
      %v665 = vshrl.u32 %v654, 16
      %v667 = vrot.slane %v665, 2
      %v668 = vshll.u32 %v654, 16
      %v670 = vrot.slane %v668, 3
      %v671 = vor.u32 %v667, %v670
      %v672 = vsel %vm655, %v663, %v671
      %v681 = vunpack.c.l.b16 %v637
      %v682 = vunpack.c.l.b16 %v638
      %v683 = vunpack.c.l.b16 %v639
      %v684 = vunpack.c.l.b16 %v640
      %v685 = vunpack.c.l.b16 %v641
      %v686 = vunpack.c.l.b16 %v642
      %v687 = vunpack.c.l.b16 %v643
      %v688 = vunpack.c.l.b16 %v644
      %v689 = vpack.c.b16 %v682, %v681
      %v690 = vpack.c.b16 %v684, %v683
      %v691 = vpack.c.b16 %v686, %v685
      %v692 = vpack.c.b16 %v688, %v687
      %v698 = vsel %vm288, %v672, 0
      %v701 = vsel %vm288, %v671, 0
      %703 = vmatprep.subr.bf16.mxu0 0
      %704 = vmatpush1.bf16.msra.mxu0 %v689
      %705 = vmatprep.subr.bf16.mxu0 0
      %706 = vmatpush1.bf16.msra.mxu0 %v690
      %707 = vmatprep.subr.bf16.mxu0 0
      %708 = vmatpush1.bf16.msra.mxu0 %v691
      %709 = vmatprep.subr.bf16.mxu0 0
      %710 = vmatpush1.bf16.msra.mxu0 %v692
      %711 = vmatprep.subr.bf16.mxu0 0
      %712 = vmatpush1.bf16.msra.mxu0 0
      %713 = vmatprep.subr.bf16.mxu0 0
      %714 = vmatpush1.bf16.msra.mxu0 0
      %715 = vmatprep.subr.bf16.mxu0 0
      %716 = vmatpush1.bf16.msra.mxu0 0
      %717 = vmatprep.subr.bf16.mxu0 0
      %718 = vmatpush1.bf16.msra.mxu0 0
      %719 = vmatprep.subr.bf16.mxu0 0
      %720 = vmatpush1.bf16.msra.mxu0 0
      %721 = vmatprep.subr.bf16.mxu0 0
      %722 = vmatpush1.bf16.msra.mxu0 0
      %723 = vmatprep.subr.bf16.mxu0 0
      %724 = vmatpush1.bf16.msra.mxu0 0
      %725 = vmatprep.subr.bf16.mxu0 0
      %726 = vmatpush1.bf16.msra.mxu0 0
      %727 = vmatprep.subr.bf16.mxu0 0
      %728 = vmatpush1.bf16.msra.mxu0 0
      %729 = vmatprep.subr.bf16.mxu0 0
      %730 = vmatpush1.bf16.msra.mxu0 0
      %731 = vmatprep.subr.bf16.mxu0 0
      %732 = vmatpush1.bf16.msra.mxu0 0
      %733 = vmatprep.subr.bf16.mxu0 0
      %734 = vmatpush1.bf16.msra.mxu0 0
      %735 = vmatprep.mubr.bf16.mxu0 0
      %736 = vmatmul.mubr.bf16.gmra.mrb[0].mxu0 %v698
      %v737 = vpop.f32.mrb[0].mxu0
      %v738 = vadd.f32 0.0, %v737
      %v739 = vpop.f32.mrb[0].mxu0
      %v740 = vpop.f32.mrb[0].mxu0
      %v741 = vadd.f32 0.0, %v740
      %v742 = vpop.f32.mrb[0].mxu0
      %743 = vmatprep.mubr.bf16.mxu0 0
      %744 = vmatmul.mubr.bf16.gmra.mrb[0].mxu0 %v701
      %v745 = vpop.f32.mrb[0].mxu0
      %v746 = vadd.f32 0.0, %v745
      %v747 = vpop.f32.mrb[0].mxu0
      %v748 = vpop.f32.mrb[0].mxu0
      %v749 = vpop.f32.mrb[0].mxu0
      %750 = vdwg.mxu0
      %v751 = vadd.f32 %v629, %v738
      %v752 = vadd.f32 %v630, %v741
      %v753 = vadd.f32 %v631, %v746
      %v754 = vld [vmem:[%s207] sm:$0x8]
      %s755 = scalar_lea.vmem %s2, 160
      %v756 = vld [vmem:[%s755] sm:$0xf]
      %v757 = vld [vmem:[%s755 + $0x4] sm:$0xf]
      %v758 = vld [vmem:[%s755 + $0x8] sm:$0xf]
      %v759 = vld [vmem:[%s755 + $0xc] sm:$0xf]
      %v760 = vld [vmem:[%s755 + $0x10] sm:$0xf]
      %v761 = vld [vmem:[%s755 + $0x14] sm:$0xf]
      %v762 = vld [vmem:[%s755 + $0x18] sm:$0xf]
      %v763 = vld [vmem:[%s755 + $0x1c] sm:$0xf]
      %v765 = vunpack.c.l.b16 %v754
      %v766 = vpack.c.b16 %v650, %v765
      %vm767 = vcmask 1044480
      %v768 = vrot.slane %v766, 3
      %v769 = vrot.slane %v654, 3
      %v770 = vsel %vm767, %v768, %v769
      %v779 = vunpack.c.l.b16 %v756
      %v780 = vunpack.c.l.b16 %v757
      %v781 = vunpack.c.l.b16 %v758
      %v782 = vunpack.c.l.b16 %v759
      %v783 = vunpack.c.l.b16 %v760
      %v784 = vunpack.c.l.b16 %v761
      %v785 = vunpack.c.l.b16 %v762
      %v786 = vunpack.c.l.b16 %v763
      %v787 = vpack.c.b16 %v780, %v779
      %v788 = vpack.c.b16 %v782, %v781
      %v789 = vpack.c.b16 %v784, %v783
      %v790 = vpack.c.b16 %v786, %v785
      %v796 = vsel %vm288, %v770, 0
      %v799 = vsel %vm288, %v769, 0
      %801 = vmatprep.subr.bf16.mxu0 0
      %802 = vmatpush1.bf16.msra.mxu0 %v787
      %803 = vmatprep.subr.bf16.mxu0 0
      %804 = vmatpush1.bf16.msra.mxu0 %v788
      %805 = vmatprep.subr.bf16.mxu0 0
      %806 = vmatpush1.bf16.msra.mxu0 %v789
      %807 = vmatprep.subr.bf16.mxu0 0
      %808 = vmatpush1.bf16.msra.mxu0 %v790
      %809 = vmatprep.subr.bf16.mxu0 0
      %810 = vmatpush1.bf16.msra.mxu0 0
      %811 = vmatprep.subr.bf16.mxu0 0
      %812 = vmatpush1.bf16.msra.mxu0 0
      %813 = vmatprep.subr.bf16.mxu0 0
      %814 = vmatpush1.bf16.msra.mxu0 0
      %815 = vmatprep.subr.bf16.mxu0 0
      %816 = vmatpush1.bf16.msra.mxu0 0
      %817 = vmatprep.subr.bf16.mxu0 0
      %818 = vmatpush1.bf16.msra.mxu0 0
      %819 = vmatprep.subr.bf16.mxu0 0
      %820 = vmatpush1.bf16.msra.mxu0 0
      %821 = vmatprep.subr.bf16.mxu0 0
      %822 = vmatpush1.bf16.msra.mxu0 0
      %823 = vmatprep.subr.bf16.mxu0 0
      %824 = vmatpush1.bf16.msra.mxu0 0
      %825 = vmatprep.subr.bf16.mxu0 0
      %826 = vmatpush1.bf16.msra.mxu0 0
      %827 = vmatprep.subr.bf16.mxu0 0
      %828 = vmatpush1.bf16.msra.mxu0 0
      %829 = vmatprep.subr.bf16.mxu0 0
      %830 = vmatpush1.bf16.msra.mxu0 0
      %831 = vmatprep.subr.bf16.mxu0 0
      %832 = vmatpush1.bf16.msra.mxu0 0
      %833 = vmatprep.mubr.bf16.mxu0 0
      %834 = vmatmul.mubr.bf16.gmra.mrb[0].mxu0 %v796
      %v835 = vpop.f32.mrb[0].mxu0
      %v836 = vadd.f32 0.0, %v835
      %v837 = vpop.f32.mrb[0].mxu0
      %v838 = vpop.f32.mrb[0].mxu0
      %v839 = vadd.f32 0.0, %v838
      %v840 = vpop.f32.mrb[0].mxu0
      %841 = vmatprep.mubr.bf16.mxu0 0
      %842 = vmatmul.mubr.bf16.gmra.mrb[0].mxu0 %v799
      %v843 = vpop.f32.mrb[0].mxu0
      %v844 = vadd.f32 0.0, %v843
      %v845 = vpop.f32.mrb[0].mxu0
      %v846 = vpop.f32.mrb[0].mxu0
      %v847 = vpop.f32.mrb[0].mxu0
      %848 = vdwg.mxu0
      %v849 = vadd.f32 %v751, %v836
      %v850 = vadd.f32 %v752, %v839
      %v851 = vadd.f32 %v753, %v844
      %v852 = vld [vmem:[%s3] sm:$0x1]
      %v854 = vlaneseq
      %v855 = vshrl.u32 %v854, 7
      %v856 = vsub.s32 0, %v855
      %v857 = vrot.slane %v852, %v856
      %v859 = vadd.f32 %v849, %v857
      %v860 = vadd.f32 %v850, %v857
      %v861 = vadd.f32 %v851, %v857
      %v862 = vmax.f32 %v859, 0.0
      %v863 = vmax.f32 %v860, 0.0
      %v864 = vmax.f32 %v861, 0.0
      %v865 = vpack.c.bf16 %v863, %v862
      %v866 = vpack.c.bf16 %v864, %v864
      %v869 = vunpack.c.l.b16 %v865
      %v870 = vunpack.c.h.b16 %v865
      %v871 = vunpack.c.l.b16 %v866
      %v872 = vpack.c.b16 %v869, %v869
      %v873 = vpack.c.b16 %v870, %v870
      %v874 = vpack.c.b16 %v871, %v871
      %878 = vst [vmem:[%s217] sm:$0xf] %v872
      %879 = vst [vmem:[%s217 + $0x4] sm:$0xf] %v873
      %880 = vst [vmem:[%s217 + $0x8] sm:$0x3] %v874
      %p881 = scmp.lt.s32.totalorder %s15, 1
      %s882 = scalar_select %p881, %s15, 1
      %s883 = smul.addr %s882, 3
      %s884 = smul.addr %s883, 4
      %s885 = scalar_lea.vmem %s4, %s884
      // Predicated region
      $region37: #{cnn_encoder_forward.5} parent=35 // pred_check
        %p886 = pneg %p127
      $region38: #{cnn_encoder_forward.5} parent=35 // pred_check_branch
        %888 = sbr.rel (%p886) target = $region40
      $region39: #{cnn_encoder_forward.5} parent=35 // pred_region
        _
      $region40: #{cnn_encoder_forward.5} parent=35 // pred_fallthru
        _
    $region36: #{cnn_encoder_forward.5} parent=5 // pred_fallthru
      _
    %p889 = scmp.le.s32.totalorder 2, %s10
    // Predicated region
    $region41: #{cnn_encoder_forward.5} parent=5 // pred_check
      %p890 = pneg %p889
    $region42: #{cnn_encoder_forward.5} parent=5 // pred_check_branch
      %892 = sbr.rel (%p890) target = $region44
    $region43: #{cnn_encoder_forward.5} parent=5 // pred_region
      %s893 = ssub.s32 %s10, 2
      // Predicated region
      $region45: #{cnn_encoder_forward.5} parent=43 // pred_check
        %p894 = pneg %p133
      $region46: #{cnn_encoder_forward.5} parent=43 // pred_check_branch
        %896 = sbr.rel (%p894) target = $region48
      $region47: #{cnn_encoder_forward.5} parent=43 // pred_region
        %p897 = scmp.lt.s32.totalorder %s16, 1
        %s898 = scalar_select %p897, %s16, 1
        %s899 = smul.addr %s898, 3
        %s900 = smul.addr %s899, 4
        %s901 = scalar_lea.vmem %s4, %s900
      $region48: #{cnn_encoder_forward.5} parent=43 // pred_fallthru
        _
    $region44: #{cnn_encoder_forward.5} parent=5 // pred_fallthru
      _
  $region6: #{cnn_encoder_forward.5} parent=0 // loop_footer
    %s14 = sadd.s32 1, %s10
  $region7: #{cnn_encoder_forward.5} parent=0 // loop_footer_branch
    %9 = sbr.rel target = $region3
  $region8: #{cnn_encoder_forward.5} parent=0 // loop_exit
    _

// kernel: cnn_encoder_forward.7
$region0: #{cnn_encoder_forward.7}
  #allocation0 [shape = 'u32[]', space=smem, size = 0x4, offset = 0x4, fixed_abs, tag = 'smem constant byte address 0x4 - core index']
  #allocation1 [shape = 'u32[144,128]{1,0:T(1,128)}', space=vmem, size = 0x12000, scoped, tag = 'internal scratch']
  #allocation2 [shape = 'f32[2,128]{1,0:T(2,128)}', space=vmem, size = 0x400, scoped, tag = 'scratch operand']
  %s0 = inlined_call_operand.vmem [shape: bf16[2,768], index: 0, kind: input, shape index: {}]
  %s1 = inlined_call_operand.vmem [shape: bf16[768,128], index: 1, kind: input, shape index: {}]
  %s2 = inlined_call_operand.vmem [shape: f32[1,128], index: 2, kind: input, shape index: {}]
  %s3 = inlined_call_operand.hbm [shape: f32[2,128], index: 3, kind: output, shape index: {}]
  %s4 = sld [smem:[#allocation0]]
  $region30: #{cnn_encoder_forward.7} parent=0
    _
  %s6 = ssub.s32 1, %s4
  %s7 = scalar_select 0, %s6, %s4
  $region1: #{cnn_encoder_forward.7} parent=0
    #allocation3 [shape = 'u8[1024]{0}', space=vmem, size = 0x400, scoped, tag = 'output window, operand 0, single buffered']
    #allocation4 [shape = 's32[1]{0}', space=sflag, size = 0x4, scoped, tag = 'scoped memory for cnn_encoder_forward.7']
    %8 = vsyncpa [#allocation4], 0
    // Predicated region
    $region2: #{cnn_encoder_forward.7} parent=1 // pred_check
      _
    $region3: #{cnn_encoder_forward.7} parent=1 // pred_check_branch
      %10 = sbr.rel (0) target = $region5
    $region4: #{cnn_encoder_forward.7} parent=1 // pred_region
      _
    $region5: #{cnn_encoder_forward.7} parent=1 // pred_fallthru
      _
    // Predicated region
    $region6: #{cnn_encoder_forward.7} parent=1 // pred_check
      _
    $region7: #{cnn_encoder_forward.7} parent=1 // pred_check_branch
      %12 = sbr.rel (0) target = $region9
    $region8: #{cnn_encoder_forward.7} parent=1 // pred_region
      _
    $region9: #{cnn_encoder_forward.7} parent=1 // pred_fallthru
      _
    // Predicated region
    $region10: #{cnn_encoder_forward.7} parent=1 // pred_check
      _
    $region11: #{cnn_encoder_forward.7} parent=1 // pred_check_branch
      %14 = sbr.rel (0) target = $region13
    $region12: #{cnn_encoder_forward.7} parent=1 // pred_region
      _
    $region13: #{cnn_encoder_forward.7} parent=1 // pred_fallthru
      _
    %p16 = scmp.eq.s32.totalorder 0, 0
    // Predicated region
    $region14: #{cnn_encoder_forward.7} parent=1 // pred_check
      %p17 = pneg %p16
    $region15: #{cnn_encoder_forward.7} parent=1 // pred_check_branch
      %19 = sbr.rel (%p17) target = $region17
    $region16: #{cnn_encoder_forward.7} parent=1 // pred_region
      %20 = vst [vmem:[#allocation2] sm:$0x3] 0.0
    $region17: #{cnn_encoder_forward.7} parent=1 // pred_fallthru
      _
    %v21 = vld [vmem:[#allocation2] sm:$0x3]
    %v22 = vld [vmem:[%s0] sm:$0x3f]
    %v23 = vld [vmem:[%s1] sm:$0xf]
    %v24 = vld [vmem:[%s1 + $0x4] sm:$0xf]
    %v25 = vld [vmem:[%s1 + $0x8] sm:$0xf]
    %v26 = vld [vmem:[%s1 + $0xc] sm:$0xf]
    %v27 = vld [vmem:[%s1 + $0x10] sm:$0xf]
    %v28 = vld [vmem:[%s1 + $0x14] sm:$0xf]
    %v29 = vld [vmem:[%s1 + $0x18] sm:$0xf]
    %v30 = vld [vmem:[%s1 + $0x1c] sm:$0xf]
    %v31 = vld [vmem:[%s1 + $0x20] sm:$0xf]
    %v32 = vld [vmem:[%s1 + $0x24] sm:$0xf]
    %v33 = vld [vmem:[%s1 + $0x28] sm:$0xf]
    %v34 = vld [vmem:[%s1 + $0x2c] sm:$0xf]
    %v35 = vld [vmem:[%s1 + $0x30] sm:$0xf]
    %v36 = vld [vmem:[%s1 + $0x34] sm:$0xf]
    %v37 = vld [vmem:[%s1 + $0x38] sm:$0xf]
    %v38 = vld [vmem:[%s1 + $0x3c] sm:$0xf]
    %v39 = vld [vmem:[%s1 + $0x40] sm:$0xf]
    %v40 = vld [vmem:[%s1 + $0x44] sm:$0xf]
    %v41 = vld [vmem:[%s1 + $0x48] sm:$0xf]
    %v42 = vld [vmem:[%s1 + $0x4c] sm:$0xf]
    %v43 = vld [vmem:[%s1 + $0x50] sm:$0xf]
    %v44 = vld [vmem:[%s1 + $0x54] sm:$0xf]
    %v45 = vld [vmem:[%s1 + $0x58] sm:$0xf]
    %v46 = vld [vmem:[%s1 + $0x5c] sm:$0xf]
    %v47 = vld [vmem:[%s1 + $0x60] sm:$0xf]
    %v48 = vld [vmem:[%s1 + $0x64] sm:$0xf]
    %v49 = vld [vmem:[%s1 + $0x68] sm:$0xf]
    %v50 = vld [vmem:[%s1 + $0x6c] sm:$0xf]
    %v51 = vld [vmem:[%s1 + $0x70] sm:$0xf]
    %v52 = vld [vmem:[%s1 + $0x74] sm:$0xf]
    %v53 = vld [vmem:[%s1 + $0x78] sm:$0xf]
    %v54 = vld [vmem:[%s1 + $0x7c] sm:$0xf]
    %v55 = vld [vmem:[%s1 + $0x80] sm:$0xf]
    %v56 = vld [vmem:[%s1 + $0x84] sm:$0xf]
    %v57 = vld [vmem:[%s1 + $0x88] sm:$0xf]
    %v58 = vld [vmem:[%s1 + $0x8c] sm:$0xf]
    %v59 = vld [vmem:[%s1 + $0x90] sm:$0xf]
    %v60 = vld [vmem:[%s1 + $0x94] sm:$0xf]
    %v61 = vld [vmem:[%s1 + $0x98] sm:$0xf]
    %v62 = vld [vmem:[%s1 + $0x9c] sm:$0xf]
    %v63 = vld [vmem:[%s1 + $0xa0] sm:$0xf]
    %v64 = vld [vmem:[%s1 + $0xa4] sm:$0xf]
    %v65 = vld [vmem:[%s1 + $0xa8] sm:$0xf]
    %v66 = vld [vmem:[%s1 + $0xac] sm:$0xf]
    %v67 = vld [vmem:[%s1 + $0xb0] sm:$0xf]
    %v68 = vld [vmem:[%s1 + $0xb4] sm:$0xf]
    %v69 = vld [vmem:[%s1 + $0xb8] sm:$0xf]
    %v70 = vld [vmem:[%s1 + $0xbc] sm:$0xf]
    %v71 = vld [vmem:[%s1 + $0xc0] sm:$0xf]
    %v72 = vld [vmem:[%s1 + $0xc4] sm:$0xf]
    %v73 = vld [vmem:[%s1 + $0xc8] sm:$0xf]
    %v74 = vld [vmem:[%s1 + $0xcc] sm:$0xf]
    %v75 = vld [vmem:[%s1 + $0xd0] sm:$0xf]
    %v76 = vld [vmem:[%s1 + $0xd4] sm:$0xf]
    %v77 = vld [vmem:[%s1 + $0xd8] sm:$0xf]
    %v78 = vld [vmem:[%s1 + $0xdc] sm:$0xf]
    %v79 = vld [vmem:[%s1 + $0xe0] sm:$0xf]
    %v80 = vld [vmem:[%s1 + $0xe4] sm:$0xf]
    %v81 = vld [vmem:[%s1 + $0xe8] sm:$0xf]
    %v82 = vld [vmem:[%s1 + $0xec] sm:$0xf]
    %v83 = vld [vmem:[%s1 + $0xf0] sm:$0xf]
    %v84 = vld [vmem:[%s1 + $0xf4] sm:$0xf]
    %v85 = vld [vmem:[%s1 + $0xf8] sm:$0xf]
    %v86 = vld [vmem:[%s1 + $0xfc] sm:$0xf]
    %v87 = vld [vmem:[%s1 + $0x100] sm:$0xf]
    %v88 = vld [vmem:[%s1 + $0x104] sm:$0xf]
    %v89 = vld [vmem:[%s1 + $0x108] sm:$0xf]
    %v90 = vld [vmem:[%s1 + $0x10c] sm:$0xf]
    %v91 = vld [vmem:[%s1 + $0x110] sm:$0xf]
    %v92 = vld [vmem:[%s1 + $0x114] sm:$0xf]
    %v93 = vld [vmem:[%s1 + $0x118] sm:$0xf]
    %v94 = vld [vmem:[%s1 + $0x11c] sm:$0xf]
    %v95 = vld [vmem:[%s1 + $0x120] sm:$0xf]
    %v96 = vld [vmem:[%s1 + $0x124] sm:$0xf]
    %v97 = vld [vmem:[%s1 + $0x128] sm:$0xf]
    %v98 = vld [vmem:[%s1 + $0x12c] sm:$0xf]
    %v99 = vld [vmem:[%s1 + $0x130] sm:$0xf]
    %v100 = vld [vmem:[%s1 + $0x134] sm:$0xf]
    %v101 = vld [vmem:[%s1 + $0x138] sm:$0xf]
    %v102 = vld [vmem:[%s1 + $0x13c] sm:$0xf]
    %v103 = vld [vmem:[%s1 + $0x140] sm:$0xf]
    %v104 = vld [vmem:[%s1 + $0x144] sm:$0xf]
    %v105 = vld [vmem:[%s1 + $0x148] sm:$0xf]
    %v106 = vld [vmem:[%s1 + $0x14c] sm:$0xf]
    %v107 = vld [vmem:[%s1 + $0x150] sm:$0xf]
    %v108 = vld [vmem:[%s1 + $0x154] sm:$0xf]
    %v109 = vld [vmem:[%s1 + $0x158] sm:$0xf]
    %v110 = vld [vmem:[%s1 + $0x15c] sm:$0xf]
    %v111 = vld [vmem:[%s1 + $0x160] sm:$0xf]
    %v112 = vld [vmem:[%s1 + $0x164] sm:$0xf]
    %v113 = vld [vmem:[%s1 + $0x168] sm:$0xf]
    %v114 = vld [vmem:[%s1 + $0x16c] sm:$0xf]
    %v115 = vld [vmem:[%s1 + $0x170] sm:$0xf]
    %v116 = vld [vmem:[%s1 + $0x174] sm:$0xf]
    %v117 = vld [vmem:[%s1 + $0x178] sm:$0xf]
    %v118 = vld [vmem:[%s1 + $0x17c] sm:$0xf]
    %v120 = vcombine.high %v22, %v22
    %v122 = vunpack.c.l.s4 1966171168
    %v123 = vunpack.c.0.s8 %v122
    %v124 = vlaneseq
    %v125 = vshrl.u32 %v124, 7
    %v126 = vsub.s32 %v123, %v125
    %v127 = vrot.slane %v22, %v126
    %v129 = vunpack.c.l.s4 1966171168
    %v130 = vunpack.c.0.s8 %v129
    %v131 = vlaneseq
    %v132 = vshrl.u32 %v131, 7
    %v133 = vsub.s32 %v130, %v132
    %v134 = vrot.slane %v120, %v133
    %v135 = vcombine.high %v127, %v127
    %v136 = vcombine.high %v134, %v134
    %v138 = vunpack.c.l.s4 1966171168
    %v139 = vunpack.c.0.s8 %v138
    %v140 = vlaneseq
    %v141 = vshrl.u32 %v140, 7
    %v142 = vsub.s32 %v139, %v141
    %v143 = vrot.slane %v127, %v142
    %v145 = vunpack.c.l.s4 1966171168
    %v146 = vunpack.c.0.s8 %v145
    %v147 = vlaneseq
    %v148 = vshrl.u32 %v147, 7
    %v149 = vsub.s32 %v146, %v148
    %v150 = vrot.slane %v134, %v149
    %v152 = vunpack.c.l.s4 1966171168
    %v153 = vunpack.c.0.s8 %v152
    %v154 = vlaneseq
    %v155 = vshrl.u32 %v154, 7
    %v156 = vsub.s32 %v153, %v155
    %v157 = vrot.slane %v135, %v156
    %v159 = vunpack.c.l.s4 1966171168
    %v160 = vunpack.c.0.s8 %v159
    %v161 = vlaneseq
    %v162 = vshrl.u32 %v161, 7
    %v163 = vsub.s32 %v160, %v162
    %v164 = vrot.slane %v136, %v163
    %v165 = vcombine.high %v143, %v143
    %v166 = vcombine.high %v157, %v157
    %v269 = vunpack.c.l.b16 %v23
    %v270 = vunpack.c.l.b16 %v24
    %v271 = vunpack.c.l.b16 %v25
    %v272 = vunpack.c.l.b16 %v26
    %v273 = vunpack.c.l.b16 %v27
    %v274 = vunpack.c.l.b16 %v28
    %v275 = vunpack.c.l.b16 %v29
    %v276 = vunpack.c.l.b16 %v30
    %v277 = vunpack.c.l.b16 %v31
    %v278 = vunpack.c.l.b16 %v32
    %v279 = vunpack.c.l.b16 %v33
    %v280 = vunpack.c.l.b16 %v34
    %v281 = vunpack.c.l.b16 %v35
    %v282 = vunpack.c.l.b16 %v36
    %v283 = vunpack.c.l.b16 %v37
    %v284 = vunpack.c.l.b16 %v38
    %v285 = vunpack.c.l.b16 %v39
    %v286 = vunpack.c.l.b16 %v40
    %v287 = vunpack.c.l.b16 %v41
    %v288 = vunpack.c.l.b16 %v42
    %v289 = vunpack.c.l.b16 %v43
    %v290 = vunpack.c.l.b16 %v44
    %v291 = vunpack.c.l.b16 %v45
    %v292 = vunpack.c.l.b16 %v46
    %v293 = vunpack.c.l.b16 %v47
    %v294 = vunpack.c.l.b16 %v48
    %v295 = vunpack.c.l.b16 %v49
    %v296 = vunpack.c.l.b16 %v50
    %v297 = vunpack.c.l.b16 %v51
    %v298 = vunpack.c.l.b16 %v52
    %v299 = vunpack.c.l.b16 %v53
    %v300 = vunpack.c.l.b16 %v54
    %v301 = vunpack.c.l.b16 %v55
    %v302 = vunpack.c.l.b16 %v56
    %v303 = vunpack.c.l.b16 %v57
    %v304 = vunpack.c.l.b16 %v58
    %v305 = vunpack.c.l.b16 %v59
    %v306 = vunpack.c.l.b16 %v60
    %v307 = vunpack.c.l.b16 %v61
    %v308 = vunpack.c.l.b16 %v62
    %v309 = vunpack.c.l.b16 %v63
    %v310 = vunpack.c.l.b16 %v64
    %v311 = vunpack.c.l.b16 %v65
    %v312 = vunpack.c.l.b16 %v66
    %v313 = vunpack.c.l.b16 %v67
    %v314 = vunpack.c.l.b16 %v68
    %v315 = vunpack.c.l.b16 %v69
    %v316 = vunpack.c.l.b16 %v70
    %v317 = vunpack.c.l.b16 %v71
    %v318 = vunpack.c.l.b16 %v72
    %v319 = vunpack.c.l.b16 %v73
    %v320 = vunpack.c.l.b16 %v74
    %v321 = vunpack.c.l.b16 %v75
    %v322 = vunpack.c.l.b16 %v76
    %v323 = vunpack.c.l.b16 %v77
    %v324 = vunpack.c.l.b16 %v78
    %v325 = vunpack.c.l.b16 %v79
    %v326 = vunpack.c.l.b16 %v80
    %v327 = vunpack.c.l.b16 %v81
    %v328 = vunpack.c.l.b16 %v82
    %v329 = vunpack.c.l.b16 %v83
    %v330 = vunpack.c.l.b16 %v84
    %v331 = vunpack.c.l.b16 %v85
    %v332 = vunpack.c.l.b16 %v86
    %v333 = vunpack.c.l.b16 %v87
    %v334 = vunpack.c.l.b16 %v88
    %v335 = vunpack.c.l.b16 %v89
    %v336 = vunpack.c.l.b16 %v90
    %v337 = vunpack.c.l.b16 %v91
    %v338 = vunpack.c.l.b16 %v92
    %v339 = vunpack.c.l.b16 %v93
    %v340 = vunpack.c.l.b16 %v94
    %v341 = vunpack.c.l.b16 %v95
    %v342 = vunpack.c.l.b16 %v96
    %v343 = vunpack.c.l.b16 %v97
    %v344 = vunpack.c.l.b16 %v98
    %v345 = vunpack.c.l.b16 %v99
    %v346 = vunpack.c.l.b16 %v100
    %v347 = vunpack.c.l.b16 %v101
    %v348 = vunpack.c.l.b16 %v102
    %v349 = vunpack.c.l.b16 %v103
    %v350 = vunpack.c.l.b16 %v104
    %v351 = vunpack.c.l.b16 %v105
    %v352 = vunpack.c.l.b16 %v106
    %v353 = vunpack.c.l.b16 %v107
    %v354 = vunpack.c.l.b16 %v108
    %v355 = vunpack.c.l.b16 %v109
    %v356 = vunpack.c.l.b16 %v110
    %v357 = vunpack.c.l.b16 %v111
    %v358 = vunpack.c.l.b16 %v112
    %v359 = vunpack.c.l.b16 %v113
    %v360 = vunpack.c.l.b16 %v114
    %v361 = vunpack.c.l.b16 %v115
    %v362 = vunpack.c.l.b16 %v116
    %v363 = vunpack.c.l.b16 %v117
    %v364 = vunpack.c.l.b16 %v118
    %v365 = vpack.c.b16 %v270, %v269
    %v366 = vpack.c.b16 %v272, %v271
    %v367 = vpack.c.b16 %v274, %v273
    %v368 = vpack.c.b16 %v276, %v275
    %v369 = vpack.c.b16 %v278, %v277
    %v370 = vpack.c.b16 %v280, %v279
    %v371 = vpack.c.b16 %v282, %v281
    %v372 = vpack.c.b16 %v284, %v283
    %v373 = vpack.c.b16 %v286, %v285
    %v374 = vpack.c.b16 %v288, %v287
    %v375 = vpack.c.b16 %v290, %v289
    %v376 = vpack.c.b16 %v292, %v291
    %v377 = vpack.c.b16 %v294, %v293
    %v378 = vpack.c.b16 %v296, %v295
    %v379 = vpack.c.b16 %v298, %v297
    %v380 = vpack.c.b16 %v300, %v299
    %v381 = vpack.c.b16 %v302, %v301
    %v382 = vpack.c.b16 %v304, %v303
    %v383 = vpack.c.b16 %v306, %v305
    %v384 = vpack.c.b16 %v308, %v307
    %v385 = vpack.c.b16 %v310, %v309
    %v386 = vpack.c.b16 %v312, %v311
    %v387 = vpack.c.b16 %v314, %v313
    %v388 = vpack.c.b16 %v316, %v315
    %v389 = vpack.c.b16 %v318, %v317
    %v390 = vpack.c.b16 %v320, %v319
    %v391 = vpack.c.b16 %v322, %v321
    %v392 = vpack.c.b16 %v324, %v323
    %v393 = vpack.c.b16 %v326, %v325
    %v394 = vpack.c.b16 %v328, %v327
    %v395 = vpack.c.b16 %v330, %v329
    %v396 = vpack.c.b16 %v332, %v331
    %v397 = vpack.c.b16 %v334, %v333
    %v398 = vpack.c.b16 %v336, %v335
    %v399 = vpack.c.b16 %v338, %v337
    %v400 = vpack.c.b16 %v340, %v339
    %v401 = vpack.c.b16 %v342, %v341
    %v402 = vpack.c.b16 %v344, %v343
    %v403 = vpack.c.b16 %v346, %v345
    %v404 = vpack.c.b16 %v348, %v347
    %v405 = vpack.c.b16 %v350, %v349
    %v406 = vpack.c.b16 %v352, %v351
    %v407 = vpack.c.b16 %v354, %v353
    %v408 = vpack.c.b16 %v356, %v355
    %v409 = vpack.c.b16 %v358, %v357
    %v410 = vpack.c.b16 %v360, %v359
    %v411 = vpack.c.b16 %v362, %v361
    %v412 = vpack.c.b16 %v364, %v363
    %461 = vmatprep.subr.bf16.mxu0 0
    %462 = vmatpush1.bf16.msra.mxu0 %v365
    %463 = vmatprep.subr.bf16.mxu0 0
    %464 = vmatpush1.bf16.msra.mxu0 %v366
    %465 = vmatprep.subr.bf16.mxu0 0
    %466 = vmatpush1.bf16.msra.mxu0 %v367
    %467 = vmatprep.subr.bf16.mxu0 0
    %468 = vmatpush1.bf16.msra.mxu0 %v368
    %469 = vmatprep.subr.bf16.mxu0 0
    %470 = vmatpush1.bf16.msra.mxu0 %v369
    %471 = vmatprep.subr.bf16.mxu0 0
    %472 = vmatpush1.bf16.msra.mxu0 %v370
    %473 = vmatprep.subr.bf16.mxu0 0
    %474 = vmatpush1.bf16.msra.mxu0 %v371
    %475 = vmatprep.subr.bf16.mxu0 0
    %476 = vmatpush1.bf16.msra.mxu0 %v372
    %477 = vmatprep.subr.bf16.mxu0 0
    %478 = vmatpush1.bf16.msra.mxu0 %v373
    %479 = vmatprep.subr.bf16.mxu0 0
    %480 = vmatpush1.bf16.msra.mxu0 %v374
    %481 = vmatprep.subr.bf16.mxu0 0
    %482 = vmatpush1.bf16.msra.mxu0 %v375
    %483 = vmatprep.subr.bf16.mxu0 0
    %484 = vmatpush1.bf16.msra.mxu0 %v376
    %485 = vmatprep.subr.bf16.mxu0 0
    %486 = vmatpush1.bf16.msra.mxu0 %v377
    %487 = vmatprep.subr.bf16.mxu0 0
    %488 = vmatpush1.bf16.msra.mxu0 %v378
    %489 = vmatprep.subr.bf16.mxu0 0
    %490 = vmatpush1.bf16.msra.mxu0 %v379
    %491 = vmatprep.subr.bf16.mxu0 0
    %492 = vmatpush1.bf16.msra.mxu0 %v380
    %493 = vmatprep.mubr.bf16.mxu0 %v157
    %494 = vmatmul.mubr.bf16.gmra.mrb[0].mxu0 %v143
    %v495 = vpop.f32.mrb[0].mxu0
    %v496 = vadd.f32 0.0, %v495
    %v497 = vpop.f32.mrb[0].mxu0
    %v498 = vpop.f32.mrb[0].mxu0
    %v499 = vpop.f32.mrb[0].mxu0
    %500 = vdwg.mxu0
    %501 = vmatprep.subr.bf16.mxu0 0
    %502 = vmatpush1.bf16.msra.mxu0 %v381
    %503 = vmatprep.subr.bf16.mxu0 0
    %504 = vmatpush1.bf16.msra.mxu0 %v382
    %505 = vmatprep.subr.bf16.mxu0 0
    %506 = vmatpush1.bf16.msra.mxu0 %v383
    %507 = vmatprep.subr.bf16.mxu0 0
    %508 = vmatpush1.bf16.msra.mxu0 %v384
    %509 = vmatprep.subr.bf16.mxu0 0
    %510 = vmatpush1.bf16.msra.mxu0 %v385
    %511 = vmatprep.subr.bf16.mxu0 0
    %512 = vmatpush1.bf16.msra.mxu0 %v386
    %513 = vmatprep.subr.bf16.mxu0 0
    %514 = vmatpush1.bf16.msra.mxu0 %v387
    %515 = vmatprep.subr.bf16.mxu0 0
    %516 = vmatpush1.bf16.msra.mxu0 %v388
    %517 = vmatprep.subr.bf16.mxu0 0
    %518 = vmatpush1.bf16.msra.mxu0 %v389
    %519 = vmatprep.subr.bf16.mxu0 0
    %520 = vmatpush1.bf16.msra.mxu0 %v390
    %521 = vmatprep.subr.bf16.mxu0 0
    %522 = vmatpush1.bf16.msra.mxu0 %v391
    %523 = vmatprep.subr.bf16.mxu0 0
    %524 = vmatpush1.bf16.msra.mxu0 %v392
    %525 = vmatprep.subr.bf16.mxu0 0
    %526 = vmatpush1.bf16.msra.mxu0 %v393
    %527 = vmatprep.subr.bf16.mxu0 0
    %528 = vmatpush1.bf16.msra.mxu0 %v394
    %529 = vmatprep.subr.bf16.mxu0 0
    %530 = vmatpush1.bf16.msra.mxu0 %v395
    %531 = vmatprep.subr.bf16.mxu0 0
    %532 = vmatpush1.bf16.msra.mxu0 %v396
    %533 = vmatprep.mubr.bf16.mxu0 %v166
    %534 = vmatmul.mubr.bf16.gmra.mrb[0].mxu0 %v165
    %v535 = vpop.f32.mrb[0].mxu0
    %v536 = vadd.f32 %v496, %v535
    %v537 = vpop.f32.mrb[0].mxu0
    %v538 = vpop.f32.mrb[0].mxu0
    %v539 = vpop.f32.mrb[0].mxu0
    %540 = vdwg.mxu0
    %541 = vmatprep.subr.bf16.mxu0 0
    %542 = vmatpush1.bf16.msra.mxu0 %v397
    %543 = vmatprep.subr.bf16.mxu0 0
    %544 = vmatpush1.bf16.msra.mxu0 %v398
    %545 = vmatprep.subr.bf16.mxu0 0
    %546 = vmatpush1.bf16.msra.mxu0 %v399
    %547 = vmatprep.subr.bf16.mxu0 0
    %548 = vmatpush1.bf16.msra.mxu0 %v400
    %549 = vmatprep.subr.bf16.mxu0 0
    %550 = vmatpush1.bf16.msra.mxu0 %v401
    %551 = vmatprep.subr.bf16.mxu0 0
    %552 = vmatpush1.bf16.msra.mxu0 %v402
    %553 = vmatprep.subr.bf16.mxu0 0
    %554 = vmatpush1.bf16.msra.mxu0 %v403
    %555 = vmatprep.subr.bf16.mxu0 0
    %556 = vmatpush1.bf16.msra.mxu0 %v404
    %557 = vmatprep.subr.bf16.mxu0 0
    %558 = vmatpush1.bf16.msra.mxu0 %v405
    %559 = vmatprep.subr.bf16.mxu0 0
    %560 = vmatpush1.bf16.msra.mxu0 %v406
    %561 = vmatprep.subr.bf16.mxu0 0
    %562 = vmatpush1.bf16.msra.mxu0 %v407
    %563 = vmatprep.subr.bf16.mxu0 0
    %564 = vmatpush1.bf16.msra.mxu0 %v408
    %565 = vmatprep.subr.bf16.mxu0 0
    %566 = vmatpush1.bf16.msra.mxu0 %v409
    %567 = vmatprep.subr.bf16.mxu0 0
    %568 = vmatpush1.bf16.msra.mxu0 %v410
    %569 = vmatprep.subr.bf16.mxu0 0
    %570 = vmatpush1.bf16.msra.mxu0 %v411
    %571 = vmatprep.subr.bf16.mxu0 0
    %572 = vmatpush1.bf16.msra.mxu0 %v412
    %573 = vmatprep.mubr.bf16.mxu0 %v164
    %574 = vmatmul.mubr.bf16.gmra.mrb[0].mxu0 %v150
    %v575 = vpop.f32.mrb[0].mxu0
    %v576 = vadd.f32 %v536, %v575
    %v577 = vpop.f32.mrb[0].mxu0
    %v578 = vpop.f32.mrb[0].mxu0
    %v579 = vpop.f32.mrb[0].mxu0
    %580 = vdwg.mxu0
    %v581 = vadd.f32 %v21, %v576
    %582 = vst [vmem:[#allocation2] sm:$0x3] %v581
    // Predicated region
    $region18: #{cnn_encoder_forward.7} parent=1 // pred_check
      %p583 = pneg %p16
    $region19: #{cnn_encoder_forward.7} parent=1 // pred_check_branch
      %585 = sbr.rel (%p583) target = $region21
    $region20: #{cnn_encoder_forward.7} parent=1 // pred_region
      %v586 = vld [vmem:[#allocation2] sm:$0x3]
      %v587 = vld [vmem:[%s2] sm:$0x1]
      %v589 = vlaneseq
      %v590 = vshrl.u32 %v589, 7
      %v591 = vsub.s32 0, %v590
      %v592 = vrot.slane %v587, %v591
      %v594 = vadd.f32 %v586, %v592
      %v595 = vmax.f32 %v594, 0.0
      %596 = vst [vmem:[#allocation3] sm:$0x3] %v595
    $region21: #{cnn_encoder_forward.7} parent=1 // pred_fallthru
      _
    // Predicated region
    $region22: #{cnn_encoder_forward.7} parent=1 // pred_check
      _
    $region23: #{cnn_encoder_forward.7} parent=1 // pred_check_branch
      %598 = sbr.rel (0) target = $region25
    $region24: #{cnn_encoder_forward.7} parent=1 // pred_region
      %s600 = ssub.s32 32, 32
      %601 = vsyncadd [#allocation4], %s600
      %s603 = sshll.u32 [#allocation3], 4
      %s604 = int_to_ptr.vmem [resolvable:$true] %s603
      %606 = dma.vmem_to_hbm [thread:$0]  %s604, 32, %s3, [#allocation4]
    $region25: #{cnn_encoder_forward.7} parent=1 // pred_fallthru
      _
    // Predicated region
    $region26: #{cnn_encoder_forward.7} parent=1 // pred_check
      _
    $region27: #{cnn_encoder_forward.7} parent=1 // pred_check_branch
      %608 = sbr.rel (0) target = $region29
    $region28: #{cnn_encoder_forward.7} parent=1 // pred_region
      %609 = dma.done [#allocation4], 32
    $region29: #{cnn_encoder_forward.7} parent=1 // pred_fallthru
      _
    %610 = vsyncpa [#allocation4], 1

// kernel: cnn_encoder_forward.6
$region0: #{cnn_encoder_forward.6}
  #allocation0 [shape = 'u32[]', space=smem, size = 0x4, offset = 0x4, fixed_abs, tag = 'smem constant byte address 0x4 - core index']
  #allocation1 [shape = 'u32[144,128]{1,0:T(1,128)}', space=vmem, size = 0x12000, scoped, tag = 'internal scratch']
  %s0 = inlined_call_operand.vmem [shape: bf16[2,12,128], index: 0, kind: input, shape index: {}]
  %s1 = inlined_call_operand.vmem [shape: bf16[2,12,128], index: 1, kind: input, shape index: {}]
  %s2 = inlined_call_operand.vmem [shape: bf16[6,128,128], index: 2, kind: input, shape index: {}]
  %s3 = inlined_call_operand.vmem [shape: f32[1,128], index: 3, kind: input, shape index: {}]
  %s4 = inlined_call_operand.vmem [shape: bf16[2,6,128], index: 4, kind: output, shape index: {}]
  %s5 = sld [smem:[#allocation0]]
  $region49: #{cnn_encoder_forward.6} parent=0
    _
  %s7 = ssub.s32 1, %s5
  %s8 = scalar_select 0, %s7, %s5
  loop: start=0, step=1, limit=4
  $region2: #{cnn_encoder_forward.6} parent=0 // loop_pre_header
    _
  $region3: #{cnn_encoder_forward.6} parent=0 // loop_header
    %s10 = sphi 0, %s14
    %p11 = scmp.ge.s32.totalorder %s10, 4
    %s20 = sphi 0, %s22
    %s23 = sphi 0, %s20
    %s24 = sphi 0, %s23
    %s40 = sphi 0, %s24
    %s46 = sphi 0, %s48
    %s49 = sphi 0, %s46
    %s50 = sphi 0, %s49
    %s66 = sphi 0, %s50
    %s70 = sphi 0, %s70
    %s72 = sphi 0, %s70
    %s73 = sphi 0, %s72
    %s87 = sphi 0, %s73
    %s91 = sphi 0, %s91
    %s93 = sphi 0, %s91
    %s94 = sphi 0, %s93
    %s108 = sphi 0, %s94
    %s114 = sphi 0, %s116
    %s117 = sphi 0, %s114
    %s118 = sphi 0, %s117
    %s134 = sphi 0, %s118
  $region4: #{cnn_encoder_forward.6} parent=0 // loop_header_branch
    %13 = sbr.rel (%p11) target = $region8
  $region5: #{cnn_encoder_forward.6} parent=0 // loop_body
    %s15 = ssub.s32 %s10, 1
    %s16 = ssub.s32 %s10, 2
    %s17 = sadd.s32 %s10, 1
    %s18 = ssub.s32 %s10, %s17
    %p19 = scmp.eq.s32.totalorder %s18, 0
    %s21 = sadd.s32 %s20, 1
    %s22 = scalar_select %p19, %s20, %s21
    %p25 = pneg %p19
    %p26 = scmp.eq.s32.totalorder %s10, 1
    %p27 = por %p25, %p26
    %p28 = scmp.ne.s32.totalorder %s20, %s23
    %p29 = scmp.eq.s32.totalorder %s10, 0
    %p30 = por %p28, %p29
    %p31 = scmp.ne.s32.totalorder %s20, %s23
    %p32 = scmp.eq.s32.totalorder %s15, 1
    %p33 = por %p31, %p32
    %p34 = scmp.ne.s32.totalorder %s23, %s24
    %p35 = scmp.eq.s32.totalorder %s15, 0
    %p36 = por %p34, %p35
    %p37 = scmp.ne.s32.totalorder %s23, %s24
    %p38 = scmp.eq.s32.totalorder %s16, 1
    %p39 = por %p37, %p38
    %p41 = scmp.ne.s32.totalorder %s24, %s40
    %p42 = scmp.eq.s32.totalorder %s16, 0
    %p43 = por %p41, %p42
    %s44 = ssub.s32 %s10, %s17
    %p45 = scmp.eq.s32.totalorder %s44, 0
    %s47 = sadd.s32 %s46, 1
    %s48 = scalar_select %p45, %s46, %s47
    %p51 = pneg %p45
    %p52 = scmp.eq.s32.totalorder %s10, 1
    %p53 = por %p51, %p52
    %p54 = scmp.ne.s32.totalorder %s46, %s49
    %p55 = scmp.eq.s32.totalorder %s10, 0
    %p56 = por %p54, %p55
    %p57 = scmp.ne.s32.totalorder %s46, %s49
    %p58 = scmp.eq.s32.totalorder %s15, 1
    %p59 = por %p57, %p58
    %p60 = scmp.ne.s32.totalorder %s49, %s50
    %p61 = scmp.eq.s32.totalorder %s15, 0
    %p62 = por %p60, %p61
    %p63 = scmp.ne.s32.totalorder %s49, %s50
    %p64 = scmp.eq.s32.totalorder %s16, 1
    %p65 = por %p63, %p64
    %p67 = scmp.ne.s32.totalorder %s50, %s66
    %p68 = scmp.eq.s32.totalorder %s16, 0
    %p69 = por %p67, %p68
    %s71 = sadd.s32 %s70, 1
    %p74 = scmp.eq.s32.totalorder %s10, 1
    %p75 = scmp.ne.s32.totalorder %s70, %s72
    %p76 = scmp.eq.s32.totalorder %s10, 0
    %p77 = por %p75, %p76
    %p78 = scmp.ne.s32.totalorder %s70, %s72
    %p79 = scmp.eq.s32.totalorder %s15, 1
    %p80 = por %p78, %p79
    %p81 = scmp.ne.s32.totalorder %s72, %s73
    %p82 = scmp.eq.s32.totalorder %s15, 0
    %p83 = por %p81, %p82
    %p84 = scmp.ne.s32.totalorder %s72, %s73
    %p85 = scmp.eq.s32.totalorder %s16, 1
    %p86 = por %p84, %p85
    %p88 = scmp.ne.s32.totalorder %s73, %s87
    %p89 = scmp.eq.s32.totalorder %s16, 0
    %p90 = por %p88, %p89
    %s92 = sadd.s32 %s91, 1
    %p95 = scmp.eq.s32.totalorder %s10, 1
    %p96 = scmp.ne.s32.totalorder %s91, %s93
    %p97 = scmp.eq.s32.totalorder %s10, 0
    %p98 = por %p96, %p97
    %p99 = scmp.ne.s32.totalorder %s91, %s93
    %p100 = scmp.eq.s32.totalorder %s15, 1
    %p101 = por %p99, %p100
    %p102 = scmp.ne.s32.totalorder %s93, %s94
    %p103 = scmp.eq.s32.totalorder %s15, 0
    %p104 = por %p102, %p103
    %p105 = scmp.ne.s32.totalorder %s93, %s94
    %p106 = scmp.eq.s32.totalorder %s16, 1
    %p107 = por %p105, %p106
    %p109 = scmp.ne.s32.totalorder %s94, %s108
    %p110 = scmp.eq.s32.totalorder %s16, 0
    %p111 = por %p109, %p110
    %s112 = ssub.s32 %s10, %s17
    %p113 = scmp.eq.s32.totalorder %s112, 0
    %s115 = sadd.s32 %s114, 1
    %s116 = scalar_select %p113, %s114, %s115
    %p119 = pneg %p113
    %p120 = scmp.eq.s32.totalorder %s10, 1
    %p121 = por %p119, %p120
    %p122 = scmp.ne.s32.totalorder %s114, %s117
    %p123 = scmp.eq.s32.totalorder %s10, 0
    %p124 = por %p122, %p123
    %p125 = scmp.ne.s32.totalorder %s114, %s117
    %p126 = scmp.eq.s32.totalorder %s15, 1
    %p127 = por %p125, %p126
    %p128 = scmp.ne.s32.totalorder %s117, %s118
    %p129 = scmp.eq.s32.totalorder %s15, 0
    %p130 = por %p128, %p129
    %p131 = scmp.ne.s32.totalorder %s117, %s118
    %p132 = scmp.eq.s32.totalorder %s16, 1
    %p133 = por %p131, %p132
    %p135 = scmp.ne.s32.totalorder %s118, %s134
    %p136 = scmp.eq.s32.totalorder %s16, 0
    %p137 = por %p135, %p136
    %p138 = scmp.le.s32.totalorder 1, %s10
    %p139 = scmp.lt.s32.totalorder %s10, 3
    %p140 = pnand %p138, %p139
    %p141 = pneg %p140
    // Predicated region
    $region9: #{cnn_encoder_forward.6} parent=5 // pred_check
      _
    $region10: #{cnn_encoder_forward.6} parent=5 // pred_check_branch
      %143 = sbr.rel (%p140) target = $region12
    $region11: #{cnn_encoder_forward.6} parent=5 // pred_region
      %s144 = ssub.s32 %s10, 1
      // Predicated region
      $region13: #{cnn_encoder_forward.6} parent=11 // pred_check
        %p145 = pneg %p83
      $region14: #{cnn_encoder_forward.6} parent=11 // pred_check_branch
        %147 = sbr.rel (%p145) target = $region16
      $region15: #{cnn_encoder_forward.6} parent=11 // pred_region
        _
      $region16: #{cnn_encoder_forward.6} parent=11 // pred_fallthru
        _
      // Predicated region
      $region17: #{cnn_encoder_forward.6} parent=11 // pred_check
        %p148 = pneg %p104
      $region18: #{cnn_encoder_forward.6} parent=11 // pred_check_branch
        %150 = sbr.rel (%p148) target = $region20
      $region19: #{cnn_encoder_forward.6} parent=11 // pred_region
        _
      $region20: #{cnn_encoder_forward.6} parent=11 // pred_fallthru
        _
    $region12: #{cnn_encoder_forward.6} parent=5 // pred_fallthru
      _
    %p151 = scmp.lt.s32.totalorder %s10, 2
    // Predicated region
    $region21: #{cnn_encoder_forward.6} parent=5 // pred_check
      %p152 = pneg %p151
    $region22: #{cnn_encoder_forward.6} parent=5 // pred_check_branch
      %154 = sbr.rel (%p152) target = $region24
    $region23: #{cnn_encoder_forward.6} parent=5 // pred_region
      // Predicated region
      $region25: #{cnn_encoder_forward.6} parent=23 // pred_check
        %p155 = pneg %p30
      $region26: #{cnn_encoder_forward.6} parent=23 // pred_check_branch
        %157 = sbr.rel (%p155) target = $region28
      $region27: #{cnn_encoder_forward.6} parent=23 // pred_region
        %p158 = scmp.lt.s32.totalorder %s10, 1
        %s159 = scalar_select %p158, %s10, 1
        %s160 = smul.addr %s159, 2
        %s161 = smul.addr %s160, 4
        %s162 = scalar_lea.vmem %s0, %s161
      $region28: #{cnn_encoder_forward.6} parent=23 // pred_fallthru
        _
      // Predicated region
      $region29: #{cnn_encoder_forward.6} parent=23 // pred_check
        %p163 = pneg %p56
      $region30: #{cnn_encoder_forward.6} parent=23 // pred_check_branch
        %165 = sbr.rel (%p163) target = $region32
      $region31: #{cnn_encoder_forward.6} parent=23 // pred_region
        %p166 = scmp.lt.s32.totalorder %s10, 1
        %s167 = scalar_select %p166, %s10, 1
        %s168 = smul.addr %s167, 2
        %s169 = smul.addr %s168, 4
        %s170 = scalar_lea.vmem %s1, %s169
      $region32: #{cnn_encoder_forward.6} parent=23 // pred_fallthru
        _
    $region24: #{cnn_encoder_forward.6} parent=5 // pred_fallthru
      _
    %p171 = scmp.le.s32.totalorder 1, %s10
    %p172 = scmp.lt.s32.totalorder %s10, 3
    %p173 = pnand %p171, %p172
    %p174 = pneg %p173
    // Predicated region
    $region33: #{cnn_encoder_forward.6} parent=5 // pred_check
      _
    $region34: #{cnn_encoder_forward.6} parent=5 // pred_check_branch
      %176 = sbr.rel (%p173) target = $region36
    $region35: #{cnn_encoder_forward.6} parent=5 // pred_region
      %s177 = ssub.s32 %s10, 1
      %p178 = scmp.lt.s32.totalorder %s15, 1
      %s179 = scalar_select %p178, %s15, 1
      %s180 = smul.addr %s179, 2
      %s181 = smul.addr %s180, 4
      %s182 = scalar_lea.vmem %s0, %s181
      %p183 = pneg %p36
      %p184 = pneg %p33
      %p185 = scmp.lt.s32.totalorder %s15, 1
      %s186 = scalar_select %p185, %s15, 1
      %s187 = smul.addr %s186, 2
      %s188 = smul.addr %s187, 4
      %s189 = scalar_lea.vmem %s1, %s188
      %p190 = pneg %p62
      %p191 = pneg %p59
      %p192 = pneg %p83
      %p193 = pneg %p80
      %p194 = pneg %p104
      %p195 = pneg %p101
      %p196 = pneg %p130
      %p197 = pneg %p127
      %p198 = scmp.lt.s32.totalorder %s15, 1
      %s199 = scalar_select %p198, %s15, 1
      %s200 = smul.addr %s199, 4
      %s201 = scalar_lea.vmem %s4, %s200
      %p202 = scmp.lt.s32.totalorder %s15, 1
      %s203 = scalar_select %p202, %s15, 1
      %s204 = smul.addr %s203, 2
      %s205 = smul.addr %s204, 4
      %s206 = scalar_lea.vmem %s0, %s205
      %p207 = scmp.lt.s32.totalorder %s15, 1
      %s208 = scalar_select %p207, %s15, 1
      %s209 = smul.addr %s208, 2
      %s210 = smul.addr %s209, 4
      %s211 = scalar_lea.vmem %s1, %s210
      %p212 = scmp.lt.s32.totalorder %s15, 1
      %s213 = scalar_select %p212, %s15, 1
      %s214 = smul.addr %s213, 4
      %s215 = scalar_lea.vmem %s4, %s214
      %v217 = vld [vmem:[%s206] sm:$0x7]
      %v218 = vld [vmem:[%s2] sm:$0xf]
      %v219 = vld [vmem:[%s2 + $0x4] sm:$0xf]
      %v220 = vld [vmem:[%s2 + $0x8] sm:$0xf]
      %v221 = vld [vmem:[%s2 + $0xc] sm:$0xf]
      %v222 = vld [vmem:[%s2 + $0x10] sm:$0xf]
      %v223 = vld [vmem:[%s2 + $0x14] sm:$0xf]
      %v224 = vld [vmem:[%s2 + $0x18] sm:$0xf]
      %v225 = vld [vmem:[%s2 + $0x1c] sm:$0xf]
      %v226 = vld [vmem:[%s2 + $0x20] sm:$0xf]
      %v227 = vld [vmem:[%s2 + $0x24] sm:$0xf]
      %v228 = vld [vmem:[%s2 + $0x28] sm:$0xf]
      %v229 = vld [vmem:[%s2 + $0x2c] sm:$0xf]
      %v230 = vld [vmem:[%s2 + $0x30] sm:$0xf]
      %v231 = vld [vmem:[%s2 + $0x34] sm:$0xf]
      %v232 = vld [vmem:[%s2 + $0x38] sm:$0xf]
      %v233 = vld [vmem:[%s2 + $0x3c] sm:$0xf]
      %v234 = vld [vmem:[%s206] sm:$0xf]
      %s235 = scalar_lea.vmem %s2, 64
      %v236 = vld [vmem:[%s235] sm:$0xf]
      %v237 = vld [vmem:[%s235 + $0x4] sm:$0xf]
      %v238 = vld [vmem:[%s235 + $0x8] sm:$0xf]
      %v239 = vld [vmem:[%s235 + $0xc] sm:$0xf]
      %v240 = vld [vmem:[%s235 + $0x10] sm:$0xf]
      %v241 = vld [vmem:[%s235 + $0x14] sm:$0xf]
      %v242 = vld [vmem:[%s235 + $0x18] sm:$0xf]
      %v243 = vld [vmem:[%s235 + $0x1c] sm:$0xf]
      %v244 = vld [vmem:[%s235 + $0x20] sm:$0xf]
      %v245 = vld [vmem:[%s235 + $0x24] sm:$0xf]
      %v246 = vld [vmem:[%s235 + $0x28] sm:$0xf]
      %v247 = vld [vmem:[%s235 + $0x2c] sm:$0xf]
      %v248 = vld [vmem:[%s235 + $0x30] sm:$0xf]
      %v249 = vld [vmem:[%s235 + $0x34] sm:$0xf]
      %v250 = vld [vmem:[%s235 + $0x38] sm:$0xf]
      %v251 = vld [vmem:[%s235 + $0x3c] sm:$0xf]
      %v253 = vunpack.c.l.b16 %v234
      %v254 = vpack.c.b16 %v253, %v253
      %v256 = vshrl.u32 %v254, 16
      %v258 = vshll.u32 %v254, 16
      %v260 = vrot.slane %v258, 1
      %v261 = vor.u32 %v256, %v260
      %v279 = vunpack.c.l.b16 %v236
      %v280 = vunpack.c.l.b16 %v237
      %v281 = vunpack.c.l.b16 %v238
      %v282 = vunpack.c.l.b16 %v239
      %v283 = vunpack.c.l.b16 %v240
      %v284 = vunpack.c.l.b16 %v241
      %v285 = vunpack.c.l.b16 %v242
      %v286 = vunpack.c.l.b16 %v243
      %v287 = vunpack.c.l.b16 %v244
      %v288 = vunpack.c.l.b16 %v245
      %v289 = vunpack.c.l.b16 %v246
      %v290 = vunpack.c.l.b16 %v247
      %v291 = vunpack.c.l.b16 %v248
      %v292 = vunpack.c.l.b16 %v249
      %v293 = vunpack.c.l.b16 %v250
      %v294 = vunpack.c.l.b16 %v251
      %v295 = vpack.c.b16 %v280, %v279
      %v296 = vpack.c.b16 %v282, %v281
      %v297 = vpack.c.b16 %v284, %v283
      %v298 = vpack.c.b16 %v286, %v285
      %v299 = vpack.c.b16 %v288, %v287
      %v300 = vpack.c.b16 %v290, %v289
      %v301 = vpack.c.b16 %v292, %v291
      %v302 = vpack.c.b16 %v294, %v293
      %311 = vmatprep.subr.bf16.mxu0 0
      %312 = vmatpush1.bf16.msra.mxu0 %v295
      %313 = vmatprep.subr.bf16.mxu0 0
      %314 = vmatpush1.bf16.msra.mxu0 %v296
      %315 = vmatprep.subr.bf16.mxu0 0
      %316 = vmatpush1.bf16.msra.mxu0 %v297
      %317 = vmatprep.subr.bf16.mxu0 0
      %318 = vmatpush1.bf16.msra.mxu0 %v298
      %319 = vmatprep.subr.bf16.mxu0 0
      %320 = vmatpush1.bf16.msra.mxu0 %v299
      %321 = vmatprep.subr.bf16.mxu0 0
      %322 = vmatpush1.bf16.msra.mxu0 %v300
      %323 = vmatprep.subr.bf16.mxu0 0
      %324 = vmatpush1.bf16.msra.mxu0 %v301
      %325 = vmatprep.subr.bf16.mxu0 0
      %326 = vmatpush1.bf16.msra.mxu0 %v302
      %327 = vmatprep.subr.bf16.mxu0 0
      %328 = vmatpush1.bf16.msra.mxu0 0
      %329 = vmatprep.subr.bf16.mxu0 0
      %330 = vmatpush1.bf16.msra.mxu0 0
      %331 = vmatprep.subr.bf16.mxu0 0
      %332 = vmatpush1.bf16.msra.mxu0 0
      %333 = vmatprep.subr.bf16.mxu0 0
      %334 = vmatpush1.bf16.msra.mxu0 0
      %335 = vmatprep.subr.bf16.mxu0 0
      %336 = vmatpush1.bf16.msra.mxu0 0
      %337 = vmatprep.subr.bf16.mxu0 0
      %338 = vmatpush1.bf16.msra.mxu0 0
      %339 = vmatprep.subr.bf16.mxu0 0
      %340 = vmatpush1.bf16.msra.mxu0 0
      %341 = vmatprep.subr.bf16.mxu0 0
      %342 = vmatpush1.bf16.msra.mxu0 0
      %343 = vmatprep.mubr.bf16.mxu0 0
      %344 = vmatmul.mubr.bf16.gmra.mrb[0].mxu0 %v261
      %v345 = vpop.f32.mrb[0].mxu0
      %v346 = vadd.f32 0.0, %v345
      %v347 = vpop.f32.mrb[0].mxu0
      %v348 = vpop.f32.mrb[0].mxu0
      %v349 = vpop.f32.mrb[0].mxu0
      %350 = vdwg.mxu0
      %v367 = vunpack.c.l.b16 %v218
      %v368 = vunpack.c.l.b16 %v219
      %v369 = vunpack.c.l.b16 %v220
      %v370 = vunpack.c.l.b16 %v221
      %v371 = vunpack.c.l.b16 %v222
      %v372 = vunpack.c.l.b16 %v223
      %v373 = vunpack.c.l.b16 %v224
      %v374 = vunpack.c.l.b16 %v225
      %v375 = vunpack.c.l.b16 %v226
      %v376 = vunpack.c.l.b16 %v227
      %v377 = vunpack.c.l.b16 %v228
      %v378 = vunpack.c.l.b16 %v229
      %v379 = vunpack.c.l.b16 %v230
      %v380 = vunpack.c.l.b16 %v231
      %v381 = vunpack.c.l.b16 %v232
      %v382 = vunpack.c.l.b16 %v233
      %v383 = vpack.c.b16 %v368, %v367
      %v384 = vpack.c.b16 %v370, %v369
      %v385 = vpack.c.b16 %v372, %v371
      %v386 = vpack.c.b16 %v374, %v373
      %v387 = vpack.c.b16 %v376, %v375
      %v388 = vpack.c.b16 %v378, %v377
      %v389 = vpack.c.b16 %v380, %v379
      %v390 = vpack.c.b16 %v382, %v381
      %399 = vmatprep.subr.bf16.mxu0 0
      %400 = vmatpush1.bf16.msra.mxu0 %v383
      %401 = vmatprep.subr.bf16.mxu0 0
      %402 = vmatpush1.bf16.msra.mxu0 %v384
      %403 = vmatprep.subr.bf16.mxu0 0
      %404 = vmatpush1.bf16.msra.mxu0 %v385
      %405 = vmatprep.subr.bf16.mxu0 0
      %406 = vmatpush1.bf16.msra.mxu0 %v386
      %407 = vmatprep.subr.bf16.mxu0 0
      %408 = vmatpush1.bf16.msra.mxu0 %v387
      %409 = vmatprep.subr.bf16.mxu0 0
      %410 = vmatpush1.bf16.msra.mxu0 %v388
      %411 = vmatprep.subr.bf16.mxu0 0
      %412 = vmatpush1.bf16.msra.mxu0 %v389
      %413 = vmatprep.subr.bf16.mxu0 0
      %414 = vmatpush1.bf16.msra.mxu0 %v390
      %415 = vmatprep.subr.bf16.mxu0 0
      %416 = vmatpush1.bf16.msra.mxu0 0
      %417 = vmatprep.subr.bf16.mxu0 0
      %418 = vmatpush1.bf16.msra.mxu0 0
      %419 = vmatprep.subr.bf16.mxu0 0
      %420 = vmatpush1.bf16.msra.mxu0 0
      %421 = vmatprep.subr.bf16.mxu0 0
      %422 = vmatpush1.bf16.msra.mxu0 0
      %423 = vmatprep.subr.bf16.mxu0 0
      %424 = vmatpush1.bf16.msra.mxu0 0
      %425 = vmatprep.subr.bf16.mxu0 0
      %426 = vmatpush1.bf16.msra.mxu0 0
      %427 = vmatprep.subr.bf16.mxu0 0
      %428 = vmatpush1.bf16.msra.mxu0 0
      %429 = vmatprep.subr.bf16.mxu0 0
      %430 = vmatpush1.bf16.msra.mxu0 0
      %431 = vmatprep.mubr.bf16.mxu0 0
      %432 = vmatmul.mubr.bf16.gmra.mrb[0].mxu0 %v217
      %v433 = vpop.f32.mrb[0].mxu0
      %v434 = vadd.f32 %v346, %v433
      %v435 = vpop.f32.mrb[0].mxu0
      %v436 = vpop.f32.mrb[0].mxu0
      %v437 = vpop.f32.mrb[0].mxu0
      %438 = vdwg.mxu0
      %v439 = vld [vmem:[%s211] sm:$0x7]
      %s440 = scalar_lea.vmem %s2, 128
      %v441 = vld [vmem:[%s440] sm:$0xf]
      %v442 = vld [vmem:[%s440 + $0x4] sm:$0xf]
      %v443 = vld [vmem:[%s440 + $0x8] sm:$0xf]
      %v444 = vld [vmem:[%s440 + $0xc] sm:$0xf]
      %v445 = vld [vmem:[%s440 + $0x10] sm:$0xf]
      %v446 = vld [vmem:[%s440 + $0x14] sm:$0xf]
      %v447 = vld [vmem:[%s440 + $0x18] sm:$0xf]
      %v448 = vld [vmem:[%s440 + $0x1c] sm:$0xf]
      %v449 = vld [vmem:[%s440 + $0x20] sm:$0xf]
      %v450 = vld [vmem:[%s440 + $0x24] sm:$0xf]
      %v451 = vld [vmem:[%s440 + $0x28] sm:$0xf]
      %v452 = vld [vmem:[%s440 + $0x2c] sm:$0xf]
      %v453 = vld [vmem:[%s440 + $0x30] sm:$0xf]
      %v454 = vld [vmem:[%s440 + $0x34] sm:$0xf]
      %v455 = vld [vmem:[%s440 + $0x38] sm:$0xf]
      %v456 = vld [vmem:[%s440 + $0x3c] sm:$0xf]
      %v473 = vunpack.c.l.b16 %v441
      %v474 = vunpack.c.l.b16 %v442
      %v475 = vunpack.c.l.b16 %v443
      %v476 = vunpack.c.l.b16 %v444
      %v477 = vunpack.c.l.b16 %v445
      %v478 = vunpack.c.l.b16 %v446
      %v479 = vunpack.c.l.b16 %v447
      %v480 = vunpack.c.l.b16 %v448
      %v481 = vunpack.c.l.b16 %v449
      %v482 = vunpack.c.l.b16 %v450
      %v483 = vunpack.c.l.b16 %v451
      %v484 = vunpack.c.l.b16 %v452
      %v485 = vunpack.c.l.b16 %v453
      %v486 = vunpack.c.l.b16 %v454
      %v487 = vunpack.c.l.b16 %v455
      %v488 = vunpack.c.l.b16 %v456
      %v489 = vpack.c.b16 %v474, %v473
      %v490 = vpack.c.b16 %v476, %v475
      %v491 = vpack.c.b16 %v478, %v477
      %v492 = vpack.c.b16 %v480, %v479
      %v493 = vpack.c.b16 %v482, %v481
      %v494 = vpack.c.b16 %v484, %v483
      %v495 = vpack.c.b16 %v486, %v485
      %v496 = vpack.c.b16 %v488, %v487
      %505 = vmatprep.subr.bf16.mxu0 0
      %506 = vmatpush1.bf16.msra.mxu0 %v489
      %507 = vmatprep.subr.bf16.mxu0 0
      %508 = vmatpush1.bf16.msra.mxu0 %v490
      %509 = vmatprep.subr.bf16.mxu0 0
      %510 = vmatpush1.bf16.msra.mxu0 %v491
      %511 = vmatprep.subr.bf16.mxu0 0
      %512 = vmatpush1.bf16.msra.mxu0 %v492
      %513 = vmatprep.subr.bf16.mxu0 0
      %514 = vmatpush1.bf16.msra.mxu0 %v493
      %515 = vmatprep.subr.bf16.mxu0 0
      %516 = vmatpush1.bf16.msra.mxu0 %v494
      %517 = vmatprep.subr.bf16.mxu0 0
      %518 = vmatpush1.bf16.msra.mxu0 %v495
      %519 = vmatprep.subr.bf16.mxu0 0
      %520 = vmatpush1.bf16.msra.mxu0 %v496
      %521 = vmatprep.subr.bf16.mxu0 0
      %522 = vmatpush1.bf16.msra.mxu0 0
      %523 = vmatprep.subr.bf16.mxu0 0
      %524 = vmatpush1.bf16.msra.mxu0 0
      %525 = vmatprep.subr.bf16.mxu0 0
      %526 = vmatpush1.bf16.msra.mxu0 0
      %527 = vmatprep.subr.bf16.mxu0 0
      %528 = vmatpush1.bf16.msra.mxu0 0
      %529 = vmatprep.subr.bf16.mxu0 0
      %530 = vmatpush1.bf16.msra.mxu0 0
      %531 = vmatprep.subr.bf16.mxu0 0
      %532 = vmatpush1.bf16.msra.mxu0 0
      %533 = vmatprep.subr.bf16.mxu0 0
      %534 = vmatpush1.bf16.msra.mxu0 0
      %535 = vmatprep.subr.bf16.mxu0 0
      %536 = vmatpush1.bf16.msra.mxu0 0
      %537 = vmatprep.mubr.bf16.mxu0 0
      %538 = vmatmul.mubr.bf16.gmra.mrb[0].mxu0 %v439
      %v539 = vpop.f32.mrb[0].mxu0
      %v540 = vadd.f32 0.0, %v539
      %v541 = vpop.f32.mrb[0].mxu0
      %v542 = vpop.f32.mrb[0].mxu0
      %v543 = vpop.f32.mrb[0].mxu0
      %544 = vdwg.mxu0
      %v545 = vadd.f32 %v434, %v540
      %v546 = vld [vmem:[%s211] sm:$0xf]
      %s547 = scalar_lea.vmem %s2, 192
      %v548 = vld [vmem:[%s547] sm:$0xf]
      %v549 = vld [vmem:[%s547 + $0x4] sm:$0xf]
      %v550 = vld [vmem:[%s547 + $0x8] sm:$0xf]
      %v551 = vld [vmem:[%s547 + $0xc] sm:$0xf]
      %v552 = vld [vmem:[%s547 + $0x10] sm:$0xf]
      %v553 = vld [vmem:[%s547 + $0x14] sm:$0xf]
      %v554 = vld [vmem:[%s547 + $0x18] sm:$0xf]
      %v555 = vld [vmem:[%s547 + $0x1c] sm:$0xf]
      %v556 = vld [vmem:[%s547 + $0x20] sm:$0xf]
      %v557 = vld [vmem:[%s547 + $0x24] sm:$0xf]
      %v558 = vld [vmem:[%s547 + $0x28] sm:$0xf]
      %v559 = vld [vmem:[%s547 + $0x2c] sm:$0xf]
      %v560 = vld [vmem:[%s547 + $0x30] sm:$0xf]
      %v561 = vld [vmem:[%s547 + $0x34] sm:$0xf]
      %v562 = vld [vmem:[%s547 + $0x38] sm:$0xf]
      %v563 = vld [vmem:[%s547 + $0x3c] sm:$0xf]
      %v565 = vunpack.c.l.b16 %v546
      %v566 = vpack.c.b16 %v565, %v565
      %v568 = vshrl.u32 %v566, 16
      %v570 = vshll.u32 %v566, 16
      %v572 = vrot.slane %v570, 1
      %v573 = vor.u32 %v568, %v572
      %v591 = vunpack.c.l.b16 %v548
      %v592 = vunpack.c.l.b16 %v549
      %v593 = vunpack.c.l.b16 %v550
      %v594 = vunpack.c.l.b16 %v551
      %v595 = vunpack.c.l.b16 %v552
      %v596 = vunpack.c.l.b16 %v553
      %v597 = vunpack.c.l.b16 %v554
      %v598 = vunpack.c.l.b16 %v555
      %v599 = vunpack.c.l.b16 %v556
      %v600 = vunpack.c.l.b16 %v557
      %v601 = vunpack.c.l.b16 %v558
      %v602 = vunpack.c.l.b16 %v559
      %v603 = vunpack.c.l.b16 %v560
      %v604 = vunpack.c.l.b16 %v561
      %v605 = vunpack.c.l.b16 %v562
      %v606 = vunpack.c.l.b16 %v563
      %v607 = vpack.c.b16 %v592, %v591
      %v608 = vpack.c.b16 %v594, %v593
      %v609 = vpack.c.b16 %v596, %v595
      %v610 = vpack.c.b16 %v598, %v597
      %v611 = vpack.c.b16 %v600, %v599
      %v612 = vpack.c.b16 %v602, %v601
      %v613 = vpack.c.b16 %v604, %v603
      %v614 = vpack.c.b16 %v606, %v605
      %623 = vmatprep.subr.bf16.mxu0 0
      %624 = vmatpush1.bf16.msra.mxu0 %v607
      %625 = vmatprep.subr.bf16.mxu0 0
      %626 = vmatpush1.bf16.msra.mxu0 %v608
      %627 = vmatprep.subr.bf16.mxu0 0
      %628 = vmatpush1.bf16.msra.mxu0 %v609
      %629 = vmatprep.subr.bf16.mxu0 0
      %630 = vmatpush1.bf16.msra.mxu0 %v610
      %631 = vmatprep.subr.bf16.mxu0 0
      %632 = vmatpush1.bf16.msra.mxu0 %v611
      %633 = vmatprep.subr.bf16.mxu0 0
      %634 = vmatpush1.bf16.msra.mxu0 %v612
      %635 = vmatprep.subr.bf16.mxu0 0
      %636 = vmatpush1.bf16.msra.mxu0 %v613
      %637 = vmatprep.subr.bf16.mxu0 0
      %638 = vmatpush1.bf16.msra.mxu0 %v614
      %639 = vmatprep.subr.bf16.mxu0 0
      %640 = vmatpush1.bf16.msra.mxu0 0
      %641 = vmatprep.subr.bf16.mxu0 0
      %642 = vmatpush1.bf16.msra.mxu0 0
      %643 = vmatprep.subr.bf16.mxu0 0
      %644 = vmatpush1.bf16.msra.mxu0 0
      %645 = vmatprep.subr.bf16.mxu0 0
      %646 = vmatpush1.bf16.msra.mxu0 0
      %647 = vmatprep.subr.bf16.mxu0 0
      %648 = vmatpush1.bf16.msra.mxu0 0
      %649 = vmatprep.subr.bf16.mxu0 0
      %650 = vmatpush1.bf16.msra.mxu0 0
      %651 = vmatprep.subr.bf16.mxu0 0
      %652 = vmatpush1.bf16.msra.mxu0 0
      %653 = vmatprep.subr.bf16.mxu0 0
      %654 = vmatpush1.bf16.msra.mxu0 0
      %655 = vmatprep.mubr.bf16.mxu0 0
      %656 = vmatmul.mubr.bf16.gmra.mrb[0].mxu0 %v573
      %v657 = vpop.f32.mrb[0].mxu0
      %v658 = vadd.f32 0.0, %v657
      %v659 = vpop.f32.mrb[0].mxu0
      %v660 = vpop.f32.mrb[0].mxu0
      %v661 = vpop.f32.mrb[0].mxu0
      %662 = vdwg.mxu0
      %v663 = vadd.f32 %v545, %v658
      %v664 = vld [vmem:[%s206] sm:$0xe]
      %v665 = vld [vmem:[%s206 + $0x4] sm:$0x1]
      %s666 = scalar_lea.vmem %s2, 256
      %v667 = vld [vmem:[%s666] sm:$0xf]
      %v668 = vld [vmem:[%s666 + $0x4] sm:$0xf]
      %v669 = vld [vmem:[%s666 + $0x8] sm:$0xf]
      %v670 = vld [vmem:[%s666 + $0xc] sm:$0xf]
      %v671 = vld [vmem:[%s666 + $0x10] sm:$0xf]
      %v672 = vld [vmem:[%s666 + $0x14] sm:$0xf]
      %v673 = vld [vmem:[%s666 + $0x18] sm:$0xf]
      %v674 = vld [vmem:[%s666 + $0x1c] sm:$0xf]
      %v675 = vld [vmem:[%s666 + $0x20] sm:$0xf]
      %v676 = vld [vmem:[%s666 + $0x24] sm:$0xf]
      %v677 = vld [vmem:[%s666 + $0x28] sm:$0xf]
      %v678 = vld [vmem:[%s666 + $0x2c] sm:$0xf]
      %v679 = vld [vmem:[%s666 + $0x30] sm:$0xf]
      %v680 = vld [vmem:[%s666 + $0x34] sm:$0xf]
      %v681 = vld [vmem:[%s666 + $0x38] sm:$0xf]
      %v682 = vld [vmem:[%s666 + $0x3c] sm:$0xf]
      %v685 = vunpack.c.l.b16 %v664
      %v686 = vunpack.c.l.b16 %v665
      %v687 = vpack.c.b16 %v686, %v685
      %v689 = vshrl.u32 %v687, 16
      %v691 = vrot.slane %v689, 1
      %v692 = vshll.u32 %v687, 16
      %v694 = vrot.slane %v692, 2
      %v695 = vor.u32 %v691, %v694
      %v713 = vunpack.c.l.b16 %v667
      %v714 = vunpack.c.l.b16 %v668
      %v715 = vunpack.c.l.b16 %v669
      %v716 = vunpack.c.l.b16 %v670
      %v717 = vunpack.c.l.b16 %v671
      %v718 = vunpack.c.l.b16 %v672
      %v719 = vunpack.c.l.b16 %v673
      %v720 = vunpack.c.l.b16 %v674
      %v721 = vunpack.c.l.b16 %v675
      %v722 = vunpack.c.l.b16 %v676
      %v723 = vunpack.c.l.b16 %v677
      %v724 = vunpack.c.l.b16 %v678
      %v725 = vunpack.c.l.b16 %v679
      %v726 = vunpack.c.l.b16 %v680
      %v727 = vunpack.c.l.b16 %v681
      %v728 = vunpack.c.l.b16 %v682
      %v729 = vpack.c.b16 %v714, %v713
      %v730 = vpack.c.b16 %v716, %v715
      %v731 = vpack.c.b16 %v718, %v717
      %v732 = vpack.c.b16 %v720, %v719
      %v733 = vpack.c.b16 %v722, %v721
      %v734 = vpack.c.b16 %v724, %v723
      %v735 = vpack.c.b16 %v726, %v725
      %v736 = vpack.c.b16 %v728, %v727
      %745 = vmatprep.subr.bf16.mxu0 0
      %746 = vmatpush1.bf16.msra.mxu0 %v729
      %747 = vmatprep.subr.bf16.mxu0 0
      %748 = vmatpush1.bf16.msra.mxu0 %v730
      %749 = vmatprep.subr.bf16.mxu0 0
      %750 = vmatpush1.bf16.msra.mxu0 %v731
      %751 = vmatprep.subr.bf16.mxu0 0
      %752 = vmatpush1.bf16.msra.mxu0 %v732
      %753 = vmatprep.subr.bf16.mxu0 0
      %754 = vmatpush1.bf16.msra.mxu0 %v733
      %755 = vmatprep.subr.bf16.mxu0 0
      %756 = vmatpush1.bf16.msra.mxu0 %v734
      %757 = vmatprep.subr.bf16.mxu0 0
      %758 = vmatpush1.bf16.msra.mxu0 %v735
      %759 = vmatprep.subr.bf16.mxu0 0
      %760 = vmatpush1.bf16.msra.mxu0 %v736
      %761 = vmatprep.subr.bf16.mxu0 0
      %762 = vmatpush1.bf16.msra.mxu0 0
      %763 = vmatprep.subr.bf16.mxu0 0
      %764 = vmatpush1.bf16.msra.mxu0 0
      %765 = vmatprep.subr.bf16.mxu0 0
      %766 = vmatpush1.bf16.msra.mxu0 0
      %767 = vmatprep.subr.bf16.mxu0 0
      %768 = vmatpush1.bf16.msra.mxu0 0
      %769 = vmatprep.subr.bf16.mxu0 0
      %770 = vmatpush1.bf16.msra.mxu0 0
      %771 = vmatprep.subr.bf16.mxu0 0
      %772 = vmatpush1.bf16.msra.mxu0 0
      %773 = vmatprep.subr.bf16.mxu0 0
      %774 = vmatpush1.bf16.msra.mxu0 0
      %775 = vmatprep.subr.bf16.mxu0 0
      %776 = vmatpush1.bf16.msra.mxu0 0
      %777 = vmatprep.mubr.bf16.mxu0 0
      %778 = vmatmul.mubr.bf16.gmra.mrb[0].mxu0 %v695
      %v779 = vpop.f32.mrb[0].mxu0
      %v780 = vadd.f32 0.0, %v779
      %v781 = vpop.f32.mrb[0].mxu0
      %v782 = vpop.f32.mrb[0].mxu0
      %v783 = vpop.f32.mrb[0].mxu0
      %784 = vdwg.mxu0
      %v785 = vadd.f32 %v663, %v780
      %v786 = vld [vmem:[%s206] sm:$0xc]
      %s787 = scalar_lea.vmem %s2, 320
      %v788 = vld [vmem:[%s787] sm:$0xf]
      %v789 = vld [vmem:[%s787 + $0x4] sm:$0xf]
      %v790 = vld [vmem:[%s787 + $0x8] sm:$0xf]
      %v791 = vld [vmem:[%s787 + $0xc] sm:$0xf]
      %v792 = vld [vmem:[%s787 + $0x10] sm:$0xf]
      %v793 = vld [vmem:[%s787 + $0x14] sm:$0xf]
      %v794 = vld [vmem:[%s787 + $0x18] sm:$0xf]
      %v795 = vld [vmem:[%s787 + $0x1c] sm:$0xf]
      %v796 = vld [vmem:[%s787 + $0x20] sm:$0xf]
      %v797 = vld [vmem:[%s787 + $0x24] sm:$0xf]
      %v798 = vld [vmem:[%s787 + $0x28] sm:$0xf]
      %v799 = vld [vmem:[%s787 + $0x2c] sm:$0xf]
      %v800 = vld [vmem:[%s787 + $0x30] sm:$0xf]
      %v801 = vld [vmem:[%s787 + $0x34] sm:$0xf]
      %v802 = vld [vmem:[%s787 + $0x38] sm:$0xf]
      %v803 = vld [vmem:[%s787 + $0x3c] sm:$0xf]
      %v805 = vunpack.c.l.b16 %v786
      %v806 = vpack.c.b16 %v686, %v805
      %v807 = vrot.slane %v806, 2
      %v825 = vunpack.c.l.b16 %v788
      %v826 = vunpack.c.l.b16 %v789
      %v827 = vunpack.c.l.b16 %v790
      %v828 = vunpack.c.l.b16 %v791
      %v829 = vunpack.c.l.b16 %v792
      %v830 = vunpack.c.l.b16 %v793
      %v831 = vunpack.c.l.b16 %v794
      %v832 = vunpack.c.l.b16 %v795
      %v833 = vunpack.c.l.b16 %v796
      %v834 = vunpack.c.l.b16 %v797
      %v835 = vunpack.c.l.b16 %v798
      %v836 = vunpack.c.l.b16 %v799
      %v837 = vunpack.c.l.b16 %v800
      %v838 = vunpack.c.l.b16 %v801
      %v839 = vunpack.c.l.b16 %v802
      %v840 = vunpack.c.l.b16 %v803
      %v841 = vpack.c.b16 %v826, %v825
      %v842 = vpack.c.b16 %v828, %v827
      %v843 = vpack.c.b16 %v830, %v829
      %v844 = vpack.c.b16 %v832, %v831
      %v845 = vpack.c.b16 %v834, %v833
      %v846 = vpack.c.b16 %v836, %v835
      %v847 = vpack.c.b16 %v838, %v837
      %v848 = vpack.c.b16 %v840, %v839
      %857 = vmatprep.subr.bf16.mxu0 0
      %858 = vmatpush1.bf16.msra.mxu0 %v841
      %859 = vmatprep.subr.bf16.mxu0 0
      %860 = vmatpush1.bf16.msra.mxu0 %v842
      %861 = vmatprep.subr.bf16.mxu0 0
      %862 = vmatpush1.bf16.msra.mxu0 %v843
      %863 = vmatprep.subr.bf16.mxu0 0
      %864 = vmatpush1.bf16.msra.mxu0 %v844
      %865 = vmatprep.subr.bf16.mxu0 0
      %866 = vmatpush1.bf16.msra.mxu0 %v845
      %867 = vmatprep.subr.bf16.mxu0 0
      %868 = vmatpush1.bf16.msra.mxu0 %v846
      %869 = vmatprep.subr.bf16.mxu0 0
      %870 = vmatpush1.bf16.msra.mxu0 %v847
      %871 = vmatprep.subr.bf16.mxu0 0
      %872 = vmatpush1.bf16.msra.mxu0 %v848
      %873 = vmatprep.subr.bf16.mxu0 0
      %874 = vmatpush1.bf16.msra.mxu0 0
      %875 = vmatprep.subr.bf16.mxu0 0
      %876 = vmatpush1.bf16.msra.mxu0 0
      %877 = vmatprep.subr.bf16.mxu0 0
      %878 = vmatpush1.bf16.msra.mxu0 0
      %879 = vmatprep.subr.bf16.mxu0 0
      %880 = vmatpush1.bf16.msra.mxu0 0
      %881 = vmatprep.subr.bf16.mxu0 0
      %882 = vmatpush1.bf16.msra.mxu0 0
      %883 = vmatprep.subr.bf16.mxu0 0
      %884 = vmatpush1.bf16.msra.mxu0 0
      %885 = vmatprep.subr.bf16.mxu0 0
      %886 = vmatpush1.bf16.msra.mxu0 0
      %887 = vmatprep.subr.bf16.mxu0 0
      %888 = vmatpush1.bf16.msra.mxu0 0
      %889 = vmatprep.mubr.bf16.mxu0 0
      %890 = vmatmul.mubr.bf16.gmra.mrb[0].mxu0 %v807
      %v891 = vpop.f32.mrb[0].mxu0
      %v892 = vadd.f32 0.0, %v891
      %v893 = vpop.f32.mrb[0].mxu0
      %v894 = vpop.f32.mrb[0].mxu0
      %v895 = vpop.f32.mrb[0].mxu0
      %896 = vdwg.mxu0
      %v897 = vadd.f32 %v785, %v892
      %v898 = vld [vmem:[%s3] sm:$0x1]
      %v900 = vlaneseq
      %v901 = vshrl.u32 %v900, 7
      %v902 = vsub.s32 0, %v901
      %v903 = vrot.slane %v898, %v902
      %v905 = vadd.f32 %v897, %v903
      %v906 = vmax.f32 %v905, 0.0
      %v907 = vpack.c.bf16 %v906, %v906
      %908 = vst [vmem:[%s215] sm:$0x7] %v907
      %p909 = scmp.lt.s32.totalorder %s15, 1
      %s910 = scalar_select %p909, %s15, 1
      %s911 = smul.addr %s910, 4
      %s912 = scalar_lea.vmem %s4, %s911
      // Predicated region
      $region37: #{cnn_encoder_forward.6} parent=35 // pred_check
        %p913 = pneg %p127
      $region38: #{cnn_encoder_forward.6} parent=35 // pred_check_branch
        %915 = sbr.rel (%p913) target = $region40
      $region39: #{cnn_encoder_forward.6} parent=35 // pred_region
        _
      $region40: #{cnn_encoder_forward.6} parent=35 // pred_fallthru
        _
    $region36: #{cnn_encoder_forward.6} parent=5 // pred_fallthru
      _
    %p916 = scmp.le.s32.totalorder 2, %s10
    // Predicated region
    $region41: #{cnn_encoder_forward.6} parent=5 // pred_check
      %p917 = pneg %p916
    $region42: #{cnn_encoder_forward.6} parent=5 // pred_check_branch
      %919 = sbr.rel (%p917) target = $region44
    $region43: #{cnn_encoder_forward.6} parent=5 // pred_region
      %s920 = ssub.s32 %s10, 2
      // Predicated region
      $region45: #{cnn_encoder_forward.6} parent=43 // pred_check
        %p921 = pneg %p133
      $region46: #{cnn_encoder_forward.6} parent=43 // pred_check_branch
        %923 = sbr.rel (%p921) target = $region48
      $region47: #{cnn_encoder_forward.6} parent=43 // pred_region
        %p924 = scmp.lt.s32.totalorder %s16, 1
        %s925 = scalar_select %p924, %s16, 1
        %s926 = smul.addr %s925, 4
        %s927 = scalar_lea.vmem %s4, %s926
      $region48: #{cnn_encoder_forward.6} parent=43 // pred_fallthru
        _
    $region44: #{cnn_encoder_forward.6} parent=5 // pred_fallthru
      _
  $region6: #{cnn_encoder_forward.6} parent=0 // loop_footer
    %s14 = sadd.s32 1, %s10
  $region7: #{cnn_encoder_forward.6} parent=0 // loop_footer_branch
    %9 = sbr.rel target = $region3
  $region8: #{cnn_encoder_forward.6} parent=0 // loop_exit
    _

</llo_original>
